<compile_context>
chip_gen: v7x
topology: tpu7x:2x2x1
jax: 0.10.0
libtpu: 0.0.40
codegen_flags: <defaults>
</compile_context>

<pallas_src>
import numpy as np
import jax
import jax.numpy as jnp
from jax import lax
from jax.experimental import pallas as pl
from jax.experimental.pallas import tpu as pltpu


# ------------------------------ fused kernel --------------------------------

def _make_kernel(H, W, Cp, BB):
    """Build the fused encoder kernel specialized to static (H, W, Cp, BB)."""
    Hp, Wp = (H - 1) // 2, (W - 1) // 2        # pooled spatial size (floor mode)
    H3, W3 = Hp - 2, Wp - 2                    # conv3 valid spatial size
    R1 = (H - 1) * W - 1                       # conv1 columns computed (col = h*W+w)
    M1 = R1 - 1                                # cols of horizontal (w,w+1) max
    M2 = M1 - W                                # cols of full 2x2 window max
    R2 = (Hp - 1) * Wp - 1                     # conv2 columns computed
    R3 = (Hp - 2) * Wp - 2                     # conv3 columns computed
    f32 = jnp.float32

    def kernel(x_ref, w1_ref, b1_ref, w2_ref, b2_ref, w3_ref, b3_ref,
               spool_ref, o_ref):
        # Weights / constants: read once, reused by every image in the block.
        w1t = w1_ref[...]; b1 = b1_ref[...]
        w2t = w2_ref[...]; b2 = b2_ref[...]
        w3t = w3_ref[...]; b3 = b3_ref[...]
        spool_t = spool_ref[...]

        for i in range(BB):                    # unrolled: independent chains
            xi = x_ref[i]                      # (Cp, H*W), lane-dense

            # ---- conv1 (2x2, C->16) + ReLU: one (16,4Cp)@(4Cp,R1) dot ------
            xcat = jnp.concatenate(
                [xi[:, off:off + R1] for off in (0, 1, W, W + 1)], axis=0)
            y1 = jnp.maximum(
                jnp.dot(w1t, xcat, preferred_element_type=f32) + b1, 0.0)

            # ---- maxpool 2x2 stride 2 (floor): 2 shifted maxes + 0/1 select -
            m1 = jnp.maximum(y1[:, 0:M1], y1[:, 1:M1 + 1])        # (w, w+1)
            m2 = jnp.maximum(m1[:, 0:M2], m1[:, W:W + M2])        # (h, h+1)
            pooled = jnp.dot(m2, spool_t,
                             preferred_element_type=f32)          # (16, Hp*Wp)

            # ---- conv2 (2x2, 16->32) + ReLU: one (32,64)@(64,R2) dot --------
            pcat = jnp.concatenate(
                [pooled[:, off:off + R2] for off in (0, 1, Wp, Wp + 1)], axis=0)
            y2 = jnp.maximum(
                jnp.dot(w2t, pcat, preferred_element_type=f32) + b2, 0.0)

            # ---- conv3 (2x2, 32->64) + ReLU: one (64,128)@(128,R3) dot ------
            ycat = jnp.concatenate(
                [y2[:, off:off + R3] for off in (0, 1, Wp, Wp + 1)], axis=0)
            y3 = jnp.maximum(
                jnp.dot(w3t, ycat, preferred_element_type=f32) + b3, 0.0)

            # ---- valid output = H3 contiguous bands of W3 columns: copies ---
            for h in range(H3):
                o_ref[i, :, h * W3:(h + 1) * W3] = y3[:, h * Wp:h * Wp + W3]

    return kernel, (Hp, Wp, H3, W3, R1, M2, R2, R3)


# --------------------------------- wrapper -----------------------------------

def cnn_encoder_forward(obs, params, *, block_b=4):
    x = jnp.asarray(obs, dtype=jnp.float32)
    if x.ndim == 3:                               # matches torch unsqueeze(0)
        x = x[None]
    B, H, W, C = x.shape
    f32 = jnp.float32

    Cp = max(8, ((C + 7) // 8) * 8)               # pad channels to a sublane tile

    # Images per grid block; keep >= 2 grid blocks so v7x's 2 TCs both work.
    BB = int(min(block_b, B))
    if B > 1 and -(-B // BB) < 2:
        BB = -(-B // 2)
    n_blocks = -(-B // BB)
    Bp = n_blocks * BB

    kernel, (Hp, Wp, H3, W3, R1, M2, R2, R3) = _make_kernel(H, W, Cp, BB)

    # Lane-dense channel-major input (B, Cp, H*W); zero-pad channels & batch.
    xt = jnp.transpose(x, (0, 3, 1, 2)).reshape(B, C, H * W)
    xt = jnp.pad(xt, ((0, Bp - B), (0, Cp - C), (0, 0)))

    # Weights HWIO -> (Cout, 4*Cin), tap order (0,0),(0,1),(1,0),(1,1); biases (Cout,1).
    w1 = jnp.pad(params["w1"].astype(f32), ((0, 0), (0, 0), (0, Cp - C), (0, 0)))
    w1t = w1.reshape(4 * Cp, 16).T                # (16, 4*Cp)
    w2t = params["w2"].astype(f32).reshape(4 * 16, 32).T    # (32, 64)
    w3t = params["w3"].astype(f32).reshape(4 * 32, 64).T    # (64, 128)
    b1 = params["b1"].astype(f32).reshape(16, 1)
    b2 = params["b2"].astype(f32).reshape(32, 1)
    b3 = params["b3"].astype(f32).reshape(64, 1)

    # 0/1 pooling-selection matrix (compile-time constant under jit).
    idx = np.arange(Hp * Wp)
    spool_np = np.zeros((M2, Hp * Wp), np.float32)
    spool_np[2 * W * (idx // Wp) + 2 * (idx % Wp), idx] = 1.0
    spool_t = jnp.asarray(spool_np)

    def const_spec(shape):
        return pl.BlockSpec(shape, lambda b: (0,) * len(shape))

    flops = 2 * Bp * (16 * 4 * Cp * R1 + 16 * M2 * Hp * Wp
                      + 32 * 64 * R2 + 64 * 128 * R3)
    bytes_accessed = 4 * (xt.size + w1t.size + w2t.size + w3t.size
                          + b1.size + b2.size + b3.size + spool_t.size
                          + Bp * 64 * H3 * W3)

    out = pl.pallas_call(
        kernel,
        out_shape=jax.ShapeDtypeStruct((Bp, 64, H3 * W3), f32),
        grid=(n_blocks,),
        in_specs=[
            pl.BlockSpec((BB, Cp, H * W), lambda b: (b, 0, 0)),
            const_spec((16, 4 * Cp)),
            const_spec((16, 1)),
            const_spec((32, 4 * 16)),
            const_spec((32, 1)),
            const_spec((64, 4 * 32)),
            const_spec((64, 1)),
            const_spec((M2, Hp * Wp)),
        ],
        out_specs=pl.BlockSpec((BB, 64, H3 * W3), lambda b: (b, 0, 0)),
        compiler_params=pltpu.CompilerParams(
            dimension_semantics=("parallel",)),   # VMEM footprint ~BB*100 KB: defaults fine
        cost_estimate=pl.CostEstimate(flops=flops, transcendentals=0,
                                      bytes_accessed=bytes_accessed),
    )(xt, w1t, b1, w2t, b2, w3t, b3, spool_t)

    # Channel-major kernel output == torch's NCHW flatten order: plain reshape.
    return out[:B].reshape(B, 64 * H3 * W3)


# ------------------------- pure-JAX reference check -------------------------

def reference_forward(obs, params):
    x = jnp.asarray(obs, jnp.float32)
    if x.ndim == 3:
        x = x[None]
    dn = ("NHWC", "HWIO", "NHWC")
    y = lax.conv_general_dilated(x, params["w1"], (1, 1), "VALID",
                                 dimension_numbers=dn)
    y = jax.nn.relu(y + params["b1"])
    y = lax.reduce_window(y, -jnp.inf, lax.max,
                          (1, 2, 2, 1), (1, 2, 2, 1), "VALID")
    y = lax.conv_general_dilated(y, params["w2"], (1, 1), "VALID",
                                 dimension_numbers=dn)
    y = jax.nn.relu(y + params["b2"])
    y = lax.conv_general_dilated(y, params["w3"], (1, 1), "VALID",
                                 dimension_numbers=dn)
    y = jax.nn.relu(y + params["b3"])
    return jnp.transpose(y, (0, 3, 1, 2)).reshape(y.shape[0], -1)


# ----------------------------------- main ------------------------------------

if __name__ == "__main__":
    B, H, W, C = 8, 16, 16, 3          # obs_dim = (height, width, channels)
    key = jax.random.PRNGKey(0)
    k_obs, k1, k2, k3, kb1, kb2, kb3 = jax.random.split(key, 7)

    # Deterministic synthetic parameters (HWIO conv filters).
    params = {
        "w1": jax.random.normal(k1, (2, 2, C, 16), jnp.float32) / np.sqrt(4 * C),
        "b1": jax.random.normal(kb1, (16,), jnp.float32) * 0.1,
        "w2": jax.random.normal(k2, (2, 2, 16, 32), jnp.float32) / np.sqrt(4 * 16),
        "b2": jax.random.normal(kb2, (32,), jnp.float32) * 0.1,
        "w3": jax.random.normal(k3, (2, 2, 32, 64), jnp.float32) / np.sqrt(4 * 32),
        "b3": jax.random.normal(kb3, (64,), jnp.float32) * 0.1,
    }

    obs = jax.random.normal(k_obs, (B, H, W, C), dtype=jnp.float32)

    fwd = jax.jit(cnn_encoder_forward)
    out = jax.block_until_ready(fwd(obs, params))

    # Shape must equal image_embedding_size from the torch module.
    expected_dim = ((H - 1) // 2 - 2) * ((W - 1) // 2 - 2) * 64
    assert out.shape == (B, expected_dim), (out.shape, expected_dim)

    ref = jax.block_until_ready(reference_forward(obs, params))
    np.testing.assert_allclose(np.asarray(out), np.asarray(ref),
                               rtol=1e-4, atol=1e-4)

    print("KERNEL_OK")
</pallas_src>

<mosaic_0001>
module attributes {stable_mosaic.version = 11 : i64} {
  func.func @kernel(%arg0: i32, %arg1: memref<4x8x256xf32, #tpu.memory_space<vmem>>, %arg2: memref<16x32xf32, #tpu.memory_space<vmem>>, %arg3: memref<16x1xf32, #tpu.memory_space<vmem>>, %arg4: memref<32x64xf32, #tpu.memory_space<vmem>>, %arg5: memref<32x1xf32, #tpu.memory_space<vmem>>, %arg6: memref<64x128xf32, #tpu.memory_space<vmem>>, %arg7: memref<64x1xf32, #tpu.memory_space<vmem>>, %arg8: memref<222x49xf32, #tpu.memory_space<vmem>>, %arg9: memref<4x64x25xf32, #tpu.memory_space<vmem>>) attributes {dimension_semantics = [#tpu.dimension_semantics<parallel>], iteration_bounds = array<i64: 2>, scalar_prefetch = 0 : i64, scratch_operands = 0 : i64, tpu.core_type = #tpu.core_type<tc>, window_params = [{transform_indices = @transform_0, window_bounds = array<i64: 4, 8, 256>}, {pipeline_mode = #tpu.pipeline_mode<synchronous>, transform_indices = @transform_1, window_bounds = array<i64: 16, 32>}, {pipeline_mode = #tpu.pipeline_mode<synchronous>, transform_indices = @transform_2, window_bounds = array<i64: 16, 1>}, {pipeline_mode = #tpu.pipeline_mode<synchronous>, transform_indices = @transform_3, window_bounds = array<i64: 32, 64>}, {pipeline_mode = #tpu.pipeline_mode<synchronous>, transform_indices = @transform_4, window_bounds = array<i64: 32, 1>}, {pipeline_mode = #tpu.pipeline_mode<synchronous>, transform_indices = @transform_5, window_bounds = array<i64: 64, 128>}, {pipeline_mode = #tpu.pipeline_mode<synchronous>, transform_indices = @transform_6, window_bounds = array<i64: 64, 1>}, {pipeline_mode = #tpu.pipeline_mode<synchronous>, transform_indices = @transform_7, window_bounds = array<i64: 222, 49>}, {transform_indices = @transform_8, window_bounds = array<i64: 4, 64, 25>}]} {
    %c0 = arith.constant 0 : index
    %c0_0 = arith.constant 0 : index
    %0 = vector.load %arg2[%c0, %c0_0] : memref<16x32xf32, #tpu.memory_space<vmem>>, vector<16x32xf32>
    %c0_1 = arith.constant 0 : index
    %c0_2 = arith.constant 0 : index
    %1 = vector.load %arg3[%c0_1, %c0_2] : memref<16x1xf32, #tpu.memory_space<vmem>>, vector<16x1xf32>
    %c0_3 = arith.constant 0 : index
    %c0_4 = arith.constant 0 : index
    %2 = vector.load %arg4[%c0_3, %c0_4] : memref<32x64xf32, #tpu.memory_space<vmem>>, vector<32x64xf32>
    %c0_5 = arith.constant 0 : index
    %c0_6 = arith.constant 0 : index
    %3 = vector.load %arg5[%c0_5, %c0_6] : memref<32x1xf32, #tpu.memory_space<vmem>>, vector<32x1xf32>
    %c0_7 = arith.constant 0 : index
    %c0_8 = arith.constant 0 : index
    %4 = vector.load %arg6[%c0_7, %c0_8] : memref<64x128xf32, #tpu.memory_space<vmem>>, vector<64x128xf32>
    %c0_9 = arith.constant 0 : index
    %c0_10 = arith.constant 0 : index
    %5 = vector.load %arg7[%c0_9, %c0_10] : memref<64x1xf32, #tpu.memory_space<vmem>>, vector<64x1xf32>
    %c0_11 = arith.constant 0 : index
    %c0_12 = arith.constant 0 : index
    %6 = vector.load %arg8[%c0_11, %c0_12] : memref<222x49xf32, #tpu.memory_space<vmem>>, vector<222x49xf32>
    %c0_13 = arith.constant 0 : index
    %c0_14 = arith.constant 0 : index
    %c0_15 = arith.constant 0 : index
    %7 = vector.load %arg1[%c0_13, %c0_14, %c0_15] : memref<4x8x256xf32, #tpu.memory_space<vmem>>, vector<1x8x256xf32>
    %8 = vector.shape_cast %7 : vector<1x8x256xf32> to vector<8x256xf32>
    %9 = vector.extract_strided_slice %8 {offsets = [0, 0], sizes = [8, 239], strides = [1, 1]} : vector<8x256xf32> to vector<8x239xf32>
    %10 = vector.extract_strided_slice %8 {offsets = [0, 1], sizes = [8, 239], strides = [1, 1]} : vector<8x256xf32> to vector<8x239xf32>
    %11 = vector.extract_strided_slice %8 {offsets = [0, 16], sizes = [8, 239], strides = [1, 1]} : vector<8x256xf32> to vector<8x239xf32>
    %12 = vector.extract_strided_slice %8 {offsets = [0, 17], sizes = [8, 239], strides = [1, 1]} : vector<8x256xf32> to vector<8x239xf32>
    %13 = tpu.concatenate %9, %10, %11, %12 in 0 : vector<8x239xf32>, vector<8x239xf32>, vector<8x239xf32>, vector<8x239xf32> -> vector<32x239xf32>
    %cst = arith.constant dense<0.000000e+00> : vector<16x239xf32>
    %14 = tpu.matmul %0, %13, %cst {dimension_numbers = #tpu.dot_dimension_numbers<[1], [0], [0], [1], [0, 0, 1, 1], [], []>} : vector<16x32xf32>, vector<32x239xf32>, vector<16x239xf32> -> vector<16x239xf32>
    %15 = vector.broadcast %1 : vector<16x1xf32> to vector<16x239xf32>
    %16 = arith.addf %14, %15 : vector<16x239xf32>
    %cst_16 = arith.constant 0.000000e+00 : f32
    %17 = vector.broadcast %cst_16 : f32 to vector<16x239xf32>
    %18 = arith.maximumf %16, %17 : vector<16x239xf32>
    %19 = vector.extract_strided_slice %18 {offsets = [0, 0], sizes = [16, 238], strides = [1, 1]} : vector<16x239xf32> to vector<16x238xf32>
    %20 = vector.extract_strided_slice %18 {offsets = [0, 1], sizes = [16, 238], strides = [1, 1]} : vector<16x239xf32> to vector<16x238xf32>
    %21 = arith.maximumf %19, %20 : vector<16x238xf32>
    %22 = vector.extract_strided_slice %21 {offsets = [0, 0], sizes = [16, 222], strides = [1, 1]} : vector<16x238xf32> to vector<16x222xf32>
    %23 = vector.extract_strided_slice %21 {offsets = [0, 16], sizes = [16, 222], strides = [1, 1]} : vector<16x238xf32> to vector<16x222xf32>
    %24 = arith.maximumf %22, %23 : vector<16x222xf32>
    %cst_17 = arith.constant dense<0.000000e+00> : vector<16x49xf32>
    %25 = tpu.matmul %24, %6, %cst_17 {dimension_numbers = #tpu.dot_dimension_numbers<[1], [0], [0], [1], [0, 0, 1, 1], [], []>} : vector<16x222xf32>, vector<222x49xf32>, vector<16x49xf32> -> vector<16x49xf32>
    %26 = vector.extract_strided_slice %25 {offsets = [0, 0], sizes = [16, 41], strides = [1, 1]} : vector<16x49xf32> to vector<16x41xf32>
    %27 = vector.extract_strided_slice %25 {offsets = [0, 1], sizes = [16, 41], strides = [1, 1]} : vector<16x49xf32> to vector<16x41xf32>
    %28 = vector.extract_strided_slice %25 {offsets = [0, 7], sizes = [16, 41], strides = [1, 1]} : vector<16x49xf32> to vector<16x41xf32>
    %29 = vector.extract_strided_slice %25 {offsets = [0, 8], sizes = [16, 41], strides = [1, 1]} : vector<16x49xf32> to vector<16x41xf32>
    %30 = tpu.concatenate %26, %27, %28, %29 in 0 : vector<16x41xf32>, vector<16x41xf32>, vector<16x41xf32>, vector<16x41xf32> -> vector<64x41xf32>
    %cst_18 = arith.constant dense<0.000000e+00> : vector<32x41xf32>
    %31 = tpu.matmul %2, %30, %cst_18 {dimension_numbers = #tpu.dot_dimension_numbers<[1], [0], [0], [1], [0, 0, 1, 1], [], []>} : vector<32x64xf32>, vector<64x41xf32>, vector<32x41xf32> -> vector<32x41xf32>
    %32 = vector.broadcast %3 : vector<32x1xf32> to vector<32x41xf32>
    %33 = arith.addf %31, %32 : vector<32x41xf32>
    %cst_19 = arith.constant 0.000000e+00 : f32
    %34 = vector.broadcast %cst_19 : f32 to vector<32x41xf32>
    %35 = arith.maximumf %33, %34 : vector<32x41xf32>
    %36 = vector.extract_strided_slice %35 {offsets = [0, 0], sizes = [32, 33], strides = [1, 1]} : vector<32x41xf32> to vector<32x33xf32>
    %37 = vector.extract_strided_slice %35 {offsets = [0, 1], sizes = [32, 33], strides = [1, 1]} : vector<32x41xf32> to vector<32x33xf32>
    %38 = vector.extract_strided_slice %35 {offsets = [0, 7], sizes = [32, 33], strides = [1, 1]} : vector<32x41xf32> to vector<32x33xf32>
    %39 = vector.extract_strided_slice %35 {offsets = [0, 8], sizes = [32, 33], strides = [1, 1]} : vector<32x41xf32> to vector<32x33xf32>
    %40 = tpu.concatenate %36, %37, %38, %39 in 0 : vector<32x33xf32>, vector<32x33xf32>, vector<32x33xf32>, vector<32x33xf32> -> vector<128x33xf32>
    %cst_20 = arith.constant dense<0.000000e+00> : vector<64x33xf32>
    %41 = tpu.matmul %4, %40, %cst_20 {dimension_numbers = #tpu.dot_dimension_numbers<[1], [0], [0], [1], [0, 0, 1, 1], [], []>} : vector<64x128xf32>, vector<128x33xf32>, vector<64x33xf32> -> vector<64x33xf32>
    %42 = vector.broadcast %5 : vector<64x1xf32> to vector<64x33xf32>
    %43 = arith.addf %41, %42 : vector<64x33xf32>
    %cst_21 = arith.constant 0.000000e+00 : f32
    %44 = vector.broadcast %cst_21 : f32 to vector<64x33xf32>
    %45 = arith.maximumf %43, %44 : vector<64x33xf32>
    %46 = vector.extract_strided_slice %45 {offsets = [0, 0], sizes = [64, 5], strides = [1, 1]} : vector<64x33xf32> to vector<64x5xf32>
    %c0_22 = arith.constant 0 : index
    %c0_23 = arith.constant 0 : index
    %c0_24 = arith.constant 0 : index
    %47 = vector.load %arg9[%c0_22, %c0_23, %c0_24] : memref<4x64x25xf32, #tpu.memory_space<vmem>>, vector<1x64x5xf32>
    %48 = vector.shape_cast %47 : vector<1x64x5xf32> to vector<64x5xf32>
    %49 = vector.shape_cast %46 : vector<64x5xf32> to vector<1x64x5xf32>
    tpu.vector_store %arg9[%c0_22, %c0_23, %c0_24], %49 {strides = array<i32>} : memref<4x64x25xf32, #tpu.memory_space<vmem>>, vector<1x64x5xf32>,
    %50 = vector.extract_strided_slice %45 {offsets = [0, 7], sizes = [64, 5], strides = [1, 1]} : vector<64x33xf32> to vector<64x5xf32>
    %c0_25 = arith.constant 0 : index
    %c0_26 = arith.constant 0 : index
    %c5 = arith.constant 5 : index
    %51 = vector.load %arg9[%c0_25, %c0_26, %c5] : memref<4x64x25xf32, #tpu.memory_space<vmem>>, vector<1x64x5xf32>
    %52 = vector.shape_cast %51 : vector<1x64x5xf32> to vector<64x5xf32>
    %53 = vector.shape_cast %50 : vector<64x5xf32> to vector<1x64x5xf32>
    tpu.vector_store %arg9[%c0_25, %c0_26, %c5], %53 {strides = array<i32>} : memref<4x64x25xf32, #tpu.memory_space<vmem>>, vector<1x64x5xf32>,
    %54 = vector.extract_strided_slice %45 {offsets = [0, 14], sizes = [64, 5], strides = [1, 1]} : vector<64x33xf32> to vector<64x5xf32>
    %c0_27 = arith.constant 0 : index
    %c0_28 = arith.constant 0 : index
    %c10 = arith.constant 10 : index
    %55 = vector.load %arg9[%c0_27, %c0_28, %c10] : memref<4x64x25xf32, #tpu.memory_space<vmem>>, vector<1x64x5xf32>
    %56 = vector.shape_cast %55 : vector<1x64x5xf32> to vector<64x5xf32>
    %57 = vector.shape_cast %54 : vector<64x5xf32> to vector<1x64x5xf32>
    tpu.vector_store %arg9[%c0_27, %c0_28, %c10], %57 {strides = array<i32>} : memref<4x64x25xf32, #tpu.memory_space<vmem>>, vector<1x64x5xf32>,
    %58 = vector.extract_strided_slice %45 {offsets = [0, 21], sizes = [64, 5], strides = [1, 1]} : vector<64x33xf32> to vector<64x5xf32>
    %c0_29 = arith.constant 0 : index
    %c0_30 = arith.constant 0 : index
    %c15 = arith.constant 15 : index
    %59 = vector.load %arg9[%c0_29, %c0_30, %c15] : memref<4x64x25xf32, #tpu.memory_space<vmem>>, vector<1x64x5xf32>
    %60 = vector.shape_cast %59 : vector<1x64x5xf32> to vector<64x5xf32>
    %61 = vector.shape_cast %58 : vector<64x5xf32> to vector<1x64x5xf32>
    tpu.vector_store %arg9[%c0_29, %c0_30, %c15], %61 {strides = array<i32>} : memref<4x64x25xf32, #tpu.memory_space<vmem>>, vector<1x64x5xf32>,
    %62 = vector.extract_strided_slice %45 {offsets = [0, 28], sizes = [64, 5], strides = [1, 1]} : vector<64x33xf32> to vector<64x5xf32>
    %c0_31 = arith.constant 0 : index
    %c0_32 = arith.constant 0 : index
    %c20 = arith.constant 20 : index
    %63 = vector.load %arg9[%c0_31, %c0_32, %c20] : memref<4x64x25xf32, #tpu.memory_space<vmem>>, vector<1x64x5xf32>
    %64 = vector.shape_cast %63 : vector<1x64x5xf32> to vector<64x5xf32>
    %65 = vector.shape_cast %62 : vector<64x5xf32> to vector<1x64x5xf32>
    tpu.vector_store %arg9[%c0_31, %c0_32, %c20], %65 {strides = array<i32>} : memref<4x64x25xf32, #tpu.memory_space<vmem>>, vector<1x64x5xf32>,
    %c1 = arith.constant 1 : index
    %c0_33 = arith.constant 0 : index
    %c0_34 = arith.constant 0 : index
    %66 = vector.load %arg1[%c1, %c0_33, %c0_34] : memref<4x8x256xf32, #tpu.memory_space<vmem>>, vector<1x8x256xf32>
    %67 = vector.shape_cast %66 : vector<1x8x256xf32> to vector<8x256xf32>
    %68 = vector.extract_strided_slice %67 {offsets = [0, 0], sizes = [8, 239], strides = [1, 1]} : vector<8x256xf32> to vector<8x239xf32>
    %69 = vector.extract_strided_slice %67 {offsets = [0, 1], sizes = [8, 239], strides = [1, 1]} : vector<8x256xf32> to vector<8x239xf32>
    %70 = vector.extract_strided_slice %67 {offsets = [0, 16], sizes = [8, 239], strides = [1, 1]} : vector<8x256xf32> to vector<8x239xf32>
    %71 = vector.extract_strided_slice %67 {offsets = [0, 17], sizes = [8, 239], strides = [1, 1]} : vector<8x256xf32> to vector<8x239xf32>
    %72 = tpu.concatenate %68, %69, %70, %71 in 0 : vector<8x239xf32>, vector<8x239xf32>, vector<8x239xf32>, vector<8x239xf32> -> vector<32x239xf32>
    %cst_35 = arith.constant dense<0.000000e+00> : vector<16x239xf32>
    %73 = tpu.matmul %0, %72, %cst_35 {dimension_numbers = #tpu.dot_dimension_numbers<[1], [0], [0], [1], [0, 0, 1, 1], [], []>} : vector<16x32xf32>, vector<32x239xf32>, vector<16x239xf32> -> vector<16x239xf32>
    %74 = vector.broadcast %1 : vector<16x1xf32> to vector<16x239xf32>
    %75 = arith.addf %73, %74 : vector<16x239xf32>
    %cst_36 = arith.constant 0.000000e+00 : f32
    %76 = vector.broadcast %cst_36 : f32 to vector<16x239xf32>
    %77 = arith.maximumf %75, %76 : vector<16x239xf32>
    %78 = vector.extract_strided_slice %77 {offsets = [0, 0], sizes = [16, 238], strides = [1, 1]} : vector<16x239xf32> to vector<16x238xf32>
    %79 = vector.extract_strided_slice %77 {offsets = [0, 1], sizes = [16, 238], strides = [1, 1]} : vector<16x239xf32> to vector<16x238xf32>
    %80 = arith.maximumf %78, %79 : vector<16x238xf32>
    %81 = vector.extract_strided_slice %80 {offsets = [0, 0], sizes = [16, 222], strides = [1, 1]} : vector<16x238xf32> to vector<16x222xf32>
    %82 = vector.extract_strided_slice %80 {offsets = [0, 16], sizes = [16, 222], strides = [1, 1]} : vector<16x238xf32> to vector<16x222xf32>
    %83 = arith.maximumf %81, %82 : vector<16x222xf32>
    %cst_37 = arith.constant dense<0.000000e+00> : vector<16x49xf32>
    %84 = tpu.matmul %83, %6, %cst_37 {dimension_numbers = #tpu.dot_dimension_numbers<[1], [0], [0], [1], [0, 0, 1, 1], [], []>} : vector<16x222xf32>, vector<222x49xf32>, vector<16x49xf32> -> vector<16x49xf32>
    %85 = vector.extract_strided_slice %84 {offsets = [0, 0], sizes = [16, 41], strides = [1, 1]} : vector<16x49xf32> to vector<16x41xf32>
    %86 = vector.extract_strided_slice %84 {offsets = [0, 1], sizes = [16, 41], strides = [1, 1]} : vector<16x49xf32> to vector<16x41xf32>
    %87 = vector.extract_strided_slice %84 {offsets = [0, 7], sizes = [16, 41], strides = [1, 1]} : vector<16x49xf32> to vector<16x41xf32>
    %88 = vector.extract_strided_slice %84 {offsets = [0, 8], sizes = [16, 41], strides = [1, 1]} : vector<16x49xf32> to vector<16x41xf32>
    %89 = tpu.concatenate %85, %86, %87, %88 in 0 : vector<16x41xf32>, vector<16x41xf32>, vector<16x41xf32>, vector<16x41xf32> -> vector<64x41xf32>
    %cst_38 = arith.constant dense<0.000000e+00> : vector<32x41xf32>
    %90 = tpu.matmul %2, %89, %cst_38 {dimension_numbers = #tpu.dot_dimension_numbers<[1], [0], [0], [1], [0, 0, 1, 1], [], []>} : vector<32x64xf32>, vector<64x41xf32>, vector<32x41xf32> -> vector<32x41xf32>
    %91 = vector.broadcast %3 : vector<32x1xf32> to vector<32x41xf32>
    %92 = arith.addf %90, %91 : vector<32x41xf32>
    %cst_39 = arith.constant 0.000000e+00 : f32
    %93 = vector.broadcast %cst_39 : f32 to vector<32x41xf32>
    %94 = arith.maximumf %92, %93 : vector<32x41xf32>
    %95 = vector.extract_strided_slice %94 {offsets = [0, 0], sizes = [32, 33], strides = [1, 1]} : vector<32x41xf32> to vector<32x33xf32>
    %96 = vector.extract_strided_slice %94 {offsets = [0, 1], sizes = [32, 33], strides = [1, 1]} : vector<32x41xf32> to vector<32x33xf32>
    %97 = vector.extract_strided_slice %94 {offsets = [0, 7], sizes = [32, 33], strides = [1, 1]} : vector<32x41xf32> to vector<32x33xf32>
    %98 = vector.extract_strided_slice %94 {offsets = [0, 8], sizes = [32, 33], strides = [1, 1]} : vector<32x41xf32> to vector<32x33xf32>
    %99 = tpu.concatenate %95, %96, %97, %98 in 0 : vector<32x33xf32>, vector<32x33xf32>, vector<32x33xf32>, vector<32x33xf32> -> vector<128x33xf32>
    %cst_40 = arith.constant dense<0.000000e+00> : vector<64x33xf32>
    %100 = tpu.matmul %4, %99, %cst_40 {dimension_numbers = #tpu.dot_dimension_numbers<[1], [0], [0], [1], [0, 0, 1, 1], [], []>} : vector<64x128xf32>, vector<128x33xf32>, vector<64x33xf32> -> vector<64x33xf32>
    %101 = vector.broadcast %5 : vector<64x1xf32> to vector<64x33xf32>
    %102 = arith.addf %100, %101 : vector<64x33xf32>
    %cst_41 = arith.constant 0.000000e+00 : f32
    %103 = vector.broadcast %cst_41 : f32 to vector<64x33xf32>
    %104 = arith.maximumf %102, %103 : vector<64x33xf32>
    %105 = vector.extract_strided_slice %104 {offsets = [0, 0], sizes = [64, 5], strides = [1, 1]} : vector<64x33xf32> to vector<64x5xf32>
    %c1_42 = arith.constant 1 : index
    %c0_43 = arith.constant 0 : index
    %c0_44 = arith.constant 0 : index
    %106 = vector.load %arg9[%c1_42, %c0_43, %c0_44] : memref<4x64x25xf32, #tpu.memory_space<vmem>>, vector<1x64x5xf32>
    %107 = vector.shape_cast %106 : vector<1x64x5xf32> to vector<64x5xf32>
    %108 = vector.shape_cast %105 : vector<64x5xf32> to vector<1x64x5xf32>
    tpu.vector_store %arg9[%c1_42, %c0_43, %c0_44], %108 {strides = array<i32>} : memref<4x64x25xf32, #tpu.memory_space<vmem>>, vector<1x64x5xf32>,
    %109 = vector.extract_strided_slice %104 {offsets = [0, 7], sizes = [64, 5], strides = [1, 1]} : vector<64x33xf32> to vector<64x5xf32>
    %c1_45 = arith.constant 1 : index
    %c0_46 = arith.constant 0 : index
    %c5_47 = arith.constant 5 : index
    %110 = vector.load %arg9[%c1_45, %c0_46, %c5_47] : memref<4x64x25xf32, #tpu.memory_space<vmem>>, vector<1x64x5xf32>
    %111 = vector.shape_cast %110 : vector<1x64x5xf32> to vector<64x5xf32>
    %112 = vector.shape_cast %109 : vector<64x5xf32> to vector<1x64x5xf32>
    tpu.vector_store %arg9[%c1_45, %c0_46, %c5_47], %112 {strides = array<i32>} : memref<4x64x25xf32, #tpu.memory_space<vmem>>, vector<1x64x5xf32>,
    %113 = vector.extract_strided_slice %104 {offsets = [0, 14], sizes = [64, 5], strides = [1, 1]} : vector<64x33xf32> to vector<64x5xf32>
    %c1_48 = arith.constant 1 : index
    %c0_49 = arith.constant 0 : index
    %c10_50 = arith.constant 10 : index
    %114 = vector.load %arg9[%c1_48, %c0_49, %c10_50] : memref<4x64x25xf32, #tpu.memory_space<vmem>>, vector<1x64x5xf32>
    %115 = vector.shape_cast %114 : vector<1x64x5xf32> to vector<64x5xf32>
    %116 = vector.shape_cast %113 : vector<64x5xf32> to vector<1x64x5xf32>
    tpu.vector_store %arg9[%c1_48, %c0_49, %c10_50], %116 {strides = array<i32>} : memref<4x64x25xf32, #tpu.memory_space<vmem>>, vector<1x64x5xf32>,
    %117 = vector.extract_strided_slice %104 {offsets = [0, 21], sizes = [64, 5], strides = [1, 1]} : vector<64x33xf32> to vector<64x5xf32>
    %c1_51 = arith.constant 1 : index
    %c0_52 = arith.constant 0 : index
    %c15_53 = arith.constant 15 : index
    %118 = vector.load %arg9[%c1_51, %c0_52, %c15_53] : memref<4x64x25xf32, #tpu.memory_space<vmem>>, vector<1x64x5xf32>
    %119 = vector.shape_cast %118 : vector<1x64x5xf32> to vector<64x5xf32>
    %120 = vector.shape_cast %117 : vector<64x5xf32> to vector<1x64x5xf32>
    tpu.vector_store %arg9[%c1_51, %c0_52, %c15_53], %120 {strides = array<i32>} : memref<4x64x25xf32, #tpu.memory_space<vmem>>, vector<1x64x5xf32>,
    %121 = vector.extract_strided_slice %104 {offsets = [0, 28], sizes = [64, 5], strides = [1, 1]} : vector<64x33xf32> to vector<64x5xf32>
    %c1_54 = arith.constant 1 : index
    %c0_55 = arith.constant 0 : index
    %c20_56 = arith.constant 20 : index
    %122 = vector.load %arg9[%c1_54, %c0_55, %c20_56] : memref<4x64x25xf32, #tpu.memory_space<vmem>>, vector<1x64x5xf32>
    %123 = vector.shape_cast %122 : vector<1x64x5xf32> to vector<64x5xf32>
    %124 = vector.shape_cast %121 : vector<64x5xf32> to vector<1x64x5xf32>
    tpu.vector_store %arg9[%c1_54, %c0_55, %c20_56], %124 {strides = array<i32>} : memref<4x64x25xf32, #tpu.memory_space<vmem>>, vector<1x64x5xf32>,
    %c2 = arith.constant 2 : index
    %c0_57 = arith.constant 0 : index
    %c0_58 = arith.constant 0 : index
    %125 = vector.load %arg1[%c2, %c0_57, %c0_58] : memref<4x8x256xf32, #tpu.memory_space<vmem>>, vector<1x8x256xf32>
    %126 = vector.shape_cast %125 : vector<1x8x256xf32> to vector<8x256xf32>
    %127 = vector.extract_strided_slice %126 {offsets = [0, 0], sizes = [8, 239], strides = [1, 1]} : vector<8x256xf32> to vector<8x239xf32>
    %128 = vector.extract_strided_slice %126 {offsets = [0, 1], sizes = [8, 239], strides = [1, 1]} : vector<8x256xf32> to vector<8x239xf32>
    %129 = vector.extract_strided_slice %126 {offsets = [0, 16], sizes = [8, 239], strides = [1, 1]} : vector<8x256xf32> to vector<8x239xf32>
    %130 = vector.extract_strided_slice %126 {offsets = [0, 17], sizes = [8, 239], strides = [1, 1]} : vector<8x256xf32> to vector<8x239xf32>
    %131 = tpu.concatenate %127, %128, %129, %130 in 0 : vector<8x239xf32>, vector<8x239xf32>, vector<8x239xf32>, vector<8x239xf32> -> vector<32x239xf32>
    %cst_59 = arith.constant dense<0.000000e+00> : vector<16x239xf32>
    %132 = tpu.matmul %0, %131, %cst_59 {dimension_numbers = #tpu.dot_dimension_numbers<[1], [0], [0], [1], [0, 0, 1, 1], [], []>} : vector<16x32xf32>, vector<32x239xf32>, vector<16x239xf32> -> vector<16x239xf32>
    %133 = vector.broadcast %1 : vector<16x1xf32> to vector<16x239xf32>
    %134 = arith.addf %132, %133 : vector<16x239xf32>
    %cst_60 = arith.constant 0.000000e+00 : f32
    %135 = vector.broadcast %cst_60 : f32 to vector<16x239xf32>
    %136 = arith.maximumf %134, %135 : vector<16x239xf32>
    %137 = vector.extract_strided_slice %136 {offsets = [0, 0], sizes = [16, 238], strides = [1, 1]} : vector<16x239xf32> to vector<16x238xf32>
    %138 = vector.extract_strided_slice %136 {offsets = [0, 1], sizes = [16, 238], strides = [1, 1]} : vector<16x239xf32> to vector<16x238xf32>
    %139 = arith.maximumf %137, %138 : vector<16x238xf32>
    %140 = vector.extract_strided_slice %139 {offsets = [0, 0], sizes = [16, 222], strides = [1, 1]} : vector<16x238xf32> to vector<16x222xf32>
    %141 = vector.extract_strided_slice %139 {offsets = [0, 16], sizes = [16, 222], strides = [1, 1]} : vector<16x238xf32> to vector<16x222xf32>
    %142 = arith.maximumf %140, %141 : vector<16x222xf32>
    %cst_61 = arith.constant dense<0.000000e+00> : vector<16x49xf32>
    %143 = tpu.matmul %142, %6, %cst_61 {dimension_numbers = #tpu.dot_dimension_numbers<[1], [0], [0], [1], [0, 0, 1, 1], [], []>} : vector<16x222xf32>, vector<222x49xf32>, vector<16x49xf32> -> vector<16x49xf32>
    %144 = vector.extract_strided_slice %143 {offsets = [0, 0], sizes = [16, 41], strides = [1, 1]} : vector<16x49xf32> to vector<16x41xf32>
    %145 = vector.extract_strided_slice %143 {offsets = [0, 1], sizes = [16, 41], strides = [1, 1]} : vector<16x49xf32> to vector<16x41xf32>
    %146 = vector.extract_strided_slice %143 {offsets = [0, 7], sizes = [16, 41], strides = [1, 1]} : vector<16x49xf32> to vector<16x41xf32>
    %147 = vector.extract_strided_slice %143 {offsets = [0, 8], sizes = [16, 41], strides = [1, 1]} : vector<16x49xf32> to vector<16x41xf32>
    %148 = tpu.concatenate %144, %145, %146, %147 in 0 : vector<16x41xf32>, vector<16x41xf32>, vector<16x41xf32>, vector<16x41xf32> -> vector<64x41xf32>
    %cst_62 = arith.constant dense<0.000000e+00> : vector<32x41xf32>
    %149 = tpu.matmul %2, %148, %cst_62 {dimension_numbers = #tpu.dot_dimension_numbers<[1], [0], [0], [1], [0, 0, 1, 1], [], []>} : vector<32x64xf32>, vector<64x41xf32>, vector<32x41xf32> -> vector<32x41xf32>
    %150 = vector.broadcast %3 : vector<32x1xf32> to vector<32x41xf32>
    %151 = arith.addf %149, %150 : vector<32x41xf32>
    %cst_63 = arith.constant 0.000000e+00 : f32
    %152 = vector.broadcast %cst_63 : f32 to vector<32x41xf32>
    %153 = arith.maximumf %151, %152 : vector<32x41xf32>
    %154 = vector.extract_strided_slice %153 {offsets = [0, 0], sizes = [32, 33], strides = [1, 1]} : vector<32x41xf32> to vector<32x33xf32>
    %155 = vector.extract_strided_slice %153 {offsets = [0, 1], sizes = [32, 33], strides = [1, 1]} : vector<32x41xf32> to vector<32x33xf32>
    %156 = vector.extract_strided_slice %153 {offsets = [0, 7], sizes = [32, 33], strides = [1, 1]} : vector<32x41xf32> to vector<32x33xf32>
    %157 = vector.extract_strided_slice %153 {offsets = [0, 8], sizes = [32, 33], strides = [1, 1]} : vector<32x41xf32> to vector<32x33xf32>
    %158 = tpu.concatenate %154, %155, %156, %157 in 0 : vector<32x33xf32>, vector<32x33xf32>, vector<32x33xf32>, vector<32x33xf32> -> vector<128x33xf32>
    %cst_64 = arith.constant dense<0.000000e+00> : vector<64x33xf32>
    %159 = tpu.matmul %4, %158, %cst_64 {dimension_numbers = #tpu.dot_dimension_numbers<[1], [0], [0], [1], [0, 0, 1, 1], [], []>} : vector<64x128xf32>, vector<128x33xf32>, vector<64x33xf32> -> vector<64x33xf32>
    %160 = vector.broadcast %5 : vector<64x1xf32> to vector<64x33xf32>
    %161 = arith.addf %159, %160 : vector<64x33xf32>
    %cst_65 = arith.constant 0.000000e+00 : f32
    %162 = vector.broadcast %cst_65 : f32 to vector<64x33xf32>
    %163 = arith.maximumf %161, %162 : vector<64x33xf32>
    %164 = vector.extract_strided_slice %163 {offsets = [0, 0], sizes = [64, 5], strides = [1, 1]} : vector<64x33xf32> to vector<64x5xf32>
    %c2_66 = arith.constant 2 : index
    %c0_67 = arith.constant 0 : index
    %c0_68 = arith.constant 0 : index
    %165 = vector.load %arg9[%c2_66, %c0_67, %c0_68] : memref<4x64x25xf32, #tpu.memory_space<vmem>>, vector<1x64x5xf32>
    %166 = vector.shape_cast %165 : vector<1x64x5xf32> to vector<64x5xf32>
    %167 = vector.shape_cast %164 : vector<64x5xf32> to vector<1x64x5xf32>
    tpu.vector_store %arg9[%c2_66, %c0_67, %c0_68], %167 {strides = array<i32>} : memref<4x64x25xf32, #tpu.memory_space<vmem>>, vector<1x64x5xf32>,
    %168 = vector.extract_strided_slice %163 {offsets = [0, 7], sizes = [64, 5], strides = [1, 1]} : vector<64x33xf32> to vector<64x5xf32>
    %c2_69 = arith.constant 2 : index
    %c0_70 = arith.constant 0 : index
    %c5_71 = arith.constant 5 : index
    %169 = vector.load %arg9[%c2_69, %c0_70, %c5_71] : memref<4x64x25xf32, #tpu.memory_space<vmem>>, vector<1x64x5xf32>
    %170 = vector.shape_cast %169 : vector<1x64x5xf32> to vector<64x5xf32>
    %171 = vector.shape_cast %168 : vector<64x5xf32> to vector<1x64x5xf32>
    tpu.vector_store %arg9[%c2_69, %c0_70, %c5_71], %171 {strides = array<i32>} : memref<4x64x25xf32, #tpu.memory_space<vmem>>, vector<1x64x5xf32>,
    %172 = vector.extract_strided_slice %163 {offsets = [0, 14], sizes = [64, 5], strides = [1, 1]} : vector<64x33xf32> to vector<64x5xf32>
    %c2_72 = arith.constant 2 : index
    %c0_73 = arith.constant 0 : index
    %c10_74 = arith.constant 10 : index
    %173 = vector.load %arg9[%c2_72, %c0_73, %c10_74] : memref<4x64x25xf32, #tpu.memory_space<vmem>>, vector<1x64x5xf32>
    %174 = vector.shape_cast %173 : vector<1x64x5xf32> to vector<64x5xf32>
    %175 = vector.shape_cast %172 : vector<64x5xf32> to vector<1x64x5xf32>
    tpu.vector_store %arg9[%c2_72, %c0_73, %c10_74], %175 {strides = array<i32>} : memref<4x64x25xf32, #tpu.memory_space<vmem>>, vector<1x64x5xf32>,
    %176 = vector.extract_strided_slice %163 {offsets = [0, 21], sizes = [64, 5], strides = [1, 1]} : vector<64x33xf32> to vector<64x5xf32>
    %c2_75 = arith.constant 2 : index
    %c0_76 = arith.constant 0 : index
    %c15_77 = arith.constant 15 : index
    %177 = vector.load %arg9[%c2_75, %c0_76, %c15_77] : memref<4x64x25xf32, #tpu.memory_space<vmem>>, vector<1x64x5xf32>
    %178 = vector.shape_cast %177 : vector<1x64x5xf32> to vector<64x5xf32>
    %179 = vector.shape_cast %176 : vector<64x5xf32> to vector<1x64x5xf32>
    tpu.vector_store %arg9[%c2_75, %c0_76, %c15_77], %179 {strides = array<i32>} : memref<4x64x25xf32, #tpu.memory_space<vmem>>, vector<1x64x5xf32>,
    %180 = vector.extract_strided_slice %163 {offsets = [0, 28], sizes = [64, 5], strides = [1, 1]} : vector<64x33xf32> to vector<64x5xf32>
    %c2_78 = arith.constant 2 : index
    %c0_79 = arith.constant 0 : index
    %c20_80 = arith.constant 20 : index
    %181 = vector.load %arg9[%c2_78, %c0_79, %c20_80] : memref<4x64x25xf32, #tpu.memory_space<vmem>>, vector<1x64x5xf32>
    %182 = vector.shape_cast %181 : vector<1x64x5xf32> to vector<64x5xf32>
    %183 = vector.shape_cast %180 : vector<64x5xf32> to vector<1x64x5xf32>
    tpu.vector_store %arg9[%c2_78, %c0_79, %c20_80], %183 {strides = array<i32>} : memref<4x64x25xf32, #tpu.memory_space<vmem>>, vector<1x64x5xf32>,
    %c3 = arith.constant 3 : index
    %c0_81 = arith.constant 0 : index
    %c0_82 = arith.constant 0 : index
    %184 = vector.load %arg1[%c3, %c0_81, %c0_82] : memref<4x8x256xf32, #tpu.memory_space<vmem>>, vector<1x8x256xf32>
    %185 = vector.shape_cast %184 : vector<1x8x256xf32> to vector<8x256xf32>
    %186 = vector.extract_strided_slice %185 {offsets = [0, 0], sizes = [8, 239], strides = [1, 1]} : vector<8x256xf32> to vector<8x239xf32>
    %187 = vector.extract_strided_slice %185 {offsets = [0, 1], sizes = [8, 239], strides = [1, 1]} : vector<8x256xf32> to vector<8x239xf32>
    %188 = vector.extract_strided_slice %185 {offsets = [0, 16], sizes = [8, 239], strides = [1, 1]} : vector<8x256xf32> to vector<8x239xf32>
    %189 = vector.extract_strided_slice %185 {offsets = [0, 17], sizes = [8, 239], strides = [1, 1]} : vector<8x256xf32> to vector<8x239xf32>
    %190 = tpu.concatenate %186, %187, %188, %189 in 0 : vector<8x239xf32>, vector<8x239xf32>, vector<8x239xf32>, vector<8x239xf32> -> vector<32x239xf32>
    %cst_83 = arith.constant dense<0.000000e+00> : vector<16x239xf32>
    %191 = tpu.matmul %0, %190, %cst_83 {dimension_numbers = #tpu.dot_dimension_numbers<[1], [0], [0], [1], [0, 0, 1, 1], [], []>} : vector<16x32xf32>, vector<32x239xf32>, vector<16x239xf32> -> vector<16x239xf32>
    %192 = vector.broadcast %1 : vector<16x1xf32> to vector<16x239xf32>
    %193 = arith.addf %191, %192 : vector<16x239xf32>
    %cst_84 = arith.constant 0.000000e+00 : f32
    %194 = vector.broadcast %cst_84 : f32 to vector<16x239xf32>
    %195 = arith.maximumf %193, %194 : vector<16x239xf32>
    %196 = vector.extract_strided_slice %195 {offsets = [0, 0], sizes = [16, 238], strides = [1, 1]} : vector<16x239xf32> to vector<16x238xf32>
    %197 = vector.extract_strided_slice %195 {offsets = [0, 1], sizes = [16, 238], strides = [1, 1]} : vector<16x239xf32> to vector<16x238xf32>
    %198 = arith.maximumf %196, %197 : vector<16x238xf32>
    %199 = vector.extract_strided_slice %198 {offsets = [0, 0], sizes = [16, 222], strides = [1, 1]} : vector<16x238xf32> to vector<16x222xf32>
    %200 = vector.extract_strided_slice %198 {offsets = [0, 16], sizes = [16, 222], strides = [1, 1]} : vector<16x238xf32> to vector<16x222xf32>
    %201 = arith.maximumf %199, %200 : vector<16x222xf32>
    %cst_85 = arith.constant dense<0.000000e+00> : vector<16x49xf32>
    %202 = tpu.matmul %201, %6, %cst_85 {dimension_numbers = #tpu.dot_dimension_numbers<[1], [0], [0], [1], [0, 0, 1, 1], [], []>} : vector<16x222xf32>, vector<222x49xf32>, vector<16x49xf32> -> vector<16x49xf32>
    %203 = vector.extract_strided_slice %202 {offsets = [0, 0], sizes = [16, 41], strides = [1, 1]} : vector<16x49xf32> to vector<16x41xf32>
    %204 = vector.extract_strided_slice %202 {offsets = [0, 1], sizes = [16, 41], strides = [1, 1]} : vector<16x49xf32> to vector<16x41xf32>
    %205 = vector.extract_strided_slice %202 {offsets = [0, 7], sizes = [16, 41], strides = [1, 1]} : vector<16x49xf32> to vector<16x41xf32>
    %206 = vector.extract_strided_slice %202 {offsets = [0, 8], sizes = [16, 41], strides = [1, 1]} : vector<16x49xf32> to vector<16x41xf32>
    %207 = tpu.concatenate %203, %204, %205, %206 in 0 : vector<16x41xf32>, vector<16x41xf32>, vector<16x41xf32>, vector<16x41xf32> -> vector<64x41xf32>
    %cst_86 = arith.constant dense<0.000000e+00> : vector<32x41xf32>
    %208 = tpu.matmul %2, %207, %cst_86 {dimension_numbers = #tpu.dot_dimension_numbers<[1], [0], [0], [1], [0, 0, 1, 1], [], []>} : vector<32x64xf32>, vector<64x41xf32>, vector<32x41xf32> -> vector<32x41xf32>
    %209 = vector.broadcast %3 : vector<32x1xf32> to vector<32x41xf32>
    %210 = arith.addf %208, %209 : vector<32x41xf32>
    %cst_87 = arith.constant 0.000000e+00 : f32
    %211 = vector.broadcast %cst_87 : f32 to vector<32x41xf32>
    %212 = arith.maximumf %210, %211 : vector<32x41xf32>
    %213 = vector.extract_strided_slice %212 {offsets = [0, 0], sizes = [32, 33], strides = [1, 1]} : vector<32x41xf32> to vector<32x33xf32>
    %214 = vector.extract_strided_slice %212 {offsets = [0, 1], sizes = [32, 33], strides = [1, 1]} : vector<32x41xf32> to vector<32x33xf32>
    %215 = vector.extract_strided_slice %212 {offsets = [0, 7], sizes = [32, 33], strides = [1, 1]} : vector<32x41xf32> to vector<32x33xf32>
    %216 = vector.extract_strided_slice %212 {offsets = [0, 8], sizes = [32, 33], strides = [1, 1]} : vector<32x41xf32> to vector<32x33xf32>
    %217 = tpu.concatenate %213, %214, %215, %216 in 0 : vector<32x33xf32>, vector<32x33xf32>, vector<32x33xf32>, vector<32x33xf32> -> vector<128x33xf32>
    %cst_88 = arith.constant dense<0.000000e+00> : vector<64x33xf32>
    %218 = tpu.matmul %4, %217, %cst_88 {dimension_numbers = #tpu.dot_dimension_numbers<[1], [0], [0], [1], [0, 0, 1, 1], [], []>} : vector<64x128xf32>, vector<128x33xf32>, vector<64x33xf32> -> vector<64x33xf32>
    %219 = vector.broadcast %5 : vector<64x1xf32> to vector<64x33xf32>
    %220 = arith.addf %218, %219 : vector<64x33xf32>
    %cst_89 = arith.constant 0.000000e+00 : f32
    %221 = vector.broadcast %cst_89 : f32 to vector<64x33xf32>
    %222 = arith.maximumf %220, %221 : vector<64x33xf32>
    %223 = vector.extract_strided_slice %222 {offsets = [0, 0], sizes = [64, 5], strides = [1, 1]} : vector<64x33xf32> to vector<64x5xf32>
    %c3_90 = arith.constant 3 : index
    %c0_91 = arith.constant 0 : index
    %c0_92 = arith.constant 0 : index
    %224 = vector.load %arg9[%c3_90, %c0_91, %c0_92] : memref<4x64x25xf32, #tpu.memory_space<vmem>>, vector<1x64x5xf32>
    %225 = vector.shape_cast %224 : vector<1x64x5xf32> to vector<64x5xf32>
    %226 = vector.shape_cast %223 : vector<64x5xf32> to vector<1x64x5xf32>
    tpu.vector_store %arg9[%c3_90, %c0_91, %c0_92], %226 {strides = array<i32>} : memref<4x64x25xf32, #tpu.memory_space<vmem>>, vector<1x64x5xf32>,
    %227 = vector.extract_strided_slice %222 {offsets = [0, 7], sizes = [64, 5], strides = [1, 1]} : vector<64x33xf32> to vector<64x5xf32>
    %c3_93 = arith.constant 3 : index
    %c0_94 = arith.constant 0 : index
    %c5_95 = arith.constant 5 : index
    %228 = vector.load %arg9[%c3_93, %c0_94, %c5_95] : memref<4x64x25xf32, #tpu.memory_space<vmem>>, vector<1x64x5xf32>
    %229 = vector.shape_cast %228 : vector<1x64x5xf32> to vector<64x5xf32>
    %230 = vector.shape_cast %227 : vector<64x5xf32> to vector<1x64x5xf32>
    tpu.vector_store %arg9[%c3_93, %c0_94, %c5_95], %230 {strides = array<i32>} : memref<4x64x25xf32, #tpu.memory_space<vmem>>, vector<1x64x5xf32>,
    %231 = vector.extract_strided_slice %222 {offsets = [0, 14], sizes = [64, 5], strides = [1, 1]} : vector<64x33xf32> to vector<64x5xf32>
    %c3_96 = arith.constant 3 : index
    %c0_97 = arith.constant 0 : index
    %c10_98 = arith.constant 10 : index
    %232 = vector.load %arg9[%c3_96, %c0_97, %c10_98] : memref<4x64x25xf32, #tpu.memory_space<vmem>>, vector<1x64x5xf32>
    %233 = vector.shape_cast %232 : vector<1x64x5xf32> to vector<64x5xf32>
    %234 = vector.shape_cast %231 : vector<64x5xf32> to vector<1x64x5xf32>
    tpu.vector_store %arg9[%c3_96, %c0_97, %c10_98], %234 {strides = array<i32>} : memref<4x64x25xf32, #tpu.memory_space<vmem>>, vector<1x64x5xf32>,
    %235 = vector.extract_strided_slice %222 {offsets = [0, 21], sizes = [64, 5], strides = [1, 1]} : vector<64x33xf32> to vector<64x5xf32>
    %c3_99 = arith.constant 3 : index
    %c0_100 = arith.constant 0 : index
    %c15_101 = arith.constant 15 : index
    %236 = vector.load %arg9[%c3_99, %c0_100, %c15_101] : memref<4x64x25xf32, #tpu.memory_space<vmem>>, vector<1x64x5xf32>
    %237 = vector.shape_cast %236 : vector<1x64x5xf32> to vector<64x5xf32>
    %238 = vector.shape_cast %235 : vector<64x5xf32> to vector<1x64x5xf32>
    tpu.vector_store %arg9[%c3_99, %c0_100, %c15_101], %238 {strides = array<i32>} : memref<4x64x25xf32, #tpu.memory_space<vmem>>, vector<1x64x5xf32>,
    %239 = vector.extract_strided_slice %222 {offsets = [0, 28], sizes = [64, 5], strides = [1, 1]} : vector<64x33xf32> to vector<64x5xf32>
    %c3_102 = arith.constant 3 : index
    %c0_103 = arith.constant 0 : index
    %c20_104 = arith.constant 20 : index
    %240 = vector.load %arg9[%c3_102, %c0_103, %c20_104] : memref<4x64x25xf32, #tpu.memory_space<vmem>>, vector<1x64x5xf32>
    %241 = vector.shape_cast %240 : vector<1x64x5xf32> to vector<64x5xf32>
    %242 = vector.shape_cast %239 : vector<64x5xf32> to vector<1x64x5xf32>
    tpu.vector_store %arg9[%c3_102, %c0_103, %c20_104], %242 {strides = array<i32>} : memref<4x64x25xf32, #tpu.memory_space<vmem>>, vector<1x64x5xf32>,
    return
  }
  func.func @transform_0(%arg0: i32) -> (i32, i32, i32) {
    %c0_i32 = arith.constant 0 : i32
    %c0_i32_0 = arith.constant 0 : i32
    %c0_i32_1 = arith.constant 0 : i32
    return %arg0, %c0_i32, %c0_i32_0 : i32, i32, i32
  }
  func.func @transform_1(%arg0: i32) -> (i32, i32) {
    %c0_i32 = arith.constant 0 : i32
    %c0_i32_0 = arith.constant 0 : i32
    %c0_i32_1 = arith.constant 0 : i32
    return %c0_i32, %c0_i32_0 : i32, i32
  }
  func.func @transform_2(%arg0: i32) -> (i32, i32) {
    %c0_i32 = arith.constant 0 : i32
    %c0_i32_0 = arith.constant 0 : i32
    %c0_i32_1 = arith.constant 0 : i32
    return %c0_i32, %c0_i32_0 : i32, i32
  }
  func.func @transform_3(%arg0: i32) -> (i32, i32) {
    %c0_i32 = arith.constant 0 : i32
    %c0_i32_0 = arith.constant 0 : i32
    %c0_i32_1 = arith.constant 0 : i32
    return %c0_i32, %c0_i32_0 : i32, i32
  }
  func.func @transform_4(%arg0: i32) -> (i32, i32) {
    %c0_i32 = arith.constant 0 : i32
    %c0_i32_0 = arith.constant 0 : i32
    %c0_i32_1 = arith.constant 0 : i32
    return %c0_i32, %c0_i32_0 : i32, i32
  }
  func.func @transform_5(%arg0: i32) -> (i32, i32) {
    %c0_i32 = arith.constant 0 : i32
    %c0_i32_0 = arith.constant 0 : i32
    %c0_i32_1 = arith.constant 0 : i32
    return %c0_i32, %c0_i32_0 : i32, i32
  }
  func.func @transform_6(%arg0: i32) -> (i32, i32) {
    %c0_i32 = arith.constant 0 : i32
    %c0_i32_0 = arith.constant 0 : i32
    %c0_i32_1 = arith.constant 0 : i32
    return %c0_i32, %c0_i32_0 : i32, i32
  }
  func.func @transform_7(%arg0: i32) -> (i32, i32) {
    %c0_i32 = arith.constant 0 : i32
    %c0_i32_0 = arith.constant 0 : i32
    %c0_i32_1 = arith.constant 0 : i32
    return %c0_i32, %c0_i32_0 : i32, i32
  }
  func.func @transform_8(%arg0: i32) -> (i32, i32, i32) {
    %c0_i32 = arith.constant 0 : i32
    %c0_i32_0 = arith.constant 0 : i32
    %c0_i32_1 = arith.constant 0 : i32
    return %arg0, %c0_i32, %c0_i32_0 : i32, i32, i32
  }
}

</mosaic_0001>

<llo_original>
// kernel: cnn_encoder_forward.1
$region0: #{cnn_encoder_forward.1}
  #allocation0 [shape = 'u32[]', space=smem, size = 0x4, offset = 0x4, fixed_abs, tag = 'smem constant byte address 0x4 - core index']
  #allocation1 [shape = 'u32[144,128]{1,0:T(1,128)}', space=vmem, size = 0x12000, scoped, tag = 'internal scratch']
  %s0 = inlined_call_operand.vmem [shape: f32[8,8,256], index: 0, kind: input, shape index: {}]
  %s1 = inlined_call_operand.vmem [shape: f32[16,32], index: 1, kind: input, shape index: {}]
  %s2 = inlined_call_operand.vmem [shape: f32[16,1], index: 2, kind: input, shape index: {}]
  %s3 = inlined_call_operand.vmem [shape: f32[32,64], index: 3, kind: input, shape index: {}]
  %s4 = inlined_call_operand.vmem [shape: f32[32,1], index: 4, kind: input, shape index: {}]
  %s5 = inlined_call_operand.vmem [shape: f32[64,128], index: 5, kind: input, shape index: {}]
  %s6 = inlined_call_operand.vmem [shape: f32[64,1], index: 6, kind: input, shape index: {}]
  %s7 = inlined_call_operand.vmem [shape: f32[222,49], index: 7, kind: input, shape index: {}]
  %s8 = inlined_call_operand.vmem [shape: f32[8,64,25], index: 8, kind: output, shape index: {}]
  %s9 = sld [smem:[#allocation0]]
  $region65: #{cnn_encoder_forward.1} parent=0
    _
  %s11 = ssub.s32 1, %s9
  %s12 = scalar_select 0, %s11, %s9
  loop: start=0, step=1, limit=4
  $region2: #{cnn_encoder_forward.1} parent=0 // loop_pre_header
    _
  $region3: #{cnn_encoder_forward.1} parent=0 // loop_header
    %s14 = sphi 0, %s18
    %p15 = scmp.ge.s32.totalorder %s14, 4
    %s24 = sphi 0, %s26
    %s27 = sphi 0, %s24
    %s28 = sphi 0, %s27
    %s44 = sphi 0, %s28
    %s48 = sphi 0, %s48
    %s50 = sphi 0, %s48
    %s51 = sphi 0, %s50
    %s65 = sphi 0, %s51
    %s69 = sphi 0, %s69
    %s71 = sphi 0, %s69
    %s72 = sphi 0, %s71
    %s86 = sphi 0, %s72
    %s90 = sphi 0, %s90
    %s92 = sphi 0, %s90
    %s93 = sphi 0, %s92
    %s107 = sphi 0, %s93
    %s111 = sphi 0, %s111
    %s113 = sphi 0, %s111
    %s114 = sphi 0, %s113
    %s128 = sphi 0, %s114
    %s132 = sphi 0, %s132
    %s134 = sphi 0, %s132
    %s135 = sphi 0, %s134
    %s149 = sphi 0, %s135
    %s153 = sphi 0, %s153
    %s155 = sphi 0, %s153
    %s156 = sphi 0, %s155
    %s170 = sphi 0, %s156
    %s174 = sphi 0, %s174
    %s176 = sphi 0, %s174
    %s177 = sphi 0, %s176
    %s191 = sphi 0, %s177
    %s197 = sphi 0, %s199
    %s200 = sphi 0, %s197
    %s201 = sphi 0, %s200
    %s217 = sphi 0, %s201
  $region4: #{cnn_encoder_forward.1} parent=0 // loop_header_branch
    %17 = sbr.rel (%p15) target = $region8
  $region5: #{cnn_encoder_forward.1} parent=0 // loop_body
    %s19 = ssub.s32 %s14, 1
    %s20 = ssub.s32 %s14, 2
    %s21 = sadd.s32 %s14, 1
    %s22 = ssub.s32 %s14, %s21
    %p23 = scmp.eq.s32.totalorder %s22, 0
    %s25 = sadd.s32 %s24, 1
    %s26 = scalar_select %p23, %s24, %s25
    %p29 = pneg %p23
    %p30 = scmp.eq.s32.totalorder %s14, 1
    %p31 = por %p29, %p30
    %p32 = scmp.ne.s32.totalorder %s24, %s27
    %p33 = scmp.eq.s32.totalorder %s14, 0
    %p34 = por %p32, %p33
    %p35 = scmp.ne.s32.totalorder %s24, %s27
    %p36 = scmp.eq.s32.totalorder %s19, 1
    %p37 = por %p35, %p36
    %p38 = scmp.ne.s32.totalorder %s27, %s28
    %p39 = scmp.eq.s32.totalorder %s19, 0
    %p40 = por %p38, %p39
    %p41 = scmp.ne.s32.totalorder %s27, %s28
    %p42 = scmp.eq.s32.totalorder %s20, 1
    %p43 = por %p41, %p42
    %p45 = scmp.ne.s32.totalorder %s28, %s44
    %p46 = scmp.eq.s32.totalorder %s20, 0
    %p47 = por %p45, %p46
    %s49 = sadd.s32 %s48, 1
    %p52 = scmp.eq.s32.totalorder %s14, 1
    %p53 = scmp.ne.s32.totalorder %s48, %s50
    %p54 = scmp.eq.s32.totalorder %s14, 0
    %p55 = por %p53, %p54
    %p56 = scmp.ne.s32.totalorder %s48, %s50
    %p57 = scmp.eq.s32.totalorder %s19, 1
    %p58 = por %p56, %p57
    %p59 = scmp.ne.s32.totalorder %s50, %s51
    %p60 = scmp.eq.s32.totalorder %s19, 0
    %p61 = por %p59, %p60
    %p62 = scmp.ne.s32.totalorder %s50, %s51
    %p63 = scmp.eq.s32.totalorder %s20, 1
    %p64 = por %p62, %p63
    %p66 = scmp.ne.s32.totalorder %s51, %s65
    %p67 = scmp.eq.s32.totalorder %s20, 0
    %p68 = por %p66, %p67
    %s70 = sadd.s32 %s69, 1
    %p73 = scmp.eq.s32.totalorder %s14, 1
    %p74 = scmp.ne.s32.totalorder %s69, %s71
    %p75 = scmp.eq.s32.totalorder %s14, 0
    %p76 = por %p74, %p75
    %p77 = scmp.ne.s32.totalorder %s69, %s71
    %p78 = scmp.eq.s32.totalorder %s19, 1
    %p79 = por %p77, %p78
    %p80 = scmp.ne.s32.totalorder %s71, %s72
    %p81 = scmp.eq.s32.totalorder %s19, 0
    %p82 = por %p80, %p81
    %p83 = scmp.ne.s32.totalorder %s71, %s72
    %p84 = scmp.eq.s32.totalorder %s20, 1
    %p85 = por %p83, %p84
    %p87 = scmp.ne.s32.totalorder %s72, %s86
    %p88 = scmp.eq.s32.totalorder %s20, 0
    %p89 = por %p87, %p88
    %s91 = sadd.s32 %s90, 1
    %p94 = scmp.eq.s32.totalorder %s14, 1
    %p95 = scmp.ne.s32.totalorder %s90, %s92
    %p96 = scmp.eq.s32.totalorder %s14, 0
    %p97 = por %p95, %p96
    %p98 = scmp.ne.s32.totalorder %s90, %s92
    %p99 = scmp.eq.s32.totalorder %s19, 1
    %p100 = por %p98, %p99
    %p101 = scmp.ne.s32.totalorder %s92, %s93
    %p102 = scmp.eq.s32.totalorder %s19, 0
    %p103 = por %p101, %p102
    %p104 = scmp.ne.s32.totalorder %s92, %s93
    %p105 = scmp.eq.s32.totalorder %s20, 1
    %p106 = por %p104, %p105
    %p108 = scmp.ne.s32.totalorder %s93, %s107
    %p109 = scmp.eq.s32.totalorder %s20, 0
    %p110 = por %p108, %p109
    %s112 = sadd.s32 %s111, 1
    %p115 = scmp.eq.s32.totalorder %s14, 1
    %p116 = scmp.ne.s32.totalorder %s111, %s113
    %p117 = scmp.eq.s32.totalorder %s14, 0
    %p118 = por %p116, %p117
    %p119 = scmp.ne.s32.totalorder %s111, %s113
    %p120 = scmp.eq.s32.totalorder %s19, 1
    %p121 = por %p119, %p120
    %p122 = scmp.ne.s32.totalorder %s113, %s114
    %p123 = scmp.eq.s32.totalorder %s19, 0
    %p124 = por %p122, %p123
    %p125 = scmp.ne.s32.totalorder %s113, %s114
    %p126 = scmp.eq.s32.totalorder %s20, 1
    %p127 = por %p125, %p126
    %p129 = scmp.ne.s32.totalorder %s114, %s128
    %p130 = scmp.eq.s32.totalorder %s20, 0
    %p131 = por %p129, %p130
    %s133 = sadd.s32 %s132, 1
    %p136 = scmp.eq.s32.totalorder %s14, 1
    %p137 = scmp.ne.s32.totalorder %s132, %s134
    %p138 = scmp.eq.s32.totalorder %s14, 0
    %p139 = por %p137, %p138
    %p140 = scmp.ne.s32.totalorder %s132, %s134
    %p141 = scmp.eq.s32.totalorder %s19, 1
    %p142 = por %p140, %p141
    %p143 = scmp.ne.s32.totalorder %s134, %s135
    %p144 = scmp.eq.s32.totalorder %s19, 0
    %p145 = por %p143, %p144
    %p146 = scmp.ne.s32.totalorder %s134, %s135
    %p147 = scmp.eq.s32.totalorder %s20, 1
    %p148 = por %p146, %p147
    %p150 = scmp.ne.s32.totalorder %s135, %s149
    %p151 = scmp.eq.s32.totalorder %s20, 0
    %p152 = por %p150, %p151
    %s154 = sadd.s32 %s153, 1
    %p157 = scmp.eq.s32.totalorder %s14, 1
    %p158 = scmp.ne.s32.totalorder %s153, %s155
    %p159 = scmp.eq.s32.totalorder %s14, 0
    %p160 = por %p158, %p159
    %p161 = scmp.ne.s32.totalorder %s153, %s155
    %p162 = scmp.eq.s32.totalorder %s19, 1
    %p163 = por %p161, %p162
    %p164 = scmp.ne.s32.totalorder %s155, %s156
    %p165 = scmp.eq.s32.totalorder %s19, 0
    %p166 = por %p164, %p165
    %p167 = scmp.ne.s32.totalorder %s155, %s156
    %p168 = scmp.eq.s32.totalorder %s20, 1
    %p169 = por %p167, %p168
    %p171 = scmp.ne.s32.totalorder %s156, %s170
    %p172 = scmp.eq.s32.totalorder %s20, 0
    %p173 = por %p171, %p172
    %s175 = sadd.s32 %s174, 1
    %p178 = scmp.eq.s32.totalorder %s14, 1
    %p179 = scmp.ne.s32.totalorder %s174, %s176
    %p180 = scmp.eq.s32.totalorder %s14, 0
    %p181 = por %p179, %p180
    %p182 = scmp.ne.s32.totalorder %s174, %s176
    %p183 = scmp.eq.s32.totalorder %s19, 1
    %p184 = por %p182, %p183
    %p185 = scmp.ne.s32.totalorder %s176, %s177
    %p186 = scmp.eq.s32.totalorder %s19, 0
    %p187 = por %p185, %p186
    %p188 = scmp.ne.s32.totalorder %s176, %s177
    %p189 = scmp.eq.s32.totalorder %s20, 1
    %p190 = por %p188, %p189
    %p192 = scmp.ne.s32.totalorder %s177, %s191
    %p193 = scmp.eq.s32.totalorder %s20, 0
    %p194 = por %p192, %p193
    %s195 = ssub.s32 %s14, %s21
    %p196 = scmp.eq.s32.totalorder %s195, 0
    %s198 = sadd.s32 %s197, 1
    %s199 = scalar_select %p196, %s197, %s198
    %p202 = pneg %p196
    %p203 = scmp.eq.s32.totalorder %s14, 1
    %p204 = por %p202, %p203
    %p205 = scmp.ne.s32.totalorder %s197, %s200
    %p206 = scmp.eq.s32.totalorder %s14, 0
    %p207 = por %p205, %p206
    %p208 = scmp.ne.s32.totalorder %s197, %s200
    %p209 = scmp.eq.s32.totalorder %s19, 1
    %p210 = por %p208, %p209
    %p211 = scmp.ne.s32.totalorder %s200, %s201
    %p212 = scmp.eq.s32.totalorder %s19, 0
    %p213 = por %p211, %p212
    %p214 = scmp.ne.s32.totalorder %s200, %s201
    %p215 = scmp.eq.s32.totalorder %s20, 1
    %p216 = por %p214, %p215
    %p218 = scmp.ne.s32.totalorder %s201, %s217
    %p219 = scmp.eq.s32.totalorder %s20, 0
    %p220 = por %p218, %p219
    %p221 = scmp.le.s32.totalorder 1, %s14
    %p222 = scmp.lt.s32.totalorder %s14, 3
    %p223 = pnand %p221, %p222
    %p224 = pneg %p223
    // Predicated region
    $region9: #{cnn_encoder_forward.1} parent=5 // pred_check
      _
    $region10: #{cnn_encoder_forward.1} parent=5 // pred_check_branch
      %226 = sbr.rel (%p223) target = $region12
    $region11: #{cnn_encoder_forward.1} parent=5 // pred_region
      %s227 = ssub.s32 %s14, 1
      // Predicated region
      $region13: #{cnn_encoder_forward.1} parent=11 // pred_check
        %p228 = pneg %p61
      $region14: #{cnn_encoder_forward.1} parent=11 // pred_check_branch
        %230 = sbr.rel (%p228) target = $region16
      $region15: #{cnn_encoder_forward.1} parent=11 // pred_region
        _
      $region16: #{cnn_encoder_forward.1} parent=11 // pred_fallthru
        _
      // Predicated region
      $region17: #{cnn_encoder_forward.1} parent=11 // pred_check
        %p231 = pneg %p82
      $region18: #{cnn_encoder_forward.1} parent=11 // pred_check_branch
        %233 = sbr.rel (%p231) target = $region20
      $region19: #{cnn_encoder_forward.1} parent=11 // pred_region
        _
      $region20: #{cnn_encoder_forward.1} parent=11 // pred_fallthru
        _
      // Predicated region
      $region21: #{cnn_encoder_forward.1} parent=11 // pred_check
        %p234 = pneg %p103
      $region22: #{cnn_encoder_forward.1} parent=11 // pred_check_branch
        %236 = sbr.rel (%p234) target = $region24
      $region23: #{cnn_encoder_forward.1} parent=11 // pred_region
        _
      $region24: #{cnn_encoder_forward.1} parent=11 // pred_fallthru
        _
      // Predicated region
      $region25: #{cnn_encoder_forward.1} parent=11 // pred_check
        %p237 = pneg %p124
      $region26: #{cnn_encoder_forward.1} parent=11 // pred_check_branch
        %239 = sbr.rel (%p237) target = $region28
      $region27: #{cnn_encoder_forward.1} parent=11 // pred_region
        _
      $region28: #{cnn_encoder_forward.1} parent=11 // pred_fallthru
        _
      // Predicated region
      $region29: #{cnn_encoder_forward.1} parent=11 // pred_check
        %p240 = pneg %p145
      $region30: #{cnn_encoder_forward.1} parent=11 // pred_check_branch
        %242 = sbr.rel (%p240) target = $region32
      $region31: #{cnn_encoder_forward.1} parent=11 // pred_region
        _
      $region32: #{cnn_encoder_forward.1} parent=11 // pred_fallthru
        _
      // Predicated region
      $region33: #{cnn_encoder_forward.1} parent=11 // pred_check
        %p243 = pneg %p166
      $region34: #{cnn_encoder_forward.1} parent=11 // pred_check_branch
        %245 = sbr.rel (%p243) target = $region36
      $region35: #{cnn_encoder_forward.1} parent=11 // pred_region
        _
      $region36: #{cnn_encoder_forward.1} parent=11 // pred_fallthru
        _
      // Predicated region
      $region37: #{cnn_encoder_forward.1} parent=11 // pred_check
        %p246 = pneg %p187
      $region38: #{cnn_encoder_forward.1} parent=11 // pred_check_branch
        %248 = sbr.rel (%p246) target = $region40
      $region39: #{cnn_encoder_forward.1} parent=11 // pred_region
        _
      $region40: #{cnn_encoder_forward.1} parent=11 // pred_fallthru
        _
    $region12: #{cnn_encoder_forward.1} parent=5 // pred_fallthru
      _
    %p249 = scmp.lt.s32.totalorder %s14, 2
    // Predicated region
    $region41: #{cnn_encoder_forward.1} parent=5 // pred_check
      %p250 = pneg %p249
    $region42: #{cnn_encoder_forward.1} parent=5 // pred_check_branch
      %252 = sbr.rel (%p250) target = $region44
    $region43: #{cnn_encoder_forward.1} parent=5 // pred_region
      // Predicated region
      $region45: #{cnn_encoder_forward.1} parent=43 // pred_check
        %p253 = pneg %p34
      $region46: #{cnn_encoder_forward.1} parent=43 // pred_check_branch
        %255 = sbr.rel (%p253) target = $region48
      $region47: #{cnn_encoder_forward.1} parent=43 // pred_region
        %s256 = smul.u32 4, %s14
        %p257 = scmp.lt.s32.totalorder %s256, 7
        %s258 = scalar_select %p257, %s256, 7
        %s259 = smul.addr %s258, 2
        %s260 = smul.addr %s259, 8
        %s261 = scalar_lea.vmem %s0, %s260
        %s262 = smul.u32 4, %s14
      $region48: #{cnn_encoder_forward.1} parent=43 // pred_fallthru
        _
    $region44: #{cnn_encoder_forward.1} parent=5 // pred_fallthru
      _
    %p263 = scmp.le.s32.totalorder 1, %s14
    %p264 = scmp.lt.s32.totalorder %s14, 3
    %p265 = pnand %p263, %p264
    %p266 = pneg %p265
    // Predicated region
    $region49: #{cnn_encoder_forward.1} parent=5 // pred_check
      _
    $region50: #{cnn_encoder_forward.1} parent=5 // pred_check_branch
      %268 = sbr.rel (%p265) target = $region52
    $region51: #{cnn_encoder_forward.1} parent=5 // pred_region
      %s269 = ssub.s32 %s14, 1
      %s270 = smul.u32 4, %s19
      %p271 = scmp.lt.s32.totalorder %s270, 7
      %s272 = scalar_select %p271, %s270, 7
      %s273 = smul.addr %s272, 2
      %s274 = smul.addr %s273, 8
      %s275 = scalar_lea.vmem %s0, %s274
      %p276 = pneg %p40
      %p277 = pneg %p37
      %p278 = pneg %p61
      %p279 = pneg %p58
      %p280 = pneg %p82
      %p281 = pneg %p79
      %p282 = pneg %p103
      %p283 = pneg %p100
      %p284 = pneg %p124
      %p285 = pneg %p121
      %p286 = pneg %p145
      %p287 = pneg %p142
      %p288 = pneg %p166
      %p289 = pneg %p163
      %p290 = pneg %p187
      %p291 = pneg %p184
      %p292 = pneg %p213
      %p293 = pneg %p210
      %s294 = smul.u32 4, %s19
      %p295 = scmp.lt.s32.totalorder %s294, 7
      %s296 = scalar_select %p295, %s294, 7
      %s297 = smul.addr %s296, 8
      %s298 = smul.addr %s297, 8
      %s299 = scalar_lea.vmem %s8, %s298
      %s300 = smul.u32 4, %s19
      %p301 = scmp.lt.s32.totalorder %s300, 7
      %s302 = scalar_select %p301, %s300, 7
      %s303 = smul.addr %s302, 2
      %s304 = smul.addr %s303, 8
      %s305 = scalar_lea.vmem %s0, %s304
      %s306 = smul.u32 4, %s19
      %s307 = smul.u32 4, %s19
      %p308 = scmp.lt.s32.totalorder %s307, 7
      %s309 = scalar_select %p308, %s307, 7
      %s310 = smul.addr %s309, 8
      %s311 = smul.addr %s310, 8
      %s312 = scalar_lea.vmem %s8, %s311
      %s313 = smul.u32 4, %s19
      %v314 = vld [vmem:[%s1] sm:$0xff]
      %v315 = vld [vmem:[%s1 + $0x8] sm:$0xff]
      %v316 = vld [vmem:[%s2] sm:$0xff]
      %v317 = vld [vmem:[%s2 + $0x8] sm:$0xff]
      %v318 = vld [vmem:[%s3] sm:$0xff]
      %v319 = vld [vmem:[%s3 + $0x8] sm:$0xff]
      %v320 = vld [vmem:[%s3 + $0x10] sm:$0xff]
      %v321 = vld [vmem:[%s3 + $0x18] sm:$0xff]
      %v322 = vld [vmem:[%s4] sm:$0xff]
      %v323 = vld [vmem:[%s4 + $0x8] sm:$0xff]
      %v324 = vld [vmem:[%s4 + $0x10] sm:$0xff]
      %v325 = vld [vmem:[%s4 + $0x18] sm:$0xff]
      %v326 = vld [vmem:[%s5] sm:$0xff]
      %v327 = vld [vmem:[%s5 + $0x8] sm:$0xff]
      %v328 = vld [vmem:[%s5 + $0x10] sm:$0xff]
      %v329 = vld [vmem:[%s5 + $0x18] sm:$0xff]
      %v330 = vld [vmem:[%s5 + $0x20] sm:$0xff]
      %v331 = vld [vmem:[%s5 + $0x28] sm:$0xff]
      %v332 = vld [vmem:[%s5 + $0x30] sm:$0xff]
      %v333 = vld [vmem:[%s5 + $0x38] sm:$0xff]
      %v334 = vld [vmem:[%s6] sm:$0xff]
      %v335 = vld [vmem:[%s6 + $0x8] sm:$0xff]
      %v336 = vld [vmem:[%s6 + $0x10] sm:$0xff]
      %v337 = vld [vmem:[%s6 + $0x18] sm:$0xff]
      %v338 = vld [vmem:[%s6 + $0x20] sm:$0xff]
      %v339 = vld [vmem:[%s6 + $0x28] sm:$0xff]
      %v340 = vld [vmem:[%s6 + $0x30] sm:$0xff]
      %v341 = vld [vmem:[%s6 + $0x38] sm:$0xff]
      %v342 = vld [vmem:[%s7] sm:$0xff]
      %v343 = vld [vmem:[%s7 + $0x8] sm:$0xff]
      %v344 = vld [vmem:[%s7 + $0x10] sm:$0xff]
      %v345 = vld [vmem:[%s7 + $0x18] sm:$0xff]
      %v346 = vld [vmem:[%s7 + $0x20] sm:$0xff]
      %v347 = vld [vmem:[%s7 + $0x28] sm:$0xff]
      %v348 = vld [vmem:[%s7 + $0x30] sm:$0xff]
      %v349 = vld [vmem:[%s7 + $0x38] sm:$0xff]
      %v350 = vld [vmem:[%s7 + $0x40] sm:$0xff]
      %v351 = vld [vmem:[%s7 + $0x48] sm:$0xff]
      %v352 = vld [vmem:[%s7 + $0x50] sm:$0xff]
      %v353 = vld [vmem:[%s7 + $0x58] sm:$0xff]
      %v354 = vld [vmem:[%s7 + $0x60] sm:$0xff]
      %v355 = vld [vmem:[%s7 + $0x68] sm:$0xff]
      %v356 = vld [vmem:[%s7 + $0x70] sm:$0xff]
      %v357 = vld [vmem:[%s7 + $0x78] sm:$0xff]
      %v358 = vld [vmem:[%s7 + $0x80] sm:$0xff]
      %v359 = vld [vmem:[%s7 + $0x88] sm:$0xff]
      %v360 = vld [vmem:[%s7 + $0x90] sm:$0xff]
      %v361 = vld [vmem:[%s7 + $0x98] sm:$0xff]
      %v362 = vld [vmem:[%s7 + $0xa0] sm:$0xff]
      %v363 = vld [vmem:[%s7 + $0xa8] sm:$0xff]
      %v364 = vld [vmem:[%s7 + $0xb0] sm:$0xff]
      %v365 = vld [vmem:[%s7 + $0xb8] sm:$0xff]
      %v366 = vld [vmem:[%s7 + $0xc0] sm:$0xff]
      %v367 = vld [vmem:[%s7 + $0xc8] sm:$0xff]
      %v368 = vld [vmem:[%s7 + $0xd0] sm:$0xff]
      %v369 = vld [vmem:[%s7 + $0xd8] sm:$0x3f]
      %v370 = vld [vmem:[%s305] sm:$0xff]
      %v371 = vld [vmem:[%s305 + $0x8] sm:$0xff]
      %374 = vrot.lane.b32.xlu0 %v370, 127
      %v375 = vpop.permute.xlu0 %374
      %376 = vrot.lane.b32.xlu0 %v371, 127
      %v377 = vpop.permute.xlu0 %376
      %vm378 = vcmask 1039360
      %v379 = vsel %vm378, %v375, %v377
      %382 = vrot.lane.b32.xlu0 %v370, 112
      %v383 = vpop.permute.xlu0 %382
      %384 = vrot.lane.b32.xlu0 %v371, 112
      %v385 = vpop.permute.xlu0 %384
      %vm386 = vcmask 916480
      %v387 = vsel %vm386, %v383, %v385
      %390 = vrot.lane.b32.xlu0 %v370, 111
      %v391 = vpop.permute.xlu0 %390
      %392 = vrot.lane.b32.xlu0 %v371, 111
      %v393 = vpop.permute.xlu0 %392
      %vm394 = vcmask 908288
      %v395 = vsel %vm394, %v391, %v393
      %399 = vset.pattern.permute.xlu0 0
      %400 = vperm.xlu0 %399, %v316
      %v401 = vpop.permute.xlu0 %400
      %404 = vset.pattern.permute.xlu0 0
      %405 = vperm.xlu0 %404, %v317
      %v406 = vpop.permute.xlu0 %405
      %vm408 = vcmask 261120
      %v410 = vsel %vm408, %v314, 0
      %v413 = vsel %vm408, %v315, 0
      %415 = vmatprep.subr.mxu0 %v371
      %416 = vmatpush1.msra.mxu0 %v370
      %417 = vmatprep.subr.mxu0 %v377
      %418 = vmatpush1.msra.mxu0 %v379
      %419 = vmatprep.subr.mxu0 %v385
      %420 = vmatpush1.msra.mxu0 %v387
      %421 = vmatprep.subr.mxu0 %v393
      %422 = vmatpush1.msra.mxu0 %v395
      %423 = vmatprep.subr.mxu0 0.0
      %424 = vmatpush1.msra.mxu0 0.0
      %425 = vmatprep.subr.mxu0 0.0
      %426 = vmatpush1.msra.mxu0 0.0
      %427 = vmatprep.subr.mxu0 0.0
      %428 = vmatpush1.msra.mxu0 0.0
      %429 = vmatprep.subr.mxu0 0.0
      %430 = vmatpush1.msra.mxu0 0.0
      %431 = vmatprep.subr.mxu0 0.0
      %432 = vmatpush1.msra.mxu0 0.0
      %433 = vmatprep.subr.mxu0 0.0
      %434 = vmatpush1.msra.mxu0 0.0
      %435 = vmatprep.subr.mxu0 0.0
      %436 = vmatpush1.msra.mxu0 0.0
      %437 = vmatprep.subr.mxu0 0.0
      %438 = vmatpush1.msra.mxu0 0.0
      %439 = vmatprep.subr.mxu0 0.0
      %440 = vmatpush1.msra.mxu0 0.0
      %441 = vmatprep.subr.mxu0 0.0
      %442 = vmatpush1.msra.mxu0 0.0
      %443 = vmatprep.subr.mxu0 0.0
      %444 = vmatpush1.msra.mxu0 0.0
      %445 = vmatprep.subr.mxu0 0.0
      %446 = vmatpush1.msra.mxu0 0.0
      %447 = vmatprep.subr.mxu0 0.0
      %448 = vmatpush1.msra.mxu0 0.0
      %449 = vmatprep.subr.mxu0 0.0
      %450 = vmatpush1.msra.mxu0 0.0
      %451 = vmatprep.subr.mxu0 0.0
      %452 = vmatpush1.msra.mxu0 0.0
      %453 = vmatprep.subr.mxu0 0.0
      %454 = vmatpush1.msra.mxu0 0.0
      %455 = vmatprep.subr.mxu0 0.0
      %456 = vmatpush1.msra.mxu0 0.0
      %457 = vmatprep.subr.mxu0 0.0
      %458 = vmatpush1.msra.mxu0 0.0
      %459 = vmatprep.subr.mxu0 0.0
      %460 = vmatpush1.msra.mxu0 0.0
      %461 = vmatprep.subr.mxu0 0.0
      %462 = vmatpush1.msra.mxu0 0.0
      %463 = vmatprep.subr.mxu0 0.0
      %464 = vmatpush1.msra.mxu0 0.0
      %465 = vmatprep.subr.mxu0 0.0
      %466 = vmatpush1.msra.mxu0 0.0
      %467 = vmatprep.subr.mxu0 0.0
      %468 = vmatpush1.msra.mxu0 0.0
      %469 = vmatprep.subr.mxu0 0.0
      %470 = vmatpush1.msra.mxu0 0.0
      %471 = vmatprep.subr.mxu0 0.0
      %472 = vmatpush1.msra.mxu0 0.0
      %473 = vmatprep.subr.mxu0 0.0
      %474 = vmatpush1.msra.mxu0 0.0
      %475 = vmatprep.subr.mxu0 0.0
      %476 = vmatpush1.msra.mxu0 0.0
      %477 = vmatprep.subr.mxu0 0.0
      %478 = vmatpush1.msra.mxu0 0.0
      %479 = vmatprep.mubr.f32.mxu0 0.0
      %480 = vmatmul.mubr.f32.gmra.mrb[0].mxu0 %v410
      %v481 = vpop.f32.mrb[0].mxu0
      %v482 = vadd.f32 %v401, %v481
      %v483 = vpop.f32.mrb[0].mxu0
      %v484 = vadd.f32 %v401, %v483
      %485 = vmatprep.mubr.f32.mxu0 0.0
      %486 = vmatmul.mubr.f32.gmra.mrb[0].mxu0 %v413
      %v487 = vpop.f32.mrb[0].mxu0
      %v488 = vadd.f32 %v406, %v487
      %v489 = vpop.f32.mrb[0].mxu0
      %v490 = vadd.f32 %v406, %v489
      %491 = vdwg.mxu0
      %v492 = vmax.f32 %v482, 0.0
      %v493 = vmax.f32 %v484, 0.0
      %v494 = vmax.f32 %v488, 0.0
      %v495 = vmax.f32 %v490, 0.0
      %500 = vrot.lane.b32.xlu0 %v492, 127
      %v501 = vpop.permute.xlu0 %500
      %502 = vrot.lane.b32.xlu0 %v493, 127
      %v503 = vpop.permute.xlu0 %502
      %504 = vrot.lane.b32.xlu0 %v494, 127
      %v505 = vpop.permute.xlu0 %504
      %506 = vrot.lane.b32.xlu0 %v495, 127
      %v507 = vpop.permute.xlu0 %506
      %v508 = vsel %vm378, %v501, %v503
      %v509 = vsel %vm378, %v505, %v507
      %v514 = vmax.f32 %v492, %v508
      %v515 = vmax.f32 %v493, %v503
      %v516 = vmax.f32 %v494, %v509
      %v517 = vmax.f32 %v495, %v507
      %522 = vrot.lane.b32.xlu0 %v514, 112
      %v523 = vpop.permute.xlu0 %522
      %524 = vrot.lane.b32.xlu0 %v515, 112
      %v525 = vpop.permute.xlu0 %524
      %526 = vrot.lane.b32.xlu0 %v516, 112
      %v527 = vpop.permute.xlu0 %526
      %528 = vrot.lane.b32.xlu0 %v517, 112
      %v529 = vpop.permute.xlu0 %528
      %v530 = vsel %vm386, %v523, %v525
      %v531 = vsel %vm386, %v527, %v529
      %v536 = vmax.f32 %v514, %v530
      %v537 = vmax.f32 %v515, %v525
      %v538 = vmax.f32 %v516, %v531
      %v539 = vmax.f32 %v517, %v529
      %vm540 = vcmask 769024
      %v542 = vsel %vm540, %v537, 0
      %v545 = vsel %vm540, %v539, 0
      %vm547 = vcmask 1045504
      %v549 = vsel %vm547, %v369, 0
      %551 = vmatprep.subr.mxu0 0.0
      %552 = vmatpush1.msra.mxu0 %v342
      %553 = vmatprep.subr.mxu0 0.0
      %554 = vmatpush1.msra.mxu0 %v343
      %555 = vmatprep.subr.mxu0 0.0
      %556 = vmatpush1.msra.mxu0 %v344
      %557 = vmatprep.subr.mxu0 0.0
      %558 = vmatpush1.msra.mxu0 %v345
      %559 = vmatprep.subr.mxu0 0.0
      %560 = vmatpush1.msra.mxu0 %v346
      %561 = vmatprep.subr.mxu0 0.0
      %562 = vmatpush1.msra.mxu0 %v347
      %563 = vmatprep.subr.mxu0 0.0
      %564 = vmatpush1.msra.mxu0 %v348
      %565 = vmatprep.subr.mxu0 0.0
      %566 = vmatpush1.msra.mxu0 %v349
      %567 = vmatprep.subr.mxu0 0.0
      %568 = vmatpush1.msra.mxu0 %v350
      %569 = vmatprep.subr.mxu0 0.0
      %570 = vmatpush1.msra.mxu0 %v351
      %571 = vmatprep.subr.mxu0 0.0
      %572 = vmatpush1.msra.mxu0 %v352
      %573 = vmatprep.subr.mxu0 0.0
      %574 = vmatpush1.msra.mxu0 %v353
      %575 = vmatprep.subr.mxu0 0.0
      %576 = vmatpush1.msra.mxu0 %v354
      %577 = vmatprep.subr.mxu0 0.0
      %578 = vmatpush1.msra.mxu0 %v355
      %579 = vmatprep.subr.mxu0 0.0
      %580 = vmatpush1.msra.mxu0 %v356
      %581 = vmatprep.subr.mxu0 0.0
      %582 = vmatpush1.msra.mxu0 %v357
      %583 = vmatprep.subr.mxu0 0.0
      %584 = vmatpush1.msra.mxu0 %v358
      %585 = vmatprep.subr.mxu0 0.0
      %586 = vmatpush1.msra.mxu0 %v359
      %587 = vmatprep.subr.mxu0 0.0
      %588 = vmatpush1.msra.mxu0 %v360
      %589 = vmatprep.subr.mxu0 0.0
      %590 = vmatpush1.msra.mxu0 %v361
      %591 = vmatprep.subr.mxu0 0.0
      %592 = vmatpush1.msra.mxu0 %v362
      %593 = vmatprep.subr.mxu0 0.0
      %594 = vmatpush1.msra.mxu0 %v363
      %595 = vmatprep.subr.mxu0 0.0
      %596 = vmatpush1.msra.mxu0 %v364
      %597 = vmatprep.subr.mxu0 0.0
      %598 = vmatpush1.msra.mxu0 %v365
      %599 = vmatprep.subr.mxu0 0.0
      %600 = vmatpush1.msra.mxu0 %v366
      %601 = vmatprep.subr.mxu0 0.0
      %602 = vmatpush1.msra.mxu0 %v367
      %603 = vmatprep.subr.mxu0 0.0
      %604 = vmatpush1.msra.mxu0 %v368
      %605 = vmatprep.subr.mxu0 0.0
      %606 = vmatpush1.msra.mxu0 %v549
      %607 = vmatprep.subr.mxu0 0.0
      %608 = vmatpush1.msra.mxu0 0.0
      %609 = vmatprep.subr.mxu0 0.0
      %610 = vmatpush1.msra.mxu0 0.0
      %611 = vmatprep.subr.mxu0 0.0
      %612 = vmatpush1.msra.mxu0 0.0
      %613 = vmatprep.subr.mxu0 0.0
      %614 = vmatpush1.msra.mxu0 0.0
      %615 = vmatprep.mubr.f32.mxu0 %v542
      %616 = vmatmul.mubr.f32.gmra.mrb[0].mxu0 %v536
      %v617 = vpop.f32.mrb[0].mxu0
      %v618 = vadd.f32 0.0, %v617
      %v619 = vpop.f32.mrb[0].mxu0
      %620 = vmatprep.mubr.f32.mxu0 %v545
      %621 = vmatmul.mubr.f32.gmra.mrb[0].mxu0 %v538
      %v622 = vpop.f32.mrb[0].mxu0
      %v623 = vadd.f32 0.0, %v622
      %v624 = vpop.f32.mrb[0].mxu0
      %625 = vdwg.mxu0
      %628 = vrot.lane.b32.xlu0 %v618, 127
      %v629 = vpop.permute.xlu0 %628
      %630 = vrot.lane.b32.xlu0 %v623, 127
      %v631 = vpop.permute.xlu0 %630
      %634 = vrot.lane.b32.xlu0 %v618, 121
      %v635 = vpop.permute.xlu0 %634
      %636 = vrot.lane.b32.xlu0 %v623, 121
      %v637 = vpop.permute.xlu0 %636
      %640 = vrot.lane.b32.xlu0 %v618, 120
      %v641 = vpop.permute.xlu0 %640
      %642 = vrot.lane.b32.xlu0 %v623, 120
      %v643 = vpop.permute.xlu0 %642
      %647 = vset.pattern.permute.xlu0 0
      %648 = vperm.xlu0 %647, %v322
      %v649 = vpop.permute.xlu0 %648
      %652 = vset.pattern.permute.xlu0 0
      %653 = vperm.xlu0 %652, %v323
      %v654 = vpop.permute.xlu0 %653
      %657 = vset.pattern.permute.xlu0 0
      %658 = vperm.xlu0 %657, %v324
      %v659 = vpop.permute.xlu0 %658
      %662 = vset.pattern.permute.xlu0 0
      %663 = vperm.xlu0 %662, %v325
      %v664 = vpop.permute.xlu0 %663
      %vm666 = vcmask 523264
      %v668 = vsel %vm666, %v318, 0
      %v671 = vsel %vm666, %v319, 0
      %v674 = vsel %vm666, %v320, 0
      %v677 = vsel %vm666, %v321, 0
      %679 = vmatprep.subr.mxu0 0.0
      %680 = vmatpush1.msra.mxu0 %v618
      %681 = vmatprep.subr.mxu0 0.0
      %682 = vmatpush1.msra.mxu0 %v623
      %683 = vmatprep.subr.mxu0 0.0
      %684 = vmatpush1.msra.mxu0 %v629
      %685 = vmatprep.subr.mxu0 0.0
      %686 = vmatpush1.msra.mxu0 %v631
      %687 = vmatprep.subr.mxu0 0.0
      %688 = vmatpush1.msra.mxu0 %v635
      %689 = vmatprep.subr.mxu0 0.0
      %690 = vmatpush1.msra.mxu0 %v637
      %691 = vmatprep.subr.mxu0 0.0
      %692 = vmatpush1.msra.mxu0 %v641
      %693 = vmatprep.subr.mxu0 0.0
      %694 = vmatpush1.msra.mxu0 %v643
      %695 = vmatprep.subr.mxu0 0.0
      %696 = vmatpush1.msra.mxu0 0.0
      %697 = vmatprep.subr.mxu0 0.0
      %698 = vmatpush1.msra.mxu0 0.0
      %699 = vmatprep.subr.mxu0 0.0
      %700 = vmatpush1.msra.mxu0 0.0
      %701 = vmatprep.subr.mxu0 0.0
      %702 = vmatpush1.msra.mxu0 0.0
      %703 = vmatprep.subr.mxu0 0.0
      %704 = vmatpush1.msra.mxu0 0.0
      %705 = vmatprep.subr.mxu0 0.0
      %706 = vmatpush1.msra.mxu0 0.0
      %707 = vmatprep.subr.mxu0 0.0
      %708 = vmatpush1.msra.mxu0 0.0
      %709 = vmatprep.subr.mxu0 0.0
      %710 = vmatpush1.msra.mxu0 0.0
      %711 = vmatprep.subr.mxu0 0.0
      %712 = vmatpush1.msra.mxu0 0.0
      %713 = vmatprep.subr.mxu0 0.0
      %714 = vmatpush1.msra.mxu0 0.0
      %715 = vmatprep.subr.mxu0 0.0
      %716 = vmatpush1.msra.mxu0 0.0
      %717 = vmatprep.subr.mxu0 0.0
      %718 = vmatpush1.msra.mxu0 0.0
      %719 = vmatprep.subr.mxu0 0.0
      %720 = vmatpush1.msra.mxu0 0.0
      %721 = vmatprep.subr.mxu0 0.0
      %722 = vmatpush1.msra.mxu0 0.0
      %723 = vmatprep.subr.mxu0 0.0
      %724 = vmatpush1.msra.mxu0 0.0
      %725 = vmatprep.subr.mxu0 0.0
      %726 = vmatpush1.msra.mxu0 0.0
      %727 = vmatprep.subr.mxu0 0.0
      %728 = vmatpush1.msra.mxu0 0.0
      %729 = vmatprep.subr.mxu0 0.0
      %730 = vmatpush1.msra.mxu0 0.0
      %731 = vmatprep.subr.mxu0 0.0
      %732 = vmatpush1.msra.mxu0 0.0
      %733 = vmatprep.subr.mxu0 0.0
      %734 = vmatpush1.msra.mxu0 0.0
      %735 = vmatprep.subr.mxu0 0.0
      %736 = vmatpush1.msra.mxu0 0.0
      %737 = vmatprep.subr.mxu0 0.0
      %738 = vmatpush1.msra.mxu0 0.0
      %739 = vmatprep.subr.mxu0 0.0
      %740 = vmatpush1.msra.mxu0 0.0
      %741 = vmatprep.subr.mxu0 0.0
      %742 = vmatpush1.msra.mxu0 0.0
      %743 = vmatprep.mubr.f32.mxu0 0.0
      %744 = vmatmul.mubr.f32.gmra.mrb[0].mxu0 %v668
      %v745 = vpop.f32.mrb[0].mxu0
      %v746 = vadd.f32 %v649, %v745
      %v747 = vpop.f32.mrb[0].mxu0
      %748 = vmatprep.mubr.f32.mxu0 0.0
      %749 = vmatmul.mubr.f32.gmra.mrb[0].mxu0 %v671
      %v750 = vpop.f32.mrb[0].mxu0
      %v751 = vadd.f32 %v654, %v750
      %v752 = vpop.f32.mrb[0].mxu0
      %753 = vmatprep.mubr.f32.mxu0 0.0
      %754 = vmatmul.mubr.f32.gmra.mrb[0].mxu0 %v674
      %v755 = vpop.f32.mrb[0].mxu0
      %v756 = vadd.f32 %v659, %v755
      %v757 = vpop.f32.mrb[0].mxu0
      %758 = vmatprep.mubr.f32.mxu0 0.0
      %759 = vmatmul.mubr.f32.gmra.mrb[0].mxu0 %v677
      %v760 = vpop.f32.mrb[0].mxu0
      %v761 = vadd.f32 %v664, %v760
      %v762 = vpop.f32.mrb[0].mxu0
      %763 = vdwg.mxu0
      %v764 = vmax.f32 %v746, 0.0
      %v765 = vmax.f32 %v751, 0.0
      %v766 = vmax.f32 %v756, 0.0
      %v767 = vmax.f32 %v761, 0.0
      %772 = vrot.lane.b32.xlu0 %v764, 127
      %v773 = vpop.permute.xlu0 %772
      %774 = vrot.lane.b32.xlu0 %v765, 127
      %v775 = vpop.permute.xlu0 %774
      %776 = vrot.lane.b32.xlu0 %v766, 127
      %v777 = vpop.permute.xlu0 %776
      %778 = vrot.lane.b32.xlu0 %v767, 127
      %v779 = vpop.permute.xlu0 %778
      %784 = vrot.lane.b32.xlu0 %v764, 121
      %v785 = vpop.permute.xlu0 %784
      %786 = vrot.lane.b32.xlu0 %v765, 121
      %v787 = vpop.permute.xlu0 %786
      %788 = vrot.lane.b32.xlu0 %v766, 121
      %v789 = vpop.permute.xlu0 %788
      %790 = vrot.lane.b32.xlu0 %v767, 121
      %v791 = vpop.permute.xlu0 %790
      %796 = vrot.lane.b32.xlu0 %v764, 120
      %v797 = vpop.permute.xlu0 %796
      %798 = vrot.lane.b32.xlu0 %v765, 120
      %v799 = vpop.permute.xlu0 %798
      %800 = vrot.lane.b32.xlu0 %v766, 120
      %v801 = vpop.permute.xlu0 %800
      %802 = vrot.lane.b32.xlu0 %v767, 120
      %v803 = vpop.permute.xlu0 %802
      %809 = vset.pattern.permute.xlu0 0
      %810 = vperm.xlu0 %809, %v334
      %v811 = vpop.permute.xlu0 %810
      %814 = vset.pattern.permute.xlu0 0
      %815 = vperm.xlu0 %814, %v335
      %v816 = vpop.permute.xlu0 %815
      %819 = vset.pattern.permute.xlu0 0
      %820 = vperm.xlu0 %819, %v336
      %v821 = vpop.permute.xlu0 %820
      %824 = vset.pattern.permute.xlu0 0
      %825 = vperm.xlu0 %824, %v337
      %v826 = vpop.permute.xlu0 %825
      %829 = vset.pattern.permute.xlu0 0
      %830 = vperm.xlu0 %829, %v338
      %v831 = vpop.permute.xlu0 %830
      %834 = vset.pattern.permute.xlu0 0
      %835 = vperm.xlu0 %834, %v339
      %v836 = vpop.permute.xlu0 %835
      %839 = vset.pattern.permute.xlu0 0
      %840 = vperm.xlu0 %839, %v340
      %v841 = vpop.permute.xlu0 %840
      %844 = vset.pattern.permute.xlu0 0
      %845 = vperm.xlu0 %844, %v341
      %v846 = vpop.permute.xlu0 %845
      %848 = vmatprep.subr.mxu0 0.0
      %849 = vmatpush1.msra.mxu0 %v764
      %850 = vmatprep.subr.mxu0 0.0
      %851 = vmatpush1.msra.mxu0 %v765
      %852 = vmatprep.subr.mxu0 0.0
      %853 = vmatpush1.msra.mxu0 %v766
      %854 = vmatprep.subr.mxu0 0.0
      %855 = vmatpush1.msra.mxu0 %v767
      %856 = vmatprep.subr.mxu0 0.0
      %857 = vmatpush1.msra.mxu0 %v773
      %858 = vmatprep.subr.mxu0 0.0
      %859 = vmatpush1.msra.mxu0 %v775
      %860 = vmatprep.subr.mxu0 0.0
      %861 = vmatpush1.msra.mxu0 %v777
      %862 = vmatprep.subr.mxu0 0.0
      %863 = vmatpush1.msra.mxu0 %v779
      %864 = vmatprep.subr.mxu0 0.0
      %865 = vmatpush1.msra.mxu0 %v785
      %866 = vmatprep.subr.mxu0 0.0
      %867 = vmatpush1.msra.mxu0 %v787
      %868 = vmatprep.subr.mxu0 0.0
      %869 = vmatpush1.msra.mxu0 %v789
      %870 = vmatprep.subr.mxu0 0.0
      %871 = vmatpush1.msra.mxu0 %v791
      %872 = vmatprep.subr.mxu0 0.0
      %873 = vmatpush1.msra.mxu0 %v797
      %874 = vmatprep.subr.mxu0 0.0
      %875 = vmatpush1.msra.mxu0 %v799
      %876 = vmatprep.subr.mxu0 0.0
      %877 = vmatpush1.msra.mxu0 %v801
      %878 = vmatprep.subr.mxu0 0.0
      %879 = vmatpush1.msra.mxu0 %v803
      %880 = vmatprep.subr.mxu0 0.0
      %881 = vmatpush1.msra.mxu0 0.0
      %882 = vmatprep.subr.mxu0 0.0
      %883 = vmatpush1.msra.mxu0 0.0
      %884 = vmatprep.subr.mxu0 0.0
      %885 = vmatpush1.msra.mxu0 0.0
      %886 = vmatprep.subr.mxu0 0.0
      %887 = vmatpush1.msra.mxu0 0.0
      %888 = vmatprep.subr.mxu0 0.0
      %889 = vmatpush1.msra.mxu0 0.0
      %890 = vmatprep.subr.mxu0 0.0
      %891 = vmatpush1.msra.mxu0 0.0
      %892 = vmatprep.subr.mxu0 0.0
      %893 = vmatpush1.msra.mxu0 0.0
      %894 = vmatprep.subr.mxu0 0.0
      %895 = vmatpush1.msra.mxu0 0.0
      %896 = vmatprep.subr.mxu0 0.0
      %897 = vmatpush1.msra.mxu0 0.0
      %898 = vmatprep.subr.mxu0 0.0
      %899 = vmatpush1.msra.mxu0 0.0
      %900 = vmatprep.subr.mxu0 0.0
      %901 = vmatpush1.msra.mxu0 0.0
      %902 = vmatprep.subr.mxu0 0.0
      %903 = vmatpush1.msra.mxu0 0.0
      %904 = vmatprep.subr.mxu0 0.0
      %905 = vmatpush1.msra.mxu0 0.0
      %906 = vmatprep.subr.mxu0 0.0
      %907 = vmatpush1.msra.mxu0 0.0
      %908 = vmatprep.subr.mxu0 0.0
      %909 = vmatpush1.msra.mxu0 0.0
      %910 = vmatprep.subr.mxu0 0.0
      %911 = vmatpush1.msra.mxu0 0.0
      %912 = vmatprep.mubr.f32.mxu0 0.0
      %913 = vmatmul.mubr.f32.gmra.mrb[0].mxu0 %v326
      %v914 = vpop.f32.mrb[0].mxu0
      %v915 = vadd.f32 %v811, %v914
      %v916 = vpop.f32.mrb[0].mxu0
      %917 = vmatprep.mubr.f32.mxu0 0.0
      %918 = vmatmul.mubr.f32.gmra.mrb[0].mxu0 %v327
      %v919 = vpop.f32.mrb[0].mxu0
      %v920 = vadd.f32 %v816, %v919
      %v921 = vpop.f32.mrb[0].mxu0
      %922 = vmatprep.mubr.f32.mxu0 0.0
      %923 = vmatmul.mubr.f32.gmra.mrb[0].mxu0 %v328
      %v924 = vpop.f32.mrb[0].mxu0
      %v925 = vadd.f32 %v821, %v924
      %v926 = vpop.f32.mrb[0].mxu0
      %927 = vmatprep.mubr.f32.mxu0 0.0
      %928 = vmatmul.mubr.f32.gmra.mrb[0].mxu0 %v329
      %v929 = vpop.f32.mrb[0].mxu0
      %v930 = vadd.f32 %v826, %v929
      %v931 = vpop.f32.mrb[0].mxu0
      %932 = vmatprep.mubr.f32.mxu0 0.0
      %933 = vmatmul.mubr.f32.gmra.mrb[0].mxu0 %v330
      %v934 = vpop.f32.mrb[0].mxu0
      %v935 = vadd.f32 %v831, %v934
      %v936 = vpop.f32.mrb[0].mxu0
      %937 = vmatprep.mubr.f32.mxu0 0.0
      %938 = vmatmul.mubr.f32.gmra.mrb[0].mxu0 %v331
      %v939 = vpop.f32.mrb[0].mxu0
      %v940 = vadd.f32 %v836, %v939
      %v941 = vpop.f32.mrb[0].mxu0
      %942 = vmatprep.mubr.f32.mxu0 0.0
      %943 = vmatmul.mubr.f32.gmra.mrb[0].mxu0 %v332
      %v944 = vpop.f32.mrb[0].mxu0
      %v945 = vadd.f32 %v841, %v944
      %v946 = vpop.f32.mrb[0].mxu0
      %947 = vmatprep.mubr.f32.mxu0 0.0
      %948 = vmatmul.mubr.f32.gmra.mrb[0].mxu0 %v333
      %v949 = vpop.f32.mrb[0].mxu0
      %v950 = vadd.f32 %v846, %v949
      %v951 = vpop.f32.mrb[0].mxu0
      %952 = vdwg.mxu0
      %v953 = vmax.f32 %v915, 0.0
      %v954 = vmax.f32 %v920, 0.0
      %v955 = vmax.f32 %v925, 0.0
      %v956 = vmax.f32 %v930, 0.0
      %v957 = vmax.f32 %v935, 0.0
      %v958 = vmax.f32 %v940, 0.0
      %v959 = vmax.f32 %v945, 0.0
      %v960 = vmax.f32 %v950, 0.0
      %vm961 = vcmask 39936
      %962 = vst.msk [vmem:[%s312] sm:$0xff] %vm961, %v953
      %963 = vst.msk [vmem:[%s312 + $0x8] sm:$0xff] %vm961, %v954
      %964 = vst.msk [vmem:[%s312 + $0x10] sm:$0xff] %vm961, %v955
      %965 = vst.msk [vmem:[%s312 + $0x18] sm:$0xff] %vm961, %v956
      %966 = vst.msk [vmem:[%s312 + $0x20] sm:$0xff] %vm961, %v957
      %967 = vst.msk [vmem:[%s312 + $0x28] sm:$0xff] %vm961, %v958
      %968 = vst.msk [vmem:[%s312 + $0x30] sm:$0xff] %vm961, %v959
      %969 = vst.msk [vmem:[%s312 + $0x38] sm:$0xff] %vm961, %v960
      %978 = vrot.lane.b32.xlu0 %v953, 126
      %v979 = vpop.permute.xlu0 %978
      %980 = vrot.lane.b32.xlu0 %v954, 126
      %v981 = vpop.permute.xlu0 %980
      %982 = vrot.lane.b32.xlu0 %v955, 126
      %v983 = vpop.permute.xlu0 %982
      %984 = vrot.lane.b32.xlu0 %v956, 126
      %v985 = vpop.permute.xlu0 %984
      %986 = vrot.lane.b32.xlu0 %v957, 126
      %v987 = vpop.permute.xlu0 %986
      %988 = vrot.lane.b32.xlu0 %v958, 126
      %v989 = vpop.permute.xlu0 %988
      %990 = vrot.lane.b32.xlu0 %v959, 126
      %v991 = vpop.permute.xlu0 %990
      %992 = vrot.lane.b32.xlu0 %v960, 126
      %v993 = vpop.permute.xlu0 %992
      %vm1002 = vcmask 80936
      %1003 = vst.msk [vmem:[%s312] sm:$0xff] %vm1002, %v979
      %1004 = vst.msk [vmem:[%s312 + $0x8] sm:$0xff] %vm1002, %v981
      %1005 = vst.msk [vmem:[%s312 + $0x10] sm:$0xff] %vm1002, %v983
      %1006 = vst.msk [vmem:[%s312 + $0x18] sm:$0xff] %vm1002, %v985
      %1007 = vst.msk [vmem:[%s312 + $0x20] sm:$0xff] %vm1002, %v987
      %1008 = vst.msk [vmem:[%s312 + $0x28] sm:$0xff] %vm1002, %v989
      %1009 = vst.msk [vmem:[%s312 + $0x30] sm:$0xff] %vm1002, %v991
      %1010 = vst.msk [vmem:[%s312 + $0x38] sm:$0xff] %vm1002, %v993
      %1011 = vrot.lane.b32.xlu0 %v953, 124
      %v1012 = vpop.permute.xlu0 %1011
      %1013 = vrot.lane.b32.xlu0 %v954, 124
      %v1014 = vpop.permute.xlu0 %1013
      %1015 = vrot.lane.b32.xlu0 %v955, 124
      %v1016 = vpop.permute.xlu0 %1015
      %1017 = vrot.lane.b32.xlu0 %v956, 124
      %v1018 = vpop.permute.xlu0 %1017
      %1019 = vrot.lane.b32.xlu0 %v957, 124
      %v1020 = vpop.permute.xlu0 %1019
      %1021 = vrot.lane.b32.xlu0 %v958, 124
      %v1022 = vpop.permute.xlu0 %1021
      %1023 = vrot.lane.b32.xlu0 %v959, 124
      %v1024 = vpop.permute.xlu0 %1023
      %1025 = vrot.lane.b32.xlu0 %v960, 124
      %v1026 = vpop.permute.xlu0 %1025
      %vm1035 = vcmask 121936
      %1036 = vst.msk [vmem:[%s312] sm:$0xff] %vm1035, %v1012
      %1037 = vst.msk [vmem:[%s312 + $0x8] sm:$0xff] %vm1035, %v1014
      %1038 = vst.msk [vmem:[%s312 + $0x10] sm:$0xff] %vm1035, %v1016
      %1039 = vst.msk [vmem:[%s312 + $0x18] sm:$0xff] %vm1035, %v1018
      %1040 = vst.msk [vmem:[%s312 + $0x20] sm:$0xff] %vm1035, %v1020
      %1041 = vst.msk [vmem:[%s312 + $0x28] sm:$0xff] %vm1035, %v1022
      %1042 = vst.msk [vmem:[%s312 + $0x30] sm:$0xff] %vm1035, %v1024
      %1043 = vst.msk [vmem:[%s312 + $0x38] sm:$0xff] %vm1035, %v1026
      %1044 = vrot.lane.b32.xlu0 %v953, 122
      %v1045 = vpop.permute.xlu0 %1044
      %1046 = vrot.lane.b32.xlu0 %v954, 122
      %v1047 = vpop.permute.xlu0 %1046
      %1048 = vrot.lane.b32.xlu0 %v955, 122
      %v1049 = vpop.permute.xlu0 %1048
      %1050 = vrot.lane.b32.xlu0 %v956, 122
      %v1051 = vpop.permute.xlu0 %1050
      %1052 = vrot.lane.b32.xlu0 %v957, 122
      %v1053 = vpop.permute.xlu0 %1052
      %1054 = vrot.lane.b32.xlu0 %v958, 122
      %v1055 = vpop.permute.xlu0 %1054
      %1056 = vrot.lane.b32.xlu0 %v959, 122
      %v1057 = vpop.permute.xlu0 %1056
      %1058 = vrot.lane.b32.xlu0 %v960, 122
      %v1059 = vpop.permute.xlu0 %1058
      %vm1068 = vcmask 162936
      %1069 = vst.msk [vmem:[%s312] sm:$0xff] %vm1068, %v1045
      %1070 = vst.msk [vmem:[%s312 + $0x8] sm:$0xff] %vm1068, %v1047
      %1071 = vst.msk [vmem:[%s312 + $0x10] sm:$0xff] %vm1068, %v1049
      %1072 = vst.msk [vmem:[%s312 + $0x18] sm:$0xff] %vm1068, %v1051
      %1073 = vst.msk [vmem:[%s312 + $0x20] sm:$0xff] %vm1068, %v1053
      %1074 = vst.msk [vmem:[%s312 + $0x28] sm:$0xff] %vm1068, %v1055
      %1075 = vst.msk [vmem:[%s312 + $0x30] sm:$0xff] %vm1068, %v1057
      %1076 = vst.msk [vmem:[%s312 + $0x38] sm:$0xff] %vm1068, %v1059
      %1077 = vrot.lane.b32.xlu0 %v953, 120
      %v1078 = vpop.permute.xlu0 %1077
      %1079 = vrot.lane.b32.xlu0 %v954, 120
      %v1080 = vpop.permute.xlu0 %1079
      %1081 = vrot.lane.b32.xlu0 %v955, 120
      %v1082 = vpop.permute.xlu0 %1081
      %1083 = vrot.lane.b32.xlu0 %v956, 120
      %v1084 = vpop.permute.xlu0 %1083
      %1085 = vrot.lane.b32.xlu0 %v957, 120
      %v1086 = vpop.permute.xlu0 %1085
      %1087 = vrot.lane.b32.xlu0 %v958, 120
      %v1088 = vpop.permute.xlu0 %1087
      %1089 = vrot.lane.b32.xlu0 %v959, 120
      %v1090 = vpop.permute.xlu0 %1089
      %1091 = vrot.lane.b32.xlu0 %v960, 120
      %v1092 = vpop.permute.xlu0 %1091
      %vm1101 = vcmask 203936
      %1102 = vst.msk [vmem:[%s312] sm:$0xff] %vm1101, %v1078
      %1103 = vst.msk [vmem:[%s312 + $0x8] sm:$0xff] %vm1101, %v1080
      %1104 = vst.msk [vmem:[%s312 + $0x10] sm:$0xff] %vm1101, %v1082
      %1105 = vst.msk [vmem:[%s312 + $0x18] sm:$0xff] %vm1101, %v1084
      %1106 = vst.msk [vmem:[%s312 + $0x20] sm:$0xff] %vm1101, %v1086
      %1107 = vst.msk [vmem:[%s312 + $0x28] sm:$0xff] %vm1101, %v1088
      %1108 = vst.msk [vmem:[%s312 + $0x30] sm:$0xff] %vm1101, %v1090
      %1109 = vst.msk [vmem:[%s312 + $0x38] sm:$0xff] %vm1101, %v1092
      %s1110 = scalar_lea.vmem %s305, 16
      %v1111 = vld [vmem:[%s1110] sm:$0xff]
      %v1112 = vld [vmem:[%s1110 + $0x8] sm:$0xff]
      %1115 = vrot.lane.b32.xlu0 %v1111, 127
      %v1116 = vpop.permute.xlu0 %1115
      %1117 = vrot.lane.b32.xlu0 %v1112, 127
      %v1118 = vpop.permute.xlu0 %1117
      %v1119 = vsel %vm378, %v1116, %v1118
      %1122 = vrot.lane.b32.xlu0 %v1111, 112
      %v1123 = vpop.permute.xlu0 %1122
      %1124 = vrot.lane.b32.xlu0 %v1112, 112
      %v1125 = vpop.permute.xlu0 %1124
      %v1126 = vsel %vm386, %v1123, %v1125
      %1129 = vrot.lane.b32.xlu0 %v1111, 111
      %v1130 = vpop.permute.xlu0 %1129
      %1131 = vrot.lane.b32.xlu0 %v1112, 111
      %v1132 = vpop.permute.xlu0 %1131
      %v1133 = vsel %vm394, %v1130, %v1132
      %1136 = vmatprep.subr.mxu0 %v1112
      %1137 = vmatpush1.msra.mxu0 %v1111
      %1138 = vmatprep.subr.mxu0 %v1118
      %1139 = vmatpush1.msra.mxu0 %v1119
      %1140 = vmatprep.subr.mxu0 %v1125
      %1141 = vmatpush1.msra.mxu0 %v1126
      %1142 = vmatprep.subr.mxu0 %v1132
      %1143 = vmatpush1.msra.mxu0 %v1133
      %1144 = vmatprep.subr.mxu0 0.0
      %1145 = vmatpush1.msra.mxu0 0.0
      %1146 = vmatprep.subr.mxu0 0.0
      %1147 = vmatpush1.msra.mxu0 0.0
      %1148 = vmatprep.subr.mxu0 0.0
      %1149 = vmatpush1.msra.mxu0 0.0
      %1150 = vmatprep.subr.mxu0 0.0
      %1151 = vmatpush1.msra.mxu0 0.0
      %1152 = vmatprep.subr.mxu0 0.0
      %1153 = vmatpush1.msra.mxu0 0.0
      %1154 = vmatprep.subr.mxu0 0.0
      %1155 = vmatpush1.msra.mxu0 0.0
      %1156 = vmatprep.subr.mxu0 0.0
      %1157 = vmatpush1.msra.mxu0 0.0
      %1158 = vmatprep.subr.mxu0 0.0
      %1159 = vmatpush1.msra.mxu0 0.0
      %1160 = vmatprep.subr.mxu0 0.0
      %1161 = vmatpush1.msra.mxu0 0.0
      %1162 = vmatprep.subr.mxu0 0.0
      %1163 = vmatpush1.msra.mxu0 0.0
      %1164 = vmatprep.subr.mxu0 0.0
      %1165 = vmatpush1.msra.mxu0 0.0
      %1166 = vmatprep.subr.mxu0 0.0
      %1167 = vmatpush1.msra.mxu0 0.0
      %1168 = vmatprep.subr.mxu0 0.0
      %1169 = vmatpush1.msra.mxu0 0.0
      %1170 = vmatprep.subr.mxu0 0.0
      %1171 = vmatpush1.msra.mxu0 0.0
      %1172 = vmatprep.subr.mxu0 0.0
      %1173 = vmatpush1.msra.mxu0 0.0
      %1174 = vmatprep.subr.mxu0 0.0
      %1175 = vmatpush1.msra.mxu0 0.0
      %1176 = vmatprep.subr.mxu0 0.0
      %1177 = vmatpush1.msra.mxu0 0.0
      %1178 = vmatprep.subr.mxu0 0.0
      %1179 = vmatpush1.msra.mxu0 0.0
      %1180 = vmatprep.subr.mxu0 0.0
      %1181 = vmatpush1.msra.mxu0 0.0
      %1182 = vmatprep.subr.mxu0 0.0
      %1183 = vmatpush1.msra.mxu0 0.0
      %1184 = vmatprep.subr.mxu0 0.0
      %1185 = vmatpush1.msra.mxu0 0.0
      %1186 = vmatprep.subr.mxu0 0.0
      %1187 = vmatpush1.msra.mxu0 0.0
      %1188 = vmatprep.subr.mxu0 0.0
      %1189 = vmatpush1.msra.mxu0 0.0
      %1190 = vmatprep.subr.mxu0 0.0
      %1191 = vmatpush1.msra.mxu0 0.0
      %1192 = vmatprep.subr.mxu0 0.0
      %1193 = vmatpush1.msra.mxu0 0.0
      %1194 = vmatprep.subr.mxu0 0.0
      %1195 = vmatpush1.msra.mxu0 0.0
      %1196 = vmatprep.subr.mxu0 0.0
      %1197 = vmatpush1.msra.mxu0 0.0
      %1198 = vmatprep.subr.mxu0 0.0
      %1199 = vmatpush1.msra.mxu0 0.0
      %1200 = vmatprep.mubr.f32.mxu0 0.0
      %1201 = vmatmul.mubr.f32.gmra.mrb[0].mxu0 %v410
      %v1202 = vpop.f32.mrb[0].mxu0
      %v1203 = vadd.f32 %v401, %v1202
      %v1204 = vpop.f32.mrb[0].mxu0
      %v1205 = vadd.f32 %v401, %v1204
      %1206 = vmatprep.mubr.f32.mxu0 0.0
      %1207 = vmatmul.mubr.f32.gmra.mrb[0].mxu0 %v413
      %v1208 = vpop.f32.mrb[0].mxu0
      %v1209 = vadd.f32 %v406, %v1208
      %v1210 = vpop.f32.mrb[0].mxu0
      %v1211 = vadd.f32 %v406, %v1210
      %1212 = vdwg.mxu0
      %v1213 = vmax.f32 %v1203, 0.0
      %v1214 = vmax.f32 %v1205, 0.0
      %v1215 = vmax.f32 %v1209, 0.0
      %v1216 = vmax.f32 %v1211, 0.0
      %1221 = vrot.lane.b32.xlu0 %v1213, 127
      %v1222 = vpop.permute.xlu0 %1221
      %1223 = vrot.lane.b32.xlu0 %v1214, 127
      %v1224 = vpop.permute.xlu0 %1223
      %1225 = vrot.lane.b32.xlu0 %v1215, 127
      %v1226 = vpop.permute.xlu0 %1225
      %1227 = vrot.lane.b32.xlu0 %v1216, 127
      %v1228 = vpop.permute.xlu0 %1227
      %v1229 = vsel %vm378, %v1222, %v1224
      %v1230 = vsel %vm378, %v1226, %v1228
      %v1235 = vmax.f32 %v1213, %v1229
      %v1236 = vmax.f32 %v1214, %v1224
      %v1237 = vmax.f32 %v1215, %v1230
      %v1238 = vmax.f32 %v1216, %v1228
      %1243 = vrot.lane.b32.xlu0 %v1235, 112
      %v1244 = vpop.permute.xlu0 %1243
      %1245 = vrot.lane.b32.xlu0 %v1236, 112
      %v1246 = vpop.permute.xlu0 %1245
      %1247 = vrot.lane.b32.xlu0 %v1237, 112
      %v1248 = vpop.permute.xlu0 %1247
      %1249 = vrot.lane.b32.xlu0 %v1238, 112
      %v1250 = vpop.permute.xlu0 %1249
      %v1251 = vsel %vm386, %v1244, %v1246
      %v1252 = vsel %vm386, %v1248, %v1250
      %v1257 = vmax.f32 %v1235, %v1251
      %v1258 = vmax.f32 %v1236, %v1246
      %v1259 = vmax.f32 %v1237, %v1252
      %v1260 = vmax.f32 %v1238, %v1250
      %v1262 = vsel %vm540, %v1258, 0
      %v1265 = vsel %vm540, %v1260, 0
      %1267 = vmatprep.subr.mxu0 0.0
      %1268 = vmatpush1.msra.mxu0 %v342
      %1269 = vmatprep.subr.mxu0 0.0
      %1270 = vmatpush1.msra.mxu0 %v343
      %1271 = vmatprep.subr.mxu0 0.0
      %1272 = vmatpush1.msra.mxu0 %v344
      %1273 = vmatprep.subr.mxu0 0.0
      %1274 = vmatpush1.msra.mxu0 %v345
      %1275 = vmatprep.subr.mxu0 0.0
      %1276 = vmatpush1.msra.mxu0 %v346
      %1277 = vmatprep.subr.mxu0 0.0
      %1278 = vmatpush1.msra.mxu0 %v347
      %1279 = vmatprep.subr.mxu0 0.0
      %1280 = vmatpush1.msra.mxu0 %v348
      %1281 = vmatprep.subr.mxu0 0.0
      %1282 = vmatpush1.msra.mxu0 %v349
      %1283 = vmatprep.subr.mxu0 0.0
      %1284 = vmatpush1.msra.mxu0 %v350
      %1285 = vmatprep.subr.mxu0 0.0
      %1286 = vmatpush1.msra.mxu0 %v351
      %1287 = vmatprep.subr.mxu0 0.0
      %1288 = vmatpush1.msra.mxu0 %v352
      %1289 = vmatprep.subr.mxu0 0.0
      %1290 = vmatpush1.msra.mxu0 %v353
      %1291 = vmatprep.subr.mxu0 0.0
      %1292 = vmatpush1.msra.mxu0 %v354
      %1293 = vmatprep.subr.mxu0 0.0
      %1294 = vmatpush1.msra.mxu0 %v355
      %1295 = vmatprep.subr.mxu0 0.0
      %1296 = vmatpush1.msra.mxu0 %v356
      %1297 = vmatprep.subr.mxu0 0.0
      %1298 = vmatpush1.msra.mxu0 %v357
      %1299 = vmatprep.subr.mxu0 0.0
      %1300 = vmatpush1.msra.mxu0 %v358
      %1301 = vmatprep.subr.mxu0 0.0
      %1302 = vmatpush1.msra.mxu0 %v359
      %1303 = vmatprep.subr.mxu0 0.0
      %1304 = vmatpush1.msra.mxu0 %v360
      %1305 = vmatprep.subr.mxu0 0.0
      %1306 = vmatpush1.msra.mxu0 %v361
      %1307 = vmatprep.subr.mxu0 0.0
      %1308 = vmatpush1.msra.mxu0 %v362
      %1309 = vmatprep.subr.mxu0 0.0
      %1310 = vmatpush1.msra.mxu0 %v363
      %1311 = vmatprep.subr.mxu0 0.0
      %1312 = vmatpush1.msra.mxu0 %v364
      %1313 = vmatprep.subr.mxu0 0.0
      %1314 = vmatpush1.msra.mxu0 %v365
      %1315 = vmatprep.subr.mxu0 0.0
      %1316 = vmatpush1.msra.mxu0 %v366
      %1317 = vmatprep.subr.mxu0 0.0
      %1318 = vmatpush1.msra.mxu0 %v367
      %1319 = vmatprep.subr.mxu0 0.0
      %1320 = vmatpush1.msra.mxu0 %v368
      %1321 = vmatprep.subr.mxu0 0.0
      %1322 = vmatpush1.msra.mxu0 %v549
      %1323 = vmatprep.subr.mxu0 0.0
      %1324 = vmatpush1.msra.mxu0 0.0
      %1325 = vmatprep.subr.mxu0 0.0
      %1326 = vmatpush1.msra.mxu0 0.0
      %1327 = vmatprep.subr.mxu0 0.0
      %1328 = vmatpush1.msra.mxu0 0.0
      %1329 = vmatprep.subr.mxu0 0.0
      %1330 = vmatpush1.msra.mxu0 0.0
      %1331 = vmatprep.mubr.f32.mxu0 %v1262
      %1332 = vmatmul.mubr.f32.gmra.mrb[0].mxu0 %v1257
      %v1333 = vpop.f32.mrb[0].mxu0
      %v1334 = vadd.f32 0.0, %v1333
      %v1335 = vpop.f32.mrb[0].mxu0
      %1336 = vmatprep.mubr.f32.mxu0 %v1265
      %1337 = vmatmul.mubr.f32.gmra.mrb[0].mxu0 %v1259
      %v1338 = vpop.f32.mrb[0].mxu0
      %v1339 = vadd.f32 0.0, %v1338
      %v1340 = vpop.f32.mrb[0].mxu0
      %1341 = vdwg.mxu0
      %1344 = vrot.lane.b32.xlu0 %v1334, 127
      %v1345 = vpop.permute.xlu0 %1344
      %1346 = vrot.lane.b32.xlu0 %v1339, 127
      %v1347 = vpop.permute.xlu0 %1346
      %1350 = vrot.lane.b32.xlu0 %v1334, 121
      %v1351 = vpop.permute.xlu0 %1350
      %1352 = vrot.lane.b32.xlu0 %v1339, 121
      %v1353 = vpop.permute.xlu0 %1352
      %1356 = vrot.lane.b32.xlu0 %v1334, 120
      %v1357 = vpop.permute.xlu0 %1356
      %1358 = vrot.lane.b32.xlu0 %v1339, 120
      %v1359 = vpop.permute.xlu0 %1358
      %1362 = vmatprep.subr.mxu0 0.0
      %1363 = vmatpush1.msra.mxu0 %v1334
      %1364 = vmatprep.subr.mxu0 0.0
      %1365 = vmatpush1.msra.mxu0 %v1339
      %1366 = vmatprep.subr.mxu0 0.0
      %1367 = vmatpush1.msra.mxu0 %v1345
      %1368 = vmatprep.subr.mxu0 0.0
      %1369 = vmatpush1.msra.mxu0 %v1347
      %1370 = vmatprep.subr.mxu0 0.0
      %1371 = vmatpush1.msra.mxu0 %v1351
      %1372 = vmatprep.subr.mxu0 0.0
      %1373 = vmatpush1.msra.mxu0 %v1353
      %1374 = vmatprep.subr.mxu0 0.0
      %1375 = vmatpush1.msra.mxu0 %v1357
      %1376 = vmatprep.subr.mxu0 0.0
      %1377 = vmatpush1.msra.mxu0 %v1359
      %1378 = vmatprep.subr.mxu0 0.0
      %1379 = vmatpush1.msra.mxu0 0.0
      %1380 = vmatprep.subr.mxu0 0.0
      %1381 = vmatpush1.msra.mxu0 0.0
      %1382 = vmatprep.subr.mxu0 0.0
      %1383 = vmatpush1.msra.mxu0 0.0
      %1384 = vmatprep.subr.mxu0 0.0
      %1385 = vmatpush1.msra.mxu0 0.0
      %1386 = vmatprep.subr.mxu0 0.0
      %1387 = vmatpush1.msra.mxu0 0.0
      %1388 = vmatprep.subr.mxu0 0.0
      %1389 = vmatpush1.msra.mxu0 0.0
      %1390 = vmatprep.subr.mxu0 0.0
      %1391 = vmatpush1.msra.mxu0 0.0
      %1392 = vmatprep.subr.mxu0 0.0
      %1393 = vmatpush1.msra.mxu0 0.0
      %1394 = vmatprep.subr.mxu0 0.0
      %1395 = vmatpush1.msra.mxu0 0.0
      %1396 = vmatprep.subr.mxu0 0.0
      %1397 = vmatpush1.msra.mxu0 0.0
      %1398 = vmatprep.subr.mxu0 0.0
      %1399 = vmatpush1.msra.mxu0 0.0
      %1400 = vmatprep.subr.mxu0 0.0
      %1401 = vmatpush1.msra.mxu0 0.0
      %1402 = vmatprep.subr.mxu0 0.0
      %1403 = vmatpush1.msra.mxu0 0.0
      %1404 = vmatprep.subr.mxu0 0.0
      %1405 = vmatpush1.msra.mxu0 0.0
      %1406 = vmatprep.subr.mxu0 0.0
      %1407 = vmatpush1.msra.mxu0 0.0
      %1408 = vmatprep.subr.mxu0 0.0
      %1409 = vmatpush1.msra.mxu0 0.0
      %1410 = vmatprep.subr.mxu0 0.0
      %1411 = vmatpush1.msra.mxu0 0.0
      %1412 = vmatprep.subr.mxu0 0.0
      %1413 = vmatpush1.msra.mxu0 0.0
      %1414 = vmatprep.subr.mxu0 0.0
      %1415 = vmatpush1.msra.mxu0 0.0
      %1416 = vmatprep.subr.mxu0 0.0
      %1417 = vmatpush1.msra.mxu0 0.0
      %1418 = vmatprep.subr.mxu0 0.0
      %1419 = vmatpush1.msra.mxu0 0.0
      %1420 = vmatprep.subr.mxu0 0.0
      %1421 = vmatpush1.msra.mxu0 0.0
      %1422 = vmatprep.subr.mxu0 0.0
      %1423 = vmatpush1.msra.mxu0 0.0
      %1424 = vmatprep.subr.mxu0 0.0
      %1425 = vmatpush1.msra.mxu0 0.0
      %1426 = vmatprep.mubr.f32.mxu0 0.0
      %1427 = vmatmul.mubr.f32.gmra.mrb[0].mxu0 %v668
      %v1428 = vpop.f32.mrb[0].mxu0
      %v1429 = vadd.f32 %v649, %v1428
      %v1430 = vpop.f32.mrb[0].mxu0
      %1431 = vmatprep.mubr.f32.mxu0 0.0
      %1432 = vmatmul.mubr.f32.gmra.mrb[0].mxu0 %v671
      %v1433 = vpop.f32.mrb[0].mxu0
      %v1434 = vadd.f32 %v654, %v1433
      %v1435 = vpop.f32.mrb[0].mxu0
      %1436 = vmatprep.mubr.f32.mxu0 0.0
      %1437 = vmatmul.mubr.f32.gmra.mrb[0].mxu0 %v674
      %v1438 = vpop.f32.mrb[0].mxu0
      %v1439 = vadd.f32 %v659, %v1438
      %v1440 = vpop.f32.mrb[0].mxu0
      %1441 = vmatprep.mubr.f32.mxu0 0.0
      %1442 = vmatmul.mubr.f32.gmra.mrb[0].mxu0 %v677
      %v1443 = vpop.f32.mrb[0].mxu0
      %v1444 = vadd.f32 %v664, %v1443
      %v1445 = vpop.f32.mrb[0].mxu0
      %1446 = vdwg.mxu0
      %v1447 = vmax.f32 %v1429, 0.0
      %v1448 = vmax.f32 %v1434, 0.0
      %v1449 = vmax.f32 %v1439, 0.0
      %v1450 = vmax.f32 %v1444, 0.0
      %1455 = vrot.lane.b32.xlu0 %v1447, 127
      %v1456 = vpop.permute.xlu0 %1455
      %1457 = vrot.lane.b32.xlu0 %v1448, 127
      %v1458 = vpop.permute.xlu0 %1457
      %1459 = vrot.lane.b32.xlu0 %v1449, 127
      %v1460 = vpop.permute.xlu0 %1459
      %1461 = vrot.lane.b32.xlu0 %v1450, 127
      %v1462 = vpop.permute.xlu0 %1461
      %1467 = vrot.lane.b32.xlu0 %v1447, 121
      %v1468 = vpop.permute.xlu0 %1467
      %1469 = vrot.lane.b32.xlu0 %v1448, 121
      %v1470 = vpop.permute.xlu0 %1469
      %1471 = vrot.lane.b32.xlu0 %v1449, 121
      %v1472 = vpop.permute.xlu0 %1471
      %1473 = vrot.lane.b32.xlu0 %v1450, 121
      %v1474 = vpop.permute.xlu0 %1473
      %1479 = vrot.lane.b32.xlu0 %v1447, 120
      %v1480 = vpop.permute.xlu0 %1479
      %1481 = vrot.lane.b32.xlu0 %v1448, 120
      %v1482 = vpop.permute.xlu0 %1481
      %1483 = vrot.lane.b32.xlu0 %v1449, 120
      %v1484 = vpop.permute.xlu0 %1483
      %1485 = vrot.lane.b32.xlu0 %v1450, 120
      %v1486 = vpop.permute.xlu0 %1485
      %1491 = vmatprep.subr.mxu0 0.0
      %1492 = vmatpush1.msra.mxu0 %v1447
      %1493 = vmatprep.subr.mxu0 0.0
      %1494 = vmatpush1.msra.mxu0 %v1448
      %1495 = vmatprep.subr.mxu0 0.0
      %1496 = vmatpush1.msra.mxu0 %v1449
      %1497 = vmatprep.subr.mxu0 0.0
      %1498 = vmatpush1.msra.mxu0 %v1450
      %1499 = vmatprep.subr.mxu0 0.0
      %1500 = vmatpush1.msra.mxu0 %v1456
      %1501 = vmatprep.subr.mxu0 0.0
      %1502 = vmatpush1.msra.mxu0 %v1458
      %1503 = vmatprep.subr.mxu0 0.0
      %1504 = vmatpush1.msra.mxu0 %v1460
      %1505 = vmatprep.subr.mxu0 0.0
      %1506 = vmatpush1.msra.mxu0 %v1462
      %1507 = vmatprep.subr.mxu0 0.0
      %1508 = vmatpush1.msra.mxu0 %v1468
      %1509 = vmatprep.subr.mxu0 0.0
      %1510 = vmatpush1.msra.mxu0 %v1470
      %1511 = vmatprep.subr.mxu0 0.0
      %1512 = vmatpush1.msra.mxu0 %v1472
      %1513 = vmatprep.subr.mxu0 0.0
      %1514 = vmatpush1.msra.mxu0 %v1474
      %1515 = vmatprep.subr.mxu0 0.0
      %1516 = vmatpush1.msra.mxu0 %v1480
      %1517 = vmatprep.subr.mxu0 0.0
      %1518 = vmatpush1.msra.mxu0 %v1482
      %1519 = vmatprep.subr.mxu0 0.0
      %1520 = vmatpush1.msra.mxu0 %v1484
      %1521 = vmatprep.subr.mxu0 0.0
      %1522 = vmatpush1.msra.mxu0 %v1486
      %1523 = vmatprep.subr.mxu0 0.0
      %1524 = vmatpush1.msra.mxu0 0.0
      %1525 = vmatprep.subr.mxu0 0.0
      %1526 = vmatpush1.msra.mxu0 0.0
      %1527 = vmatprep.subr.mxu0 0.0
      %1528 = vmatpush1.msra.mxu0 0.0
      %1529 = vmatprep.subr.mxu0 0.0
      %1530 = vmatpush1.msra.mxu0 0.0
      %1531 = vmatprep.subr.mxu0 0.0
      %1532 = vmatpush1.msra.mxu0 0.0
      %1533 = vmatprep.subr.mxu0 0.0
      %1534 = vmatpush1.msra.mxu0 0.0
      %1535 = vmatprep.subr.mxu0 0.0
      %1536 = vmatpush1.msra.mxu0 0.0
      %1537 = vmatprep.subr.mxu0 0.0
      %1538 = vmatpush1.msra.mxu0 0.0
      %1539 = vmatprep.subr.mxu0 0.0
      %1540 = vmatpush1.msra.mxu0 0.0
      %1541 = vmatprep.subr.mxu0 0.0
      %1542 = vmatpush1.msra.mxu0 0.0
      %1543 = vmatprep.subr.mxu0 0.0
      %1544 = vmatpush1.msra.mxu0 0.0
      %1545 = vmatprep.subr.mxu0 0.0
      %1546 = vmatpush1.msra.mxu0 0.0
      %1547 = vmatprep.subr.mxu0 0.0
      %1548 = vmatpush1.msra.mxu0 0.0
      %1549 = vmatprep.subr.mxu0 0.0
      %1550 = vmatpush1.msra.mxu0 0.0
      %1551 = vmatprep.subr.mxu0 0.0
      %1552 = vmatpush1.msra.mxu0 0.0
      %1553 = vmatprep.subr.mxu0 0.0
      %1554 = vmatpush1.msra.mxu0 0.0
      %1555 = vmatprep.mubr.f32.mxu0 0.0
      %1556 = vmatmul.mubr.f32.gmra.mrb[0].mxu0 %v326
      %v1557 = vpop.f32.mrb[0].mxu0
      %v1558 = vadd.f32 %v811, %v1557
      %v1559 = vpop.f32.mrb[0].mxu0
      %1560 = vmatprep.mubr.f32.mxu0 0.0
      %1561 = vmatmul.mubr.f32.gmra.mrb[0].mxu0 %v327
      %v1562 = vpop.f32.mrb[0].mxu0
      %v1563 = vadd.f32 %v816, %v1562
      %v1564 = vpop.f32.mrb[0].mxu0
      %1565 = vmatprep.mubr.f32.mxu0 0.0
      %1566 = vmatmul.mubr.f32.gmra.mrb[0].mxu0 %v328
      %v1567 = vpop.f32.mrb[0].mxu0
      %v1568 = vadd.f32 %v821, %v1567
      %v1569 = vpop.f32.mrb[0].mxu0
      %1570 = vmatprep.mubr.f32.mxu0 0.0
      %1571 = vmatmul.mubr.f32.gmra.mrb[0].mxu0 %v329
      %v1572 = vpop.f32.mrb[0].mxu0
      %v1573 = vadd.f32 %v826, %v1572
      %v1574 = vpop.f32.mrb[0].mxu0
      %1575 = vmatprep.mubr.f32.mxu0 0.0
      %1576 = vmatmul.mubr.f32.gmra.mrb[0].mxu0 %v330
      %v1577 = vpop.f32.mrb[0].mxu0
      %v1578 = vadd.f32 %v831, %v1577
      %v1579 = vpop.f32.mrb[0].mxu0
      %1580 = vmatprep.mubr.f32.mxu0 0.0
      %1581 = vmatmul.mubr.f32.gmra.mrb[0].mxu0 %v331
      %v1582 = vpop.f32.mrb[0].mxu0
      %v1583 = vadd.f32 %v836, %v1582
      %v1584 = vpop.f32.mrb[0].mxu0
      %1585 = vmatprep.mubr.f32.mxu0 0.0
      %1586 = vmatmul.mubr.f32.gmra.mrb[0].mxu0 %v332
      %v1587 = vpop.f32.mrb[0].mxu0
      %v1588 = vadd.f32 %v841, %v1587
      %v1589 = vpop.f32.mrb[0].mxu0
      %1590 = vmatprep.mubr.f32.mxu0 0.0
      %1591 = vmatmul.mubr.f32.gmra.mrb[0].mxu0 %v333
      %v1592 = vpop.f32.mrb[0].mxu0
      %v1593 = vadd.f32 %v846, %v1592
      %v1594 = vpop.f32.mrb[0].mxu0
      %1595 = vdwg.mxu0
      %v1596 = vmax.f32 %v1558, 0.0
      %v1597 = vmax.f32 %v1563, 0.0
      %v1598 = vmax.f32 %v1568, 0.0
      %v1599 = vmax.f32 %v1573, 0.0
      %v1600 = vmax.f32 %v1578, 0.0
      %v1601 = vmax.f32 %v1583, 0.0
      %v1602 = vmax.f32 %v1588, 0.0
      %v1603 = vmax.f32 %v1593, 0.0
      %s1604 = scalar_lea.vmem %s312, 64
      %1605 = vst.msk [vmem:[%s1604] sm:$0xff] %vm961, %v1596
      %1606 = vst.msk [vmem:[%s1604 + $0x8] sm:$0xff] %vm961, %v1597
      %1607 = vst.msk [vmem:[%s1604 + $0x10] sm:$0xff] %vm961, %v1598
      %1608 = vst.msk [vmem:[%s1604 + $0x18] sm:$0xff] %vm961, %v1599
      %1609 = vst.msk [vmem:[%s1604 + $0x20] sm:$0xff] %vm961, %v1600
      %1610 = vst.msk [vmem:[%s1604 + $0x28] sm:$0xff] %vm961, %v1601
      %1611 = vst.msk [vmem:[%s1604 + $0x30] sm:$0xff] %vm961, %v1602
      %1612 = vst.msk [vmem:[%s1604 + $0x38] sm:$0xff] %vm961, %v1603
      %1621 = vrot.lane.b32.xlu0 %v1596, 126
      %v1622 = vpop.permute.xlu0 %1621
      %1623 = vrot.lane.b32.xlu0 %v1597, 126
      %v1624 = vpop.permute.xlu0 %1623
      %1625 = vrot.lane.b32.xlu0 %v1598, 126
      %v1626 = vpop.permute.xlu0 %1625
      %1627 = vrot.lane.b32.xlu0 %v1599, 126
      %v1628 = vpop.permute.xlu0 %1627
      %1629 = vrot.lane.b32.xlu0 %v1600, 126
      %v1630 = vpop.permute.xlu0 %1629
      %1631 = vrot.lane.b32.xlu0 %v1601, 126
      %v1632 = vpop.permute.xlu0 %1631
      %1633 = vrot.lane.b32.xlu0 %v1602, 126
      %v1634 = vpop.permute.xlu0 %1633
      %1635 = vrot.lane.b32.xlu0 %v1603, 126
      %v1636 = vpop.permute.xlu0 %1635
      %1645 = vst.msk [vmem:[%s1604] sm:$0xff] %vm1002, %v1622
      %1646 = vst.msk [vmem:[%s1604 + $0x8] sm:$0xff] %vm1002, %v1624
      %1647 = vst.msk [vmem:[%s1604 + $0x10] sm:$0xff] %vm1002, %v1626
      %1648 = vst.msk [vmem:[%s1604 + $0x18] sm:$0xff] %vm1002, %v1628
      %1649 = vst.msk [vmem:[%s1604 + $0x20] sm:$0xff] %vm1002, %v1630
      %1650 = vst.msk [vmem:[%s1604 + $0x28] sm:$0xff] %vm1002, %v1632
      %1651 = vst.msk [vmem:[%s1604 + $0x30] sm:$0xff] %vm1002, %v1634
      %1652 = vst.msk [vmem:[%s1604 + $0x38] sm:$0xff] %vm1002, %v1636
      %1653 = vrot.lane.b32.xlu0 %v1596, 124
      %v1654 = vpop.permute.xlu0 %1653
      %1655 = vrot.lane.b32.xlu0 %v1597, 124
      %v1656 = vpop.permute.xlu0 %1655
      %1657 = vrot.lane.b32.xlu0 %v1598, 124
      %v1658 = vpop.permute.xlu0 %1657
      %1659 = vrot.lane.b32.xlu0 %v1599, 124
      %v1660 = vpop.permute.xlu0 %1659
      %1661 = vrot.lane.b32.xlu0 %v1600, 124
      %v1662 = vpop.permute.xlu0 %1661
      %1663 = vrot.lane.b32.xlu0 %v1601, 124
      %v1664 = vpop.permute.xlu0 %1663
      %1665 = vrot.lane.b32.xlu0 %v1602, 124
      %v1666 = vpop.permute.xlu0 %1665
      %1667 = vrot.lane.b32.xlu0 %v1603, 124
      %v1668 = vpop.permute.xlu0 %1667
      %1677 = vst.msk [vmem:[%s1604] sm:$0xff] %vm1035, %v1654
      %1678 = vst.msk [vmem:[%s1604 + $0x8] sm:$0xff] %vm1035, %v1656
      %1679 = vst.msk [vmem:[%s1604 + $0x10] sm:$0xff] %vm1035, %v1658
      %1680 = vst.msk [vmem:[%s1604 + $0x18] sm:$0xff] %vm1035, %v1660
      %1681 = vst.msk [vmem:[%s1604 + $0x20] sm:$0xff] %vm1035, %v1662
      %1682 = vst.msk [vmem:[%s1604 + $0x28] sm:$0xff] %vm1035, %v1664
      %1683 = vst.msk [vmem:[%s1604 + $0x30] sm:$0xff] %vm1035, %v1666
      %1684 = vst.msk [vmem:[%s1604 + $0x38] sm:$0xff] %vm1035, %v1668
      %1685 = vrot.lane.b32.xlu0 %v1596, 122
      %v1686 = vpop.permute.xlu0 %1685
      %1687 = vrot.lane.b32.xlu0 %v1597, 122
      %v1688 = vpop.permute.xlu0 %1687
      %1689 = vrot.lane.b32.xlu0 %v1598, 122
      %v1690 = vpop.permute.xlu0 %1689
      %1691 = vrot.lane.b32.xlu0 %v1599, 122
      %v1692 = vpop.permute.xlu0 %1691
      %1693 = vrot.lane.b32.xlu0 %v1600, 122
      %v1694 = vpop.permute.xlu0 %1693
      %1695 = vrot.lane.b32.xlu0 %v1601, 122
      %v1696 = vpop.permute.xlu0 %1695
      %1697 = vrot.lane.b32.xlu0 %v1602, 122
      %v1698 = vpop.permute.xlu0 %1697
      %1699 = vrot.lane.b32.xlu0 %v1603, 122
      %v1700 = vpop.permute.xlu0 %1699
      %1709 = vst.msk [vmem:[%s1604] sm:$0xff] %vm1068, %v1686
      %1710 = vst.msk [vmem:[%s1604 + $0x8] sm:$0xff] %vm1068, %v1688
      %1711 = vst.msk [vmem:[%s1604 + $0x10] sm:$0xff] %vm1068, %v1690
      %1712 = vst.msk [vmem:[%s1604 + $0x18] sm:$0xff] %vm1068, %v1692
      %1713 = vst.msk [vmem:[%s1604 + $0x20] sm:$0xff] %vm1068, %v1694
      %1714 = vst.msk [vmem:[%s1604 + $0x28] sm:$0xff] %vm1068, %v1696
      %1715 = vst.msk [vmem:[%s1604 + $0x30] sm:$0xff] %vm1068, %v1698
      %1716 = vst.msk [vmem:[%s1604 + $0x38] sm:$0xff] %vm1068, %v1700
      %1717 = vrot.lane.b32.xlu0 %v1596, 120
      %v1718 = vpop.permute.xlu0 %1717
      %1719 = vrot.lane.b32.xlu0 %v1597, 120
      %v1720 = vpop.permute.xlu0 %1719
      %1721 = vrot.lane.b32.xlu0 %v1598, 120
      %v1722 = vpop.permute.xlu0 %1721
      %1723 = vrot.lane.b32.xlu0 %v1599, 120
      %v1724 = vpop.permute.xlu0 %1723
      %1725 = vrot.lane.b32.xlu0 %v1600, 120
      %v1726 = vpop.permute.xlu0 %1725
      %1727 = vrot.lane.b32.xlu0 %v1601, 120
      %v1728 = vpop.permute.xlu0 %1727
      %1729 = vrot.lane.b32.xlu0 %v1602, 120
      %v1730 = vpop.permute.xlu0 %1729
      %1731 = vrot.lane.b32.xlu0 %v1603, 120
      %v1732 = vpop.permute.xlu0 %1731
      %1741 = vst.msk [vmem:[%s1604] sm:$0xff] %vm1101, %v1718
      %1742 = vst.msk [vmem:[%s1604 + $0x8] sm:$0xff] %vm1101, %v1720
      %1743 = vst.msk [vmem:[%s1604 + $0x10] sm:$0xff] %vm1101, %v1722
      %1744 = vst.msk [vmem:[%s1604 + $0x18] sm:$0xff] %vm1101, %v1724
      %1745 = vst.msk [vmem:[%s1604 + $0x20] sm:$0xff] %vm1101, %v1726
      %1746 = vst.msk [vmem:[%s1604 + $0x28] sm:$0xff] %vm1101, %v1728
      %1747 = vst.msk [vmem:[%s1604 + $0x30] sm:$0xff] %vm1101, %v1730
      %1748 = vst.msk [vmem:[%s1604 + $0x38] sm:$0xff] %vm1101, %v1732
      %s1749 = scalar_lea.vmem %s305, 32
      %v1750 = vld [vmem:[%s1749] sm:$0xff]
      %v1751 = vld [vmem:[%s1749 + $0x8] sm:$0xff]
      %1754 = vrot.lane.b32.xlu0 %v1750, 127
      %v1755 = vpop.permute.xlu0 %1754
      %1756 = vrot.lane.b32.xlu0 %v1751, 127
      %v1757 = vpop.permute.xlu0 %1756
      %v1758 = vsel %vm378, %v1755, %v1757
      %1761 = vrot.lane.b32.xlu0 %v1750, 112
      %v1762 = vpop.permute.xlu0 %1761
      %1763 = vrot.lane.b32.xlu0 %v1751, 112
      %v1764 = vpop.permute.xlu0 %1763
      %v1765 = vsel %vm386, %v1762, %v1764
      %1768 = vrot.lane.b32.xlu0 %v1750, 111
      %v1769 = vpop.permute.xlu0 %1768
      %1770 = vrot.lane.b32.xlu0 %v1751, 111
      %v1771 = vpop.permute.xlu0 %1770
      %v1772 = vsel %vm394, %v1769, %v1771
      %1775 = vmatprep.subr.mxu0 %v1751
      %1776 = vmatpush1.msra.mxu0 %v1750
      %1777 = vmatprep.subr.mxu0 %v1757
      %1778 = vmatpush1.msra.mxu0 %v1758
      %1779 = vmatprep.subr.mxu0 %v1764
      %1780 = vmatpush1.msra.mxu0 %v1765
      %1781 = vmatprep.subr.mxu0 %v1771
      %1782 = vmatpush1.msra.mxu0 %v1772
      %1783 = vmatprep.subr.mxu0 0.0
      %1784 = vmatpush1.msra.mxu0 0.0
      %1785 = vmatprep.subr.mxu0 0.0
      %1786 = vmatpush1.msra.mxu0 0.0
      %1787 = vmatprep.subr.mxu0 0.0
      %1788 = vmatpush1.msra.mxu0 0.0
      %1789 = vmatprep.subr.mxu0 0.0
      %1790 = vmatpush1.msra.mxu0 0.0
      %1791 = vmatprep.subr.mxu0 0.0
      %1792 = vmatpush1.msra.mxu0 0.0
      %1793 = vmatprep.subr.mxu0 0.0
      %1794 = vmatpush1.msra.mxu0 0.0
      %1795 = vmatprep.subr.mxu0 0.0
      %1796 = vmatpush1.msra.mxu0 0.0
      %1797 = vmatprep.subr.mxu0 0.0
      %1798 = vmatpush1.msra.mxu0 0.0
      %1799 = vmatprep.subr.mxu0 0.0
      %1800 = vmatpush1.msra.mxu0 0.0
      %1801 = vmatprep.subr.mxu0 0.0
      %1802 = vmatpush1.msra.mxu0 0.0
      %1803 = vmatprep.subr.mxu0 0.0
      %1804 = vmatpush1.msra.mxu0 0.0
      %1805 = vmatprep.subr.mxu0 0.0
      %1806 = vmatpush1.msra.mxu0 0.0
      %1807 = vmatprep.subr.mxu0 0.0
      %1808 = vmatpush1.msra.mxu0 0.0
      %1809 = vmatprep.subr.mxu0 0.0
      %1810 = vmatpush1.msra.mxu0 0.0
      %1811 = vmatprep.subr.mxu0 0.0
      %1812 = vmatpush1.msra.mxu0 0.0
      %1813 = vmatprep.subr.mxu0 0.0
      %1814 = vmatpush1.msra.mxu0 0.0
      %1815 = vmatprep.subr.mxu0 0.0
      %1816 = vmatpush1.msra.mxu0 0.0
      %1817 = vmatprep.subr.mxu0 0.0
      %1818 = vmatpush1.msra.mxu0 0.0
      %1819 = vmatprep.subr.mxu0 0.0
      %1820 = vmatpush1.msra.mxu0 0.0
      %1821 = vmatprep.subr.mxu0 0.0
      %1822 = vmatpush1.msra.mxu0 0.0
      %1823 = vmatprep.subr.mxu0 0.0
      %1824 = vmatpush1.msra.mxu0 0.0
      %1825 = vmatprep.subr.mxu0 0.0
      %1826 = vmatpush1.msra.mxu0 0.0
      %1827 = vmatprep.subr.mxu0 0.0
      %1828 = vmatpush1.msra.mxu0 0.0
      %1829 = vmatprep.subr.mxu0 0.0
      %1830 = vmatpush1.msra.mxu0 0.0
      %1831 = vmatprep.subr.mxu0 0.0
      %1832 = vmatpush1.msra.mxu0 0.0
      %1833 = vmatprep.subr.mxu0 0.0
      %1834 = vmatpush1.msra.mxu0 0.0
      %1835 = vmatprep.subr.mxu0 0.0
      %1836 = vmatpush1.msra.mxu0 0.0
      %1837 = vmatprep.subr.mxu0 0.0
      %1838 = vmatpush1.msra.mxu0 0.0
      %1839 = vmatprep.mubr.f32.mxu0 0.0
      %1840 = vmatmul.mubr.f32.gmra.mrb[0].mxu0 %v410
      %v1841 = vpop.f32.mrb[0].mxu0
      %v1842 = vadd.f32 %v401, %v1841
      %v1843 = vpop.f32.mrb[0].mxu0
      %v1844 = vadd.f32 %v401, %v1843
      %1845 = vmatprep.mubr.f32.mxu0 0.0
      %1846 = vmatmul.mubr.f32.gmra.mrb[0].mxu0 %v413
      %v1847 = vpop.f32.mrb[0].mxu0
      %v1848 = vadd.f32 %v406, %v1847
      %v1849 = vpop.f32.mrb[0].mxu0
      %v1850 = vadd.f32 %v406, %v1849
      %1851 = vdwg.mxu0
      %v1852 = vmax.f32 %v1842, 0.0
      %v1853 = vmax.f32 %v1844, 0.0
      %v1854 = vmax.f32 %v1848, 0.0
      %v1855 = vmax.f32 %v1850, 0.0
      %1860 = vrot.lane.b32.xlu0 %v1852, 127
      %v1861 = vpop.permute.xlu0 %1860
      %1862 = vrot.lane.b32.xlu0 %v1853, 127
      %v1863 = vpop.permute.xlu0 %1862
      %1864 = vrot.lane.b32.xlu0 %v1854, 127
      %v1865 = vpop.permute.xlu0 %1864
      %1866 = vrot.lane.b32.xlu0 %v1855, 127
      %v1867 = vpop.permute.xlu0 %1866
      %v1868 = vsel %vm378, %v1861, %v1863
      %v1869 = vsel %vm378, %v1865, %v1867
      %v1874 = vmax.f32 %v1852, %v1868
      %v1875 = vmax.f32 %v1853, %v1863
      %v1876 = vmax.f32 %v1854, %v1869
      %v1877 = vmax.f32 %v1855, %v1867
      %1882 = vrot.lane.b32.xlu0 %v1874, 112
      %v1883 = vpop.permute.xlu0 %1882
      %1884 = vrot.lane.b32.xlu0 %v1875, 112
      %v1885 = vpop.permute.xlu0 %1884
      %1886 = vrot.lane.b32.xlu0 %v1876, 112
      %v1887 = vpop.permute.xlu0 %1886
      %1888 = vrot.lane.b32.xlu0 %v1877, 112
      %v1889 = vpop.permute.xlu0 %1888
      %v1890 = vsel %vm386, %v1883, %v1885
      %v1891 = vsel %vm386, %v1887, %v1889
      %v1896 = vmax.f32 %v1874, %v1890
      %v1897 = vmax.f32 %v1875, %v1885
      %v1898 = vmax.f32 %v1876, %v1891
      %v1899 = vmax.f32 %v1877, %v1889
      %v1901 = vsel %vm540, %v1897, 0
      %v1904 = vsel %vm540, %v1899, 0
      %1906 = vmatprep.subr.mxu0 0.0
      %1907 = vmatpush1.msra.mxu0 %v342
      %1908 = vmatprep.subr.mxu0 0.0
      %1909 = vmatpush1.msra.mxu0 %v343
      %1910 = vmatprep.subr.mxu0 0.0
      %1911 = vmatpush1.msra.mxu0 %v344
      %1912 = vmatprep.subr.mxu0 0.0
      %1913 = vmatpush1.msra.mxu0 %v345
      %1914 = vmatprep.subr.mxu0 0.0
      %1915 = vmatpush1.msra.mxu0 %v346
      %1916 = vmatprep.subr.mxu0 0.0
      %1917 = vmatpush1.msra.mxu0 %v347
      %1918 = vmatprep.subr.mxu0 0.0
      %1919 = vmatpush1.msra.mxu0 %v348
      %1920 = vmatprep.subr.mxu0 0.0
      %1921 = vmatpush1.msra.mxu0 %v349
      %1922 = vmatprep.subr.mxu0 0.0
      %1923 = vmatpush1.msra.mxu0 %v350
      %1924 = vmatprep.subr.mxu0 0.0
      %1925 = vmatpush1.msra.mxu0 %v351
      %1926 = vmatprep.subr.mxu0 0.0
      %1927 = vmatpush1.msra.mxu0 %v352
      %1928 = vmatprep.subr.mxu0 0.0
      %1929 = vmatpush1.msra.mxu0 %v353
      %1930 = vmatprep.subr.mxu0 0.0
      %1931 = vmatpush1.msra.mxu0 %v354
      %1932 = vmatprep.subr.mxu0 0.0
      %1933 = vmatpush1.msra.mxu0 %v355
      %1934 = vmatprep.subr.mxu0 0.0
      %1935 = vmatpush1.msra.mxu0 %v356
      %1936 = vmatprep.subr.mxu0 0.0
      %1937 = vmatpush1.msra.mxu0 %v357
      %1938 = vmatprep.subr.mxu0 0.0
      %1939 = vmatpush1.msra.mxu0 %v358
      %1940 = vmatprep.subr.mxu0 0.0
      %1941 = vmatpush1.msra.mxu0 %v359
      %1942 = vmatprep.subr.mxu0 0.0
      %1943 = vmatpush1.msra.mxu0 %v360
      %1944 = vmatprep.subr.mxu0 0.0
      %1945 = vmatpush1.msra.mxu0 %v361
      %1946 = vmatprep.subr.mxu0 0.0
      %1947 = vmatpush1.msra.mxu0 %v362
      %1948 = vmatprep.subr.mxu0 0.0
      %1949 = vmatpush1.msra.mxu0 %v363
      %1950 = vmatprep.subr.mxu0 0.0
      %1951 = vmatpush1.msra.mxu0 %v364
      %1952 = vmatprep.subr.mxu0 0.0
      %1953 = vmatpush1.msra.mxu0 %v365
      %1954 = vmatprep.subr.mxu0 0.0
      %1955 = vmatpush1.msra.mxu0 %v366
      %1956 = vmatprep.subr.mxu0 0.0
      %1957 = vmatpush1.msra.mxu0 %v367
      %1958 = vmatprep.subr.mxu0 0.0
      %1959 = vmatpush1.msra.mxu0 %v368
      %1960 = vmatprep.subr.mxu0 0.0
      %1961 = vmatpush1.msra.mxu0 %v549
      %1962 = vmatprep.subr.mxu0 0.0
      %1963 = vmatpush1.msra.mxu0 0.0
      %1964 = vmatprep.subr.mxu0 0.0
      %1965 = vmatpush1.msra.mxu0 0.0
      %1966 = vmatprep.subr.mxu0 0.0
      %1967 = vmatpush1.msra.mxu0 0.0
      %1968 = vmatprep.subr.mxu0 0.0
      %1969 = vmatpush1.msra.mxu0 0.0
      %1970 = vmatprep.mubr.f32.mxu0 %v1901
      %1971 = vmatmul.mubr.f32.gmra.mrb[0].mxu0 %v1896
      %v1972 = vpop.f32.mrb[0].mxu0
      %v1973 = vadd.f32 0.0, %v1972
      %v1974 = vpop.f32.mrb[0].mxu0
      %1975 = vmatprep.mubr.f32.mxu0 %v1904
      %1976 = vmatmul.mubr.f32.gmra.mrb[0].mxu0 %v1898
      %v1977 = vpop.f32.mrb[0].mxu0
      %v1978 = vadd.f32 0.0, %v1977
      %v1979 = vpop.f32.mrb[0].mxu0
      %1980 = vdwg.mxu0
      %1983 = vrot.lane.b32.xlu0 %v1973, 127
      %v1984 = vpop.permute.xlu0 %1983
      %1985 = vrot.lane.b32.xlu0 %v1978, 127
      %v1986 = vpop.permute.xlu0 %1985
      %1989 = vrot.lane.b32.xlu0 %v1973, 121
      %v1990 = vpop.permute.xlu0 %1989
      %1991 = vrot.lane.b32.xlu0 %v1978, 121
      %v1992 = vpop.permute.xlu0 %1991
      %1995 = vrot.lane.b32.xlu0 %v1973, 120
      %v1996 = vpop.permute.xlu0 %1995
      %1997 = vrot.lane.b32.xlu0 %v1978, 120
      %v1998 = vpop.permute.xlu0 %1997
      %2001 = vmatprep.subr.mxu0 0.0
      %2002 = vmatpush1.msra.mxu0 %v1973
      %2003 = vmatprep.subr.mxu0 0.0
      %2004 = vmatpush1.msra.mxu0 %v1978
      %2005 = vmatprep.subr.mxu0 0.0
      %2006 = vmatpush1.msra.mxu0 %v1984
      %2007 = vmatprep.subr.mxu0 0.0
      %2008 = vmatpush1.msra.mxu0 %v1986
      %2009 = vmatprep.subr.mxu0 0.0
      %2010 = vmatpush1.msra.mxu0 %v1990
      %2011 = vmatprep.subr.mxu0 0.0
      %2012 = vmatpush1.msra.mxu0 %v1992
      %2013 = vmatprep.subr.mxu0 0.0
      %2014 = vmatpush1.msra.mxu0 %v1996
      %2015 = vmatprep.subr.mxu0 0.0
      %2016 = vmatpush1.msra.mxu0 %v1998
      %2017 = vmatprep.subr.mxu0 0.0
      %2018 = vmatpush1.msra.mxu0 0.0
      %2019 = vmatprep.subr.mxu0 0.0
      %2020 = vmatpush1.msra.mxu0 0.0
      %2021 = vmatprep.subr.mxu0 0.0
      %2022 = vmatpush1.msra.mxu0 0.0
      %2023 = vmatprep.subr.mxu0 0.0
      %2024 = vmatpush1.msra.mxu0 0.0
      %2025 = vmatprep.subr.mxu0 0.0
      %2026 = vmatpush1.msra.mxu0 0.0
      %2027 = vmatprep.subr.mxu0 0.0
      %2028 = vmatpush1.msra.mxu0 0.0
      %2029 = vmatprep.subr.mxu0 0.0
      %2030 = vmatpush1.msra.mxu0 0.0
      %2031 = vmatprep.subr.mxu0 0.0
      %2032 = vmatpush1.msra.mxu0 0.0
      %2033 = vmatprep.subr.mxu0 0.0
      %2034 = vmatpush1.msra.mxu0 0.0
      %2035 = vmatprep.subr.mxu0 0.0
      %2036 = vmatpush1.msra.mxu0 0.0
      %2037 = vmatprep.subr.mxu0 0.0
      %2038 = vmatpush1.msra.mxu0 0.0
      %2039 = vmatprep.subr.mxu0 0.0
      %2040 = vmatpush1.msra.mxu0 0.0
      %2041 = vmatprep.subr.mxu0 0.0
      %2042 = vmatpush1.msra.mxu0 0.0
      %2043 = vmatprep.subr.mxu0 0.0
      %2044 = vmatpush1.msra.mxu0 0.0
      %2045 = vmatprep.subr.mxu0 0.0
      %2046 = vmatpush1.msra.mxu0 0.0
      %2047 = vmatprep.subr.mxu0 0.0
      %2048 = vmatpush1.msra.mxu0 0.0
      %2049 = vmatprep.subr.mxu0 0.0
      %2050 = vmatpush1.msra.mxu0 0.0
      %2051 = vmatprep.subr.mxu0 0.0
      %2052 = vmatpush1.msra.mxu0 0.0
      %2053 = vmatprep.subr.mxu0 0.0
      %2054 = vmatpush1.msra.mxu0 0.0
      %2055 = vmatprep.subr.mxu0 0.0
      %2056 = vmatpush1.msra.mxu0 0.0
      %2057 = vmatprep.subr.mxu0 0.0
      %2058 = vmatpush1.msra.mxu0 0.0
      %2059 = vmatprep.subr.mxu0 0.0
      %2060 = vmatpush1.msra.mxu0 0.0
      %2061 = vmatprep.subr.mxu0 0.0
      %2062 = vmatpush1.msra.mxu0 0.0
      %2063 = vmatprep.subr.mxu0 0.0
      %2064 = vmatpush1.msra.mxu0 0.0
      %2065 = vmatprep.mubr.f32.mxu0 0.0
      %2066 = vmatmul.mubr.f32.gmra.mrb[0].mxu0 %v668
      %v2067 = vpop.f32.mrb[0].mxu0
      %v2068 = vadd.f32 %v649, %v2067
      %v2069 = vpop.f32.mrb[0].mxu0
      %2070 = vmatprep.mubr.f32.mxu0 0.0
      %2071 = vmatmul.mubr.f32.gmra.mrb[0].mxu0 %v671
      %v2072 = vpop.f32.mrb[0].mxu0
      %v2073 = vadd.f32 %v654, %v2072
      %v2074 = vpop.f32.mrb[0].mxu0
      %2075 = vmatprep.mubr.f32.mxu0 0.0
      %2076 = vmatmul.mubr.f32.gmra.mrb[0].mxu0 %v674
      %v2077 = vpop.f32.mrb[0].mxu0
      %v2078 = vadd.f32 %v659, %v2077
      %v2079 = vpop.f32.mrb[0].mxu0
      %2080 = vmatprep.mubr.f32.mxu0 0.0
      %2081 = vmatmul.mubr.f32.gmra.mrb[0].mxu0 %v677
      %v2082 = vpop.f32.mrb[0].mxu0
      %v2083 = vadd.f32 %v664, %v2082
      %v2084 = vpop.f32.mrb[0].mxu0
      %2085 = vdwg.mxu0
      %v2086 = vmax.f32 %v2068, 0.0
      %v2087 = vmax.f32 %v2073, 0.0
      %v2088 = vmax.f32 %v2078, 0.0
      %v2089 = vmax.f32 %v2083, 0.0
      %2094 = vrot.lane.b32.xlu0 %v2086, 127
      %v2095 = vpop.permute.xlu0 %2094
      %2096 = vrot.lane.b32.xlu0 %v2087, 127
      %v2097 = vpop.permute.xlu0 %2096
      %2098 = vrot.lane.b32.xlu0 %v2088, 127
      %v2099 = vpop.permute.xlu0 %2098
      %2100 = vrot.lane.b32.xlu0 %v2089, 127
      %v2101 = vpop.permute.xlu0 %2100
      %2106 = vrot.lane.b32.xlu0 %v2086, 121
      %v2107 = vpop.permute.xlu0 %2106
      %2108 = vrot.lane.b32.xlu0 %v2087, 121
      %v2109 = vpop.permute.xlu0 %2108
      %2110 = vrot.lane.b32.xlu0 %v2088, 121
      %v2111 = vpop.permute.xlu0 %2110
      %2112 = vrot.lane.b32.xlu0 %v2089, 121
      %v2113 = vpop.permute.xlu0 %2112
      %2118 = vrot.lane.b32.xlu0 %v2086, 120
      %v2119 = vpop.permute.xlu0 %2118
      %2120 = vrot.lane.b32.xlu0 %v2087, 120
      %v2121 = vpop.permute.xlu0 %2120
      %2122 = vrot.lane.b32.xlu0 %v2088, 120
      %v2123 = vpop.permute.xlu0 %2122
      %2124 = vrot.lane.b32.xlu0 %v2089, 120
      %v2125 = vpop.permute.xlu0 %2124
      %2130 = vmatprep.subr.mxu0 0.0
      %2131 = vmatpush1.msra.mxu0 %v2086
      %2132 = vmatprep.subr.mxu0 0.0
      %2133 = vmatpush1.msra.mxu0 %v2087
      %2134 = vmatprep.subr.mxu0 0.0
      %2135 = vmatpush1.msra.mxu0 %v2088
      %2136 = vmatprep.subr.mxu0 0.0
      %2137 = vmatpush1.msra.mxu0 %v2089
      %2138 = vmatprep.subr.mxu0 0.0
      %2139 = vmatpush1.msra.mxu0 %v2095
      %2140 = vmatprep.subr.mxu0 0.0
      %2141 = vmatpush1.msra.mxu0 %v2097
      %2142 = vmatprep.subr.mxu0 0.0
      %2143 = vmatpush1.msra.mxu0 %v2099
      %2144 = vmatprep.subr.mxu0 0.0
      %2145 = vmatpush1.msra.mxu0 %v2101
      %2146 = vmatprep.subr.mxu0 0.0
      %2147 = vmatpush1.msra.mxu0 %v2107
      %2148 = vmatprep.subr.mxu0 0.0
      %2149 = vmatpush1.msra.mxu0 %v2109
      %2150 = vmatprep.subr.mxu0 0.0
      %2151 = vmatpush1.msra.mxu0 %v2111
      %2152 = vmatprep.subr.mxu0 0.0
      %2153 = vmatpush1.msra.mxu0 %v2113
      %2154 = vmatprep.subr.mxu0 0.0
      %2155 = vmatpush1.msra.mxu0 %v2119
      %2156 = vmatprep.subr.mxu0 0.0
      %2157 = vmatpush1.msra.mxu0 %v2121
      %2158 = vmatprep.subr.mxu0 0.0
      %2159 = vmatpush1.msra.mxu0 %v2123
      %2160 = vmatprep.subr.mxu0 0.0
      %2161 = vmatpush1.msra.mxu0 %v2125
      %2162 = vmatprep.subr.mxu0 0.0
      %2163 = vmatpush1.msra.mxu0 0.0
      %2164 = vmatprep.subr.mxu0 0.0
      %2165 = vmatpush1.msra.mxu0 0.0
      %2166 = vmatprep.subr.mxu0 0.0
      %2167 = vmatpush1.msra.mxu0 0.0
      %2168 = vmatprep.subr.mxu0 0.0
      %2169 = vmatpush1.msra.mxu0 0.0
      %2170 = vmatprep.subr.mxu0 0.0
      %2171 = vmatpush1.msra.mxu0 0.0
      %2172 = vmatprep.subr.mxu0 0.0
      %2173 = vmatpush1.msra.mxu0 0.0
      %2174 = vmatprep.subr.mxu0 0.0
      %2175 = vmatpush1.msra.mxu0 0.0
      %2176 = vmatprep.subr.mxu0 0.0
      %2177 = vmatpush1.msra.mxu0 0.0
      %2178 = vmatprep.subr.mxu0 0.0
      %2179 = vmatpush1.msra.mxu0 0.0
      %2180 = vmatprep.subr.mxu0 0.0
      %2181 = vmatpush1.msra.mxu0 0.0
      %2182 = vmatprep.subr.mxu0 0.0
      %2183 = vmatpush1.msra.mxu0 0.0
      %2184 = vmatprep.subr.mxu0 0.0
      %2185 = vmatpush1.msra.mxu0 0.0
      %2186 = vmatprep.subr.mxu0 0.0
      %2187 = vmatpush1.msra.mxu0 0.0
      %2188 = vmatprep.subr.mxu0 0.0
      %2189 = vmatpush1.msra.mxu0 0.0
      %2190 = vmatprep.subr.mxu0 0.0
      %2191 = vmatpush1.msra.mxu0 0.0
      %2192 = vmatprep.subr.mxu0 0.0
      %2193 = vmatpush1.msra.mxu0 0.0
      %2194 = vmatprep.mubr.f32.mxu0 0.0
      %2195 = vmatmul.mubr.f32.gmra.mrb[0].mxu0 %v326
      %v2196 = vpop.f32.mrb[0].mxu0
      %v2197 = vadd.f32 %v811, %v2196
      %v2198 = vpop.f32.mrb[0].mxu0
      %2199 = vmatprep.mubr.f32.mxu0 0.0
      %2200 = vmatmul.mubr.f32.gmra.mrb[0].mxu0 %v327
      %v2201 = vpop.f32.mrb[0].mxu0
      %v2202 = vadd.f32 %v816, %v2201
      %v2203 = vpop.f32.mrb[0].mxu0
      %2204 = vmatprep.mubr.f32.mxu0 0.0
      %2205 = vmatmul.mubr.f32.gmra.mrb[0].mxu0 %v328
      %v2206 = vpop.f32.mrb[0].mxu0
      %v2207 = vadd.f32 %v821, %v2206
      %v2208 = vpop.f32.mrb[0].mxu0
      %2209 = vmatprep.mubr.f32.mxu0 0.0
      %2210 = vmatmul.mubr.f32.gmra.mrb[0].mxu0 %v329
      %v2211 = vpop.f32.mrb[0].mxu0
      %v2212 = vadd.f32 %v826, %v2211
      %v2213 = vpop.f32.mrb[0].mxu0
      %2214 = vmatprep.mubr.f32.mxu0 0.0
      %2215 = vmatmul.mubr.f32.gmra.mrb[0].mxu0 %v330
      %v2216 = vpop.f32.mrb[0].mxu0
      %v2217 = vadd.f32 %v831, %v2216
      %v2218 = vpop.f32.mrb[0].mxu0
      %2219 = vmatprep.mubr.f32.mxu0 0.0
      %2220 = vmatmul.mubr.f32.gmra.mrb[0].mxu0 %v331
      %v2221 = vpop.f32.mrb[0].mxu0
      %v2222 = vadd.f32 %v836, %v2221
      %v2223 = vpop.f32.mrb[0].mxu0
      %2224 = vmatprep.mubr.f32.mxu0 0.0
      %2225 = vmatmul.mubr.f32.gmra.mrb[0].mxu0 %v332
      %v2226 = vpop.f32.mrb[0].mxu0
      %v2227 = vadd.f32 %v841, %v2226
      %v2228 = vpop.f32.mrb[0].mxu0
      %2229 = vmatprep.mubr.f32.mxu0 0.0
      %2230 = vmatmul.mubr.f32.gmra.mrb[0].mxu0 %v333
      %v2231 = vpop.f32.mrb[0].mxu0
      %v2232 = vadd.f32 %v846, %v2231
      %v2233 = vpop.f32.mrb[0].mxu0
      %2234 = vdwg.mxu0
      %v2235 = vmax.f32 %v2197, 0.0
      %v2236 = vmax.f32 %v2202, 0.0
      %v2237 = vmax.f32 %v2207, 0.0
      %v2238 = vmax.f32 %v2212, 0.0
      %v2239 = vmax.f32 %v2217, 0.0
      %v2240 = vmax.f32 %v2222, 0.0
      %v2241 = vmax.f32 %v2227, 0.0
      %v2242 = vmax.f32 %v2232, 0.0
      %s2243 = scalar_lea.vmem %s312, 128
      %2244 = vst.msk [vmem:[%s2243] sm:$0xff] %vm961, %v2235
      %2245 = vst.msk [vmem:[%s2243 + $0x8] sm:$0xff] %vm961, %v2236
      %2246 = vst.msk [vmem:[%s2243 + $0x10] sm:$0xff] %vm961, %v2237
      %2247 = vst.msk [vmem:[%s2243 + $0x18] sm:$0xff] %vm961, %v2238
      %2248 = vst.msk [vmem:[%s2243 + $0x20] sm:$0xff] %vm961, %v2239
      %2249 = vst.msk [vmem:[%s2243 + $0x28] sm:$0xff] %vm961, %v2240
      %2250 = vst.msk [vmem:[%s2243 + $0x30] sm:$0xff] %vm961, %v2241
      %2251 = vst.msk [vmem:[%s2243 + $0x38] sm:$0xff] %vm961, %v2242
      %2260 = vrot.lane.b32.xlu0 %v2235, 126
      %v2261 = vpop.permute.xlu0 %2260
      %2262 = vrot.lane.b32.xlu0 %v2236, 126
      %v2263 = vpop.permute.xlu0 %2262
      %2264 = vrot.lane.b32.xlu0 %v2237, 126
      %v2265 = vpop.permute.xlu0 %2264
      %2266 = vrot.lane.b32.xlu0 %v2238, 126
      %v2267 = vpop.permute.xlu0 %2266
      %2268 = vrot.lane.b32.xlu0 %v2239, 126
      %v2269 = vpop.permute.xlu0 %2268
      %2270 = vrot.lane.b32.xlu0 %v2240, 126
      %v2271 = vpop.permute.xlu0 %2270
      %2272 = vrot.lane.b32.xlu0 %v2241, 126
      %v2273 = vpop.permute.xlu0 %2272
      %2274 = vrot.lane.b32.xlu0 %v2242, 126
      %v2275 = vpop.permute.xlu0 %2274
      %2284 = vst.msk [vmem:[%s2243] sm:$0xff] %vm1002, %v2261
      %2285 = vst.msk [vmem:[%s2243 + $0x8] sm:$0xff] %vm1002, %v2263
      %2286 = vst.msk [vmem:[%s2243 + $0x10] sm:$0xff] %vm1002, %v2265
      %2287 = vst.msk [vmem:[%s2243 + $0x18] sm:$0xff] %vm1002, %v2267
      %2288 = vst.msk [vmem:[%s2243 + $0x20] sm:$0xff] %vm1002, %v2269
      %2289 = vst.msk [vmem:[%s2243 + $0x28] sm:$0xff] %vm1002, %v2271
      %2290 = vst.msk [vmem:[%s2243 + $0x30] sm:$0xff] %vm1002, %v2273
      %2291 = vst.msk [vmem:[%s2243 + $0x38] sm:$0xff] %vm1002, %v2275
      %2292 = vrot.lane.b32.xlu0 %v2235, 124
      %v2293 = vpop.permute.xlu0 %2292
      %2294 = vrot.lane.b32.xlu0 %v2236, 124
      %v2295 = vpop.permute.xlu0 %2294
      %2296 = vrot.lane.b32.xlu0 %v2237, 124
      %v2297 = vpop.permute.xlu0 %2296
      %2298 = vrot.lane.b32.xlu0 %v2238, 124
      %v2299 = vpop.permute.xlu0 %2298
      %2300 = vrot.lane.b32.xlu0 %v2239, 124
      %v2301 = vpop.permute.xlu0 %2300
      %2302 = vrot.lane.b32.xlu0 %v2240, 124
      %v2303 = vpop.permute.xlu0 %2302
      %2304 = vrot.lane.b32.xlu0 %v2241, 124
      %v2305 = vpop.permute.xlu0 %2304
      %2306 = vrot.lane.b32.xlu0 %v2242, 124
      %v2307 = vpop.permute.xlu0 %2306
      %2316 = vst.msk [vmem:[%s2243] sm:$0xff] %vm1035, %v2293
      %2317 = vst.msk [vmem:[%s2243 + $0x8] sm:$0xff] %vm1035, %v2295
      %2318 = vst.msk [vmem:[%s2243 + $0x10] sm:$0xff] %vm1035, %v2297
      %2319 = vst.msk [vmem:[%s2243 + $0x18] sm:$0xff] %vm1035, %v2299
      %2320 = vst.msk [vmem:[%s2243 + $0x20] sm:$0xff] %vm1035, %v2301
      %2321 = vst.msk [vmem:[%s2243 + $0x28] sm:$0xff] %vm1035, %v2303
      %2322 = vst.msk [vmem:[%s2243 + $0x30] sm:$0xff] %vm1035, %v2305
      %2323 = vst.msk [vmem:[%s2243 + $0x38] sm:$0xff] %vm1035, %v2307
      %2324 = vrot.lane.b32.xlu0 %v2235, 122
      %v2325 = vpop.permute.xlu0 %2324
      %2326 = vrot.lane.b32.xlu0 %v2236, 122
      %v2327 = vpop.permute.xlu0 %2326
      %2328 = vrot.lane.b32.xlu0 %v2237, 122
      %v2329 = vpop.permute.xlu0 %2328
      %2330 = vrot.lane.b32.xlu0 %v2238, 122
      %v2331 = vpop.permute.xlu0 %2330
      %2332 = vrot.lane.b32.xlu0 %v2239, 122
      %v2333 = vpop.permute.xlu0 %2332
      %2334 = vrot.lane.b32.xlu0 %v2240, 122
      %v2335 = vpop.permute.xlu0 %2334
      %2336 = vrot.lane.b32.xlu0 %v2241, 122
      %v2337 = vpop.permute.xlu0 %2336
      %2338 = vrot.lane.b32.xlu0 %v2242, 122
      %v2339 = vpop.permute.xlu0 %2338
      %2348 = vst.msk [vmem:[%s2243] sm:$0xff] %vm1068, %v2325
      %2349 = vst.msk [vmem:[%s2243 + $0x8] sm:$0xff] %vm1068, %v2327
      %2350 = vst.msk [vmem:[%s2243 + $0x10] sm:$0xff] %vm1068, %v2329
      %2351 = vst.msk [vmem:[%s2243 + $0x18] sm:$0xff] %vm1068, %v2331
      %2352 = vst.msk [vmem:[%s2243 + $0x20] sm:$0xff] %vm1068, %v2333
      %2353 = vst.msk [vmem:[%s2243 + $0x28] sm:$0xff] %vm1068, %v2335
      %2354 = vst.msk [vmem:[%s2243 + $0x30] sm:$0xff] %vm1068, %v2337
      %2355 = vst.msk [vmem:[%s2243 + $0x38] sm:$0xff] %vm1068, %v2339
      %2356 = vrot.lane.b32.xlu0 %v2235, 120
      %v2357 = vpop.permute.xlu0 %2356
      %2358 = vrot.lane.b32.xlu0 %v2236, 120
      %v2359 = vpop.permute.xlu0 %2358
      %2360 = vrot.lane.b32.xlu0 %v2237, 120
      %v2361 = vpop.permute.xlu0 %2360
      %2362 = vrot.lane.b32.xlu0 %v2238, 120
      %v2363 = vpop.permute.xlu0 %2362
      %2364 = vrot.lane.b32.xlu0 %v2239, 120
      %v2365 = vpop.permute.xlu0 %2364
      %2366 = vrot.lane.b32.xlu0 %v2240, 120
      %v2367 = vpop.permute.xlu0 %2366
      %2368 = vrot.lane.b32.xlu0 %v2241, 120
      %v2369 = vpop.permute.xlu0 %2368
      %2370 = vrot.lane.b32.xlu0 %v2242, 120
      %v2371 = vpop.permute.xlu0 %2370
      %2380 = vst.msk [vmem:[%s2243] sm:$0xff] %vm1101, %v2357
      %2381 = vst.msk [vmem:[%s2243 + $0x8] sm:$0xff] %vm1101, %v2359
      %2382 = vst.msk [vmem:[%s2243 + $0x10] sm:$0xff] %vm1101, %v2361
      %2383 = vst.msk [vmem:[%s2243 + $0x18] sm:$0xff] %vm1101, %v2363
      %2384 = vst.msk [vmem:[%s2243 + $0x20] sm:$0xff] %vm1101, %v2365
      %2385 = vst.msk [vmem:[%s2243 + $0x28] sm:$0xff] %vm1101, %v2367
      %2386 = vst.msk [vmem:[%s2243 + $0x30] sm:$0xff] %vm1101, %v2369
      %2387 = vst.msk [vmem:[%s2243 + $0x38] sm:$0xff] %vm1101, %v2371
      %s2388 = scalar_lea.vmem %s305, 48
      %v2389 = vld [vmem:[%s2388] sm:$0xff]
      %v2390 = vld [vmem:[%s2388 + $0x8] sm:$0xff]
      %2393 = vrot.lane.b32.xlu0 %v2389, 127
      %v2394 = vpop.permute.xlu0 %2393
      %2395 = vrot.lane.b32.xlu0 %v2390, 127
      %v2396 = vpop.permute.xlu0 %2395
      %v2397 = vsel %vm378, %v2394, %v2396
      %2400 = vrot.lane.b32.xlu0 %v2389, 112
      %v2401 = vpop.permute.xlu0 %2400
      %2402 = vrot.lane.b32.xlu0 %v2390, 112
      %v2403 = vpop.permute.xlu0 %2402
      %v2404 = vsel %vm386, %v2401, %v2403
      %2407 = vrot.lane.b32.xlu0 %v2389, 111
      %v2408 = vpop.permute.xlu0 %2407
      %2409 = vrot.lane.b32.xlu0 %v2390, 111
      %v2410 = vpop.permute.xlu0 %2409
      %v2411 = vsel %vm394, %v2408, %v2410
      %2414 = vmatprep.subr.mxu0 %v2390
      %2415 = vmatpush1.msra.mxu0 %v2389
      %2416 = vmatprep.subr.mxu0 %v2396
      %2417 = vmatpush1.msra.mxu0 %v2397
      %2418 = vmatprep.subr.mxu0 %v2403
      %2419 = vmatpush1.msra.mxu0 %v2404
      %2420 = vmatprep.subr.mxu0 %v2410
      %2421 = vmatpush1.msra.mxu0 %v2411
      %2422 = vmatprep.subr.mxu0 0.0
      %2423 = vmatpush1.msra.mxu0 0.0
      %2424 = vmatprep.subr.mxu0 0.0
      %2425 = vmatpush1.msra.mxu0 0.0
      %2426 = vmatprep.subr.mxu0 0.0
      %2427 = vmatpush1.msra.mxu0 0.0
      %2428 = vmatprep.subr.mxu0 0.0
      %2429 = vmatpush1.msra.mxu0 0.0
      %2430 = vmatprep.subr.mxu0 0.0
      %2431 = vmatpush1.msra.mxu0 0.0
      %2432 = vmatprep.subr.mxu0 0.0
      %2433 = vmatpush1.msra.mxu0 0.0
      %2434 = vmatprep.subr.mxu0 0.0
      %2435 = vmatpush1.msra.mxu0 0.0
      %2436 = vmatprep.subr.mxu0 0.0
      %2437 = vmatpush1.msra.mxu0 0.0
      %2438 = vmatprep.subr.mxu0 0.0
      %2439 = vmatpush1.msra.mxu0 0.0
      %2440 = vmatprep.subr.mxu0 0.0
      %2441 = vmatpush1.msra.mxu0 0.0
      %2442 = vmatprep.subr.mxu0 0.0
      %2443 = vmatpush1.msra.mxu0 0.0
      %2444 = vmatprep.subr.mxu0 0.0
      %2445 = vmatpush1.msra.mxu0 0.0
      %2446 = vmatprep.subr.mxu0 0.0
      %2447 = vmatpush1.msra.mxu0 0.0
      %2448 = vmatprep.subr.mxu0 0.0
      %2449 = vmatpush1.msra.mxu0 0.0
      %2450 = vmatprep.subr.mxu0 0.0
      %2451 = vmatpush1.msra.mxu0 0.0
      %2452 = vmatprep.subr.mxu0 0.0
      %2453 = vmatpush1.msra.mxu0 0.0
      %2454 = vmatprep.subr.mxu0 0.0
      %2455 = vmatpush1.msra.mxu0 0.0
      %2456 = vmatprep.subr.mxu0 0.0
      %2457 = vmatpush1.msra.mxu0 0.0
      %2458 = vmatprep.subr.mxu0 0.0
      %2459 = vmatpush1.msra.mxu0 0.0
      %2460 = vmatprep.subr.mxu0 0.0
      %2461 = vmatpush1.msra.mxu0 0.0
      %2462 = vmatprep.subr.mxu0 0.0
      %2463 = vmatpush1.msra.mxu0 0.0
      %2464 = vmatprep.subr.mxu0 0.0
      %2465 = vmatpush1.msra.mxu0 0.0
      %2466 = vmatprep.subr.mxu0 0.0
      %2467 = vmatpush1.msra.mxu0 0.0
      %2468 = vmatprep.subr.mxu0 0.0
      %2469 = vmatpush1.msra.mxu0 0.0
      %2470 = vmatprep.subr.mxu0 0.0
      %2471 = vmatpush1.msra.mxu0 0.0
      %2472 = vmatprep.subr.mxu0 0.0
      %2473 = vmatpush1.msra.mxu0 0.0
      %2474 = vmatprep.subr.mxu0 0.0
      %2475 = vmatpush1.msra.mxu0 0.0
      %2476 = vmatprep.subr.mxu0 0.0
      %2477 = vmatpush1.msra.mxu0 0.0
      %2478 = vmatprep.mubr.f32.mxu0 0.0
      %2479 = vmatmul.mubr.f32.gmra.mrb[0].mxu0 %v410
      %v2480 = vpop.f32.mrb[0].mxu0
      %v2481 = vadd.f32 %v401, %v2480
      %v2482 = vpop.f32.mrb[0].mxu0
      %v2483 = vadd.f32 %v401, %v2482
      %2484 = vmatprep.mubr.f32.mxu0 0.0
      %2485 = vmatmul.mubr.f32.gmra.mrb[0].mxu0 %v413
      %v2486 = vpop.f32.mrb[0].mxu0
      %v2487 = vadd.f32 %v406, %v2486
      %v2488 = vpop.f32.mrb[0].mxu0
      %v2489 = vadd.f32 %v406, %v2488
      %2490 = vdwg.mxu0
      %v2491 = vmax.f32 %v2481, 0.0
      %v2492 = vmax.f32 %v2483, 0.0
      %v2493 = vmax.f32 %v2487, 0.0
      %v2494 = vmax.f32 %v2489, 0.0
      %2499 = vrot.lane.b32.xlu0 %v2491, 127
      %v2500 = vpop.permute.xlu0 %2499
      %2501 = vrot.lane.b32.xlu0 %v2492, 127
      %v2502 = vpop.permute.xlu0 %2501
      %2503 = vrot.lane.b32.xlu0 %v2493, 127
      %v2504 = vpop.permute.xlu0 %2503
      %2505 = vrot.lane.b32.xlu0 %v2494, 127
      %v2506 = vpop.permute.xlu0 %2505
      %v2507 = vsel %vm378, %v2500, %v2502
      %v2508 = vsel %vm378, %v2504, %v2506
      %v2513 = vmax.f32 %v2491, %v2507
      %v2514 = vmax.f32 %v2492, %v2502
      %v2515 = vmax.f32 %v2493, %v2508
      %v2516 = vmax.f32 %v2494, %v2506
      %2521 = vrot.lane.b32.xlu0 %v2513, 112
      %v2522 = vpop.permute.xlu0 %2521
      %2523 = vrot.lane.b32.xlu0 %v2514, 112
      %v2524 = vpop.permute.xlu0 %2523
      %2525 = vrot.lane.b32.xlu0 %v2515, 112
      %v2526 = vpop.permute.xlu0 %2525
      %2527 = vrot.lane.b32.xlu0 %v2516, 112
      %v2528 = vpop.permute.xlu0 %2527
      %v2529 = vsel %vm386, %v2522, %v2524
      %v2530 = vsel %vm386, %v2526, %v2528
      %v2535 = vmax.f32 %v2513, %v2529
      %v2536 = vmax.f32 %v2514, %v2524
      %v2537 = vmax.f32 %v2515, %v2530
      %v2538 = vmax.f32 %v2516, %v2528
      %v2540 = vsel %vm540, %v2536, 0
      %v2543 = vsel %vm540, %v2538, 0
      %2545 = vmatprep.subr.mxu0 0.0
      %2546 = vmatpush1.msra.mxu0 %v342
      %2547 = vmatprep.subr.mxu0 0.0
      %2548 = vmatpush1.msra.mxu0 %v343
      %2549 = vmatprep.subr.mxu0 0.0
      %2550 = vmatpush1.msra.mxu0 %v344
      %2551 = vmatprep.subr.mxu0 0.0
      %2552 = vmatpush1.msra.mxu0 %v345
      %2553 = vmatprep.subr.mxu0 0.0
      %2554 = vmatpush1.msra.mxu0 %v346
      %2555 = vmatprep.subr.mxu0 0.0
      %2556 = vmatpush1.msra.mxu0 %v347
      %2557 = vmatprep.subr.mxu0 0.0
      %2558 = vmatpush1.msra.mxu0 %v348
      %2559 = vmatprep.subr.mxu0 0.0
      %2560 = vmatpush1.msra.mxu0 %v349
      %2561 = vmatprep.subr.mxu0 0.0
      %2562 = vmatpush1.msra.mxu0 %v350
      %2563 = vmatprep.subr.mxu0 0.0
      %2564 = vmatpush1.msra.mxu0 %v351
      %2565 = vmatprep.subr.mxu0 0.0
      %2566 = vmatpush1.msra.mxu0 %v352
      %2567 = vmatprep.subr.mxu0 0.0
      %2568 = vmatpush1.msra.mxu0 %v353
      %2569 = vmatprep.subr.mxu0 0.0
      %2570 = vmatpush1.msra.mxu0 %v354
      %2571 = vmatprep.subr.mxu0 0.0
      %2572 = vmatpush1.msra.mxu0 %v355
      %2573 = vmatprep.subr.mxu0 0.0
      %2574 = vmatpush1.msra.mxu0 %v356
      %2575 = vmatprep.subr.mxu0 0.0
      %2576 = vmatpush1.msra.mxu0 %v357
      %2577 = vmatprep.subr.mxu0 0.0
      %2578 = vmatpush1.msra.mxu0 %v358
      %2579 = vmatprep.subr.mxu0 0.0
      %2580 = vmatpush1.msra.mxu0 %v359
      %2581 = vmatprep.subr.mxu0 0.0
      %2582 = vmatpush1.msra.mxu0 %v360
      %2583 = vmatprep.subr.mxu0 0.0
      %2584 = vmatpush1.msra.mxu0 %v361
      %2585 = vmatprep.subr.mxu0 0.0
      %2586 = vmatpush1.msra.mxu0 %v362
      %2587 = vmatprep.subr.mxu0 0.0
      %2588 = vmatpush1.msra.mxu0 %v363
      %2589 = vmatprep.subr.mxu0 0.0
      %2590 = vmatpush1.msra.mxu0 %v364
      %2591 = vmatprep.subr.mxu0 0.0
      %2592 = vmatpush1.msra.mxu0 %v365
      %2593 = vmatprep.subr.mxu0 0.0
      %2594 = vmatpush1.msra.mxu0 %v366
      %2595 = vmatprep.subr.mxu0 0.0
      %2596 = vmatpush1.msra.mxu0 %v367
      %2597 = vmatprep.subr.mxu0 0.0
      %2598 = vmatpush1.msra.mxu0 %v368
      %2599 = vmatprep.subr.mxu0 0.0
      %2600 = vmatpush1.msra.mxu0 %v549
      %2601 = vmatprep.subr.mxu0 0.0
      %2602 = vmatpush1.msra.mxu0 0.0
      %2603 = vmatprep.subr.mxu0 0.0
      %2604 = vmatpush1.msra.mxu0 0.0
      %2605 = vmatprep.subr.mxu0 0.0
      %2606 = vmatpush1.msra.mxu0 0.0
      %2607 = vmatprep.subr.mxu0 0.0
      %2608 = vmatpush1.msra.mxu0 0.0
      %2609 = vmatprep.mubr.f32.mxu0 %v2540
      %2610 = vmatmul.mubr.f32.gmra.mrb[0].mxu0 %v2535
      %v2611 = vpop.f32.mrb[0].mxu0
      %v2612 = vadd.f32 0.0, %v2611
      %v2613 = vpop.f32.mrb[0].mxu0
      %2614 = vmatprep.mubr.f32.mxu0 %v2543
      %2615 = vmatmul.mubr.f32.gmra.mrb[0].mxu0 %v2537
      %v2616 = vpop.f32.mrb[0].mxu0
      %v2617 = vadd.f32 0.0, %v2616
      %v2618 = vpop.f32.mrb[0].mxu0
      %2619 = vdwg.mxu0
      %2622 = vrot.lane.b32.xlu0 %v2612, 127
      %v2623 = vpop.permute.xlu0 %2622
      %2624 = vrot.lane.b32.xlu0 %v2617, 127
      %v2625 = vpop.permute.xlu0 %2624
      %2628 = vrot.lane.b32.xlu0 %v2612, 121
      %v2629 = vpop.permute.xlu0 %2628
      %2630 = vrot.lane.b32.xlu0 %v2617, 121
      %v2631 = vpop.permute.xlu0 %2630
      %2634 = vrot.lane.b32.xlu0 %v2612, 120
      %v2635 = vpop.permute.xlu0 %2634
      %2636 = vrot.lane.b32.xlu0 %v2617, 120
      %v2637 = vpop.permute.xlu0 %2636
      %2640 = vmatprep.subr.mxu0 0.0
      %2641 = vmatpush1.msra.mxu0 %v2612
      %2642 = vmatprep.subr.mxu0 0.0
      %2643 = vmatpush1.msra.mxu0 %v2617
      %2644 = vmatprep.subr.mxu0 0.0
      %2645 = vmatpush1.msra.mxu0 %v2623
      %2646 = vmatprep.subr.mxu0 0.0
      %2647 = vmatpush1.msra.mxu0 %v2625
      %2648 = vmatprep.subr.mxu0 0.0
      %2649 = vmatpush1.msra.mxu0 %v2629
      %2650 = vmatprep.subr.mxu0 0.0
      %2651 = vmatpush1.msra.mxu0 %v2631
      %2652 = vmatprep.subr.mxu0 0.0
      %2653 = vmatpush1.msra.mxu0 %v2635
      %2654 = vmatprep.subr.mxu0 0.0
      %2655 = vmatpush1.msra.mxu0 %v2637
      %2656 = vmatprep.subr.mxu0 0.0
      %2657 = vmatpush1.msra.mxu0 0.0
      %2658 = vmatprep.subr.mxu0 0.0
      %2659 = vmatpush1.msra.mxu0 0.0
      %2660 = vmatprep.subr.mxu0 0.0
      %2661 = vmatpush1.msra.mxu0 0.0
      %2662 = vmatprep.subr.mxu0 0.0
      %2663 = vmatpush1.msra.mxu0 0.0
      %2664 = vmatprep.subr.mxu0 0.0
      %2665 = vmatpush1.msra.mxu0 0.0
      %2666 = vmatprep.subr.mxu0 0.0
      %2667 = vmatpush1.msra.mxu0 0.0
      %2668 = vmatprep.subr.mxu0 0.0
      %2669 = vmatpush1.msra.mxu0 0.0
      %2670 = vmatprep.subr.mxu0 0.0
      %2671 = vmatpush1.msra.mxu0 0.0
      %2672 = vmatprep.subr.mxu0 0.0
      %2673 = vmatpush1.msra.mxu0 0.0
      %2674 = vmatprep.subr.mxu0 0.0
      %2675 = vmatpush1.msra.mxu0 0.0
      %2676 = vmatprep.subr.mxu0 0.0
      %2677 = vmatpush1.msra.mxu0 0.0
      %2678 = vmatprep.subr.mxu0 0.0
      %2679 = vmatpush1.msra.mxu0 0.0
      %2680 = vmatprep.subr.mxu0 0.0
      %2681 = vmatpush1.msra.mxu0 0.0
      %2682 = vmatprep.subr.mxu0 0.0
      %2683 = vmatpush1.msra.mxu0 0.0
      %2684 = vmatprep.subr.mxu0 0.0
      %2685 = vmatpush1.msra.mxu0 0.0
      %2686 = vmatprep.subr.mxu0 0.0
      %2687 = vmatpush1.msra.mxu0 0.0
      %2688 = vmatprep.subr.mxu0 0.0
      %2689 = vmatpush1.msra.mxu0 0.0
      %2690 = vmatprep.subr.mxu0 0.0
      %2691 = vmatpush1.msra.mxu0 0.0
      %2692 = vmatprep.subr.mxu0 0.0
      %2693 = vmatpush1.msra.mxu0 0.0
      %2694 = vmatprep.subr.mxu0 0.0
      %2695 = vmatpush1.msra.mxu0 0.0
      %2696 = vmatprep.subr.mxu0 0.0
      %2697 = vmatpush1.msra.mxu0 0.0
      %2698 = vmatprep.subr.mxu0 0.0
      %2699 = vmatpush1.msra.mxu0 0.0
      %2700 = vmatprep.subr.mxu0 0.0
      %2701 = vmatpush1.msra.mxu0 0.0
      %2702 = vmatprep.subr.mxu0 0.0
      %2703 = vmatpush1.msra.mxu0 0.0
      %2704 = vmatprep.mubr.f32.mxu0 0.0
      %2705 = vmatmul.mubr.f32.gmra.mrb[0].mxu0 %v668
      %v2706 = vpop.f32.mrb[0].mxu0
      %v2707 = vadd.f32 %v649, %v2706
      %v2708 = vpop.f32.mrb[0].mxu0
      %2709 = vmatprep.mubr.f32.mxu0 0.0
      %2710 = vmatmul.mubr.f32.gmra.mrb[0].mxu0 %v671
      %v2711 = vpop.f32.mrb[0].mxu0
      %v2712 = vadd.f32 %v654, %v2711
      %v2713 = vpop.f32.mrb[0].mxu0
      %2714 = vmatprep.mubr.f32.mxu0 0.0
      %2715 = vmatmul.mubr.f32.gmra.mrb[0].mxu0 %v674
      %v2716 = vpop.f32.mrb[0].mxu0
      %v2717 = vadd.f32 %v659, %v2716
      %v2718 = vpop.f32.mrb[0].mxu0
      %2719 = vmatprep.mubr.f32.mxu0 0.0
      %2720 = vmatmul.mubr.f32.gmra.mrb[0].mxu0 %v677
      %v2721 = vpop.f32.mrb[0].mxu0
      %v2722 = vadd.f32 %v664, %v2721
      %v2723 = vpop.f32.mrb[0].mxu0
      %2724 = vdwg.mxu0
      %v2725 = vmax.f32 %v2707, 0.0
      %v2726 = vmax.f32 %v2712, 0.0
      %v2727 = vmax.f32 %v2717, 0.0
      %v2728 = vmax.f32 %v2722, 0.0
      %2733 = vrot.lane.b32.xlu0 %v2725, 127
      %v2734 = vpop.permute.xlu0 %2733
      %2735 = vrot.lane.b32.xlu0 %v2726, 127
      %v2736 = vpop.permute.xlu0 %2735
      %2737 = vrot.lane.b32.xlu0 %v2727, 127
      %v2738 = vpop.permute.xlu0 %2737
      %2739 = vrot.lane.b32.xlu0 %v2728, 127
      %v2740 = vpop.permute.xlu0 %2739
      %2745 = vrot.lane.b32.xlu0 %v2725, 121
      %v2746 = vpop.permute.xlu0 %2745
      %2747 = vrot.lane.b32.xlu0 %v2726, 121
      %v2748 = vpop.permute.xlu0 %2747
      %2749 = vrot.lane.b32.xlu0 %v2727, 121
      %v2750 = vpop.permute.xlu0 %2749
      %2751 = vrot.lane.b32.xlu0 %v2728, 121
      %v2752 = vpop.permute.xlu0 %2751
      %2757 = vrot.lane.b32.xlu0 %v2725, 120
      %v2758 = vpop.permute.xlu0 %2757
      %2759 = vrot.lane.b32.xlu0 %v2726, 120
      %v2760 = vpop.permute.xlu0 %2759
      %2761 = vrot.lane.b32.xlu0 %v2727, 120
      %v2762 = vpop.permute.xlu0 %2761
      %2763 = vrot.lane.b32.xlu0 %v2728, 120
      %v2764 = vpop.permute.xlu0 %2763
      %2769 = vmatprep.subr.mxu0 0.0
      %2770 = vmatpush1.msra.mxu0 %v2725
      %2771 = vmatprep.subr.mxu0 0.0
      %2772 = vmatpush1.msra.mxu0 %v2726
      %2773 = vmatprep.subr.mxu0 0.0
      %2774 = vmatpush1.msra.mxu0 %v2727
      %2775 = vmatprep.subr.mxu0 0.0
      %2776 = vmatpush1.msra.mxu0 %v2728
      %2777 = vmatprep.subr.mxu0 0.0
      %2778 = vmatpush1.msra.mxu0 %v2734
      %2779 = vmatprep.subr.mxu0 0.0
      %2780 = vmatpush1.msra.mxu0 %v2736
      %2781 = vmatprep.subr.mxu0 0.0
      %2782 = vmatpush1.msra.mxu0 %v2738
      %2783 = vmatprep.subr.mxu0 0.0
      %2784 = vmatpush1.msra.mxu0 %v2740
      %2785 = vmatprep.subr.mxu0 0.0
      %2786 = vmatpush1.msra.mxu0 %v2746
      %2787 = vmatprep.subr.mxu0 0.0
      %2788 = vmatpush1.msra.mxu0 %v2748
      %2789 = vmatprep.subr.mxu0 0.0
      %2790 = vmatpush1.msra.mxu0 %v2750
      %2791 = vmatprep.subr.mxu0 0.0
      %2792 = vmatpush1.msra.mxu0 %v2752
      %2793 = vmatprep.subr.mxu0 0.0
      %2794 = vmatpush1.msra.mxu0 %v2758
      %2795 = vmatprep.subr.mxu0 0.0
      %2796 = vmatpush1.msra.mxu0 %v2760
      %2797 = vmatprep.subr.mxu0 0.0
      %2798 = vmatpush1.msra.mxu0 %v2762
      %2799 = vmatprep.subr.mxu0 0.0
      %2800 = vmatpush1.msra.mxu0 %v2764
      %2801 = vmatprep.subr.mxu0 0.0
      %2802 = vmatpush1.msra.mxu0 0.0
      %2803 = vmatprep.subr.mxu0 0.0
      %2804 = vmatpush1.msra.mxu0 0.0
      %2805 = vmatprep.subr.mxu0 0.0
      %2806 = vmatpush1.msra.mxu0 0.0
      %2807 = vmatprep.subr.mxu0 0.0
      %2808 = vmatpush1.msra.mxu0 0.0
      %2809 = vmatprep.subr.mxu0 0.0
      %2810 = vmatpush1.msra.mxu0 0.0
      %2811 = vmatprep.subr.mxu0 0.0
      %2812 = vmatpush1.msra.mxu0 0.0
      %2813 = vmatprep.subr.mxu0 0.0
      %2814 = vmatpush1.msra.mxu0 0.0
      %2815 = vmatprep.subr.mxu0 0.0
      %2816 = vmatpush1.msra.mxu0 0.0
      %2817 = vmatprep.subr.mxu0 0.0
      %2818 = vmatpush1.msra.mxu0 0.0
      %2819 = vmatprep.subr.mxu0 0.0
      %2820 = vmatpush1.msra.mxu0 0.0
      %2821 = vmatprep.subr.mxu0 0.0
      %2822 = vmatpush1.msra.mxu0 0.0
      %2823 = vmatprep.subr.mxu0 0.0
      %2824 = vmatpush1.msra.mxu0 0.0
      %2825 = vmatprep.subr.mxu0 0.0
      %2826 = vmatpush1.msra.mxu0 0.0
      %2827 = vmatprep.subr.mxu0 0.0
      %2828 = vmatpush1.msra.mxu0 0.0
      %2829 = vmatprep.subr.mxu0 0.0
      %2830 = vmatpush1.msra.mxu0 0.0
      %2831 = vmatprep.subr.mxu0 0.0
      %2832 = vmatpush1.msra.mxu0 0.0
      %2833 = vmatprep.mubr.f32.mxu0 0.0
      %2834 = vmatmul.mubr.f32.gmra.mrb[0].mxu0 %v326
      %v2835 = vpop.f32.mrb[0].mxu0
      %v2836 = vadd.f32 %v811, %v2835
      %v2837 = vpop.f32.mrb[0].mxu0
      %2838 = vmatprep.mubr.f32.mxu0 0.0
      %2839 = vmatmul.mubr.f32.gmra.mrb[0].mxu0 %v327
      %v2840 = vpop.f32.mrb[0].mxu0
      %v2841 = vadd.f32 %v816, %v2840
      %v2842 = vpop.f32.mrb[0].mxu0
      %2843 = vmatprep.mubr.f32.mxu0 0.0
      %2844 = vmatmul.mubr.f32.gmra.mrb[0].mxu0 %v328
      %v2845 = vpop.f32.mrb[0].mxu0
      %v2846 = vadd.f32 %v821, %v2845
      %v2847 = vpop.f32.mrb[0].mxu0
      %2848 = vmatprep.mubr.f32.mxu0 0.0
      %2849 = vmatmul.mubr.f32.gmra.mrb[0].mxu0 %v329
      %v2850 = vpop.f32.mrb[0].mxu0
      %v2851 = vadd.f32 %v826, %v2850
      %v2852 = vpop.f32.mrb[0].mxu0
      %2853 = vmatprep.mubr.f32.mxu0 0.0
      %2854 = vmatmul.mubr.f32.gmra.mrb[0].mxu0 %v330
      %v2855 = vpop.f32.mrb[0].mxu0
      %v2856 = vadd.f32 %v831, %v2855
      %v2857 = vpop.f32.mrb[0].mxu0
      %2858 = vmatprep.mubr.f32.mxu0 0.0
      %2859 = vmatmul.mubr.f32.gmra.mrb[0].mxu0 %v331
      %v2860 = vpop.f32.mrb[0].mxu0
      %v2861 = vadd.f32 %v836, %v2860
      %v2862 = vpop.f32.mrb[0].mxu0
      %2863 = vmatprep.mubr.f32.mxu0 0.0
      %2864 = vmatmul.mubr.f32.gmra.mrb[0].mxu0 %v332
      %v2865 = vpop.f32.mrb[0].mxu0
      %v2866 = vadd.f32 %v841, %v2865
      %v2867 = vpop.f32.mrb[0].mxu0
      %2868 = vmatprep.mubr.f32.mxu0 0.0
      %2869 = vmatmul.mubr.f32.gmra.mrb[0].mxu0 %v333
      %v2870 = vpop.f32.mrb[0].mxu0
      %v2871 = vadd.f32 %v846, %v2870
      %v2872 = vpop.f32.mrb[0].mxu0
      %2873 = vdwg.mxu0
      %v2874 = vmax.f32 %v2836, 0.0
      %v2875 = vmax.f32 %v2841, 0.0
      %v2876 = vmax.f32 %v2846, 0.0
      %v2877 = vmax.f32 %v2851, 0.0
      %v2878 = vmax.f32 %v2856, 0.0
      %v2879 = vmax.f32 %v2861, 0.0
      %v2880 = vmax.f32 %v2866, 0.0
      %v2881 = vmax.f32 %v2871, 0.0
      %s2882 = scalar_lea.vmem %s312, 192
      %2883 = vst.msk [vmem:[%s2882] sm:$0xff] %vm961, %v2874
      %2884 = vst.msk [vmem:[%s2882 + $0x8] sm:$0xff] %vm961, %v2875
      %2885 = vst.msk [vmem:[%s2882 + $0x10] sm:$0xff] %vm961, %v2876
      %2886 = vst.msk [vmem:[%s2882 + $0x18] sm:$0xff] %vm961, %v2877
      %2887 = vst.msk [vmem:[%s2882 + $0x20] sm:$0xff] %vm961, %v2878
      %2888 = vst.msk [vmem:[%s2882 + $0x28] sm:$0xff] %vm961, %v2879
      %2889 = vst.msk [vmem:[%s2882 + $0x30] sm:$0xff] %vm961, %v2880
      %2890 = vst.msk [vmem:[%s2882 + $0x38] sm:$0xff] %vm961, %v2881
      %2899 = vrot.lane.b32.xlu0 %v2874, 126
      %v2900 = vpop.permute.xlu0 %2899
      %2901 = vrot.lane.b32.xlu0 %v2875, 126
      %v2902 = vpop.permute.xlu0 %2901
      %2903 = vrot.lane.b32.xlu0 %v2876, 126
      %v2904 = vpop.permute.xlu0 %2903
      %2905 = vrot.lane.b32.xlu0 %v2877, 126
      %v2906 = vpop.permute.xlu0 %2905
      %2907 = vrot.lane.b32.xlu0 %v2878, 126
      %v2908 = vpop.permute.xlu0 %2907
      %2909 = vrot.lane.b32.xlu0 %v2879, 126
      %v2910 = vpop.permute.xlu0 %2909
      %2911 = vrot.lane.b32.xlu0 %v2880, 126
      %v2912 = vpop.permute.xlu0 %2911
      %2913 = vrot.lane.b32.xlu0 %v2881, 126
      %v2914 = vpop.permute.xlu0 %2913
      %2923 = vst.msk [vmem:[%s2882] sm:$0xff] %vm1002, %v2900
      %2924 = vst.msk [vmem:[%s2882 + $0x8] sm:$0xff] %vm1002, %v2902
      %2925 = vst.msk [vmem:[%s2882 + $0x10] sm:$0xff] %vm1002, %v2904
      %2926 = vst.msk [vmem:[%s2882 + $0x18] sm:$0xff] %vm1002, %v2906
      %2927 = vst.msk [vmem:[%s2882 + $0x20] sm:$0xff] %vm1002, %v2908
      %2928 = vst.msk [vmem:[%s2882 + $0x28] sm:$0xff] %vm1002, %v2910
      %2929 = vst.msk [vmem:[%s2882 + $0x30] sm:$0xff] %vm1002, %v2912
      %2930 = vst.msk [vmem:[%s2882 + $0x38] sm:$0xff] %vm1002, %v2914
      %2931 = vrot.lane.b32.xlu0 %v2874, 124
      %v2932 = vpop.permute.xlu0 %2931
      %2933 = vrot.lane.b32.xlu0 %v2875, 124
      %v2934 = vpop.permute.xlu0 %2933
      %2935 = vrot.lane.b32.xlu0 %v2876, 124
      %v2936 = vpop.permute.xlu0 %2935
      %2937 = vrot.lane.b32.xlu0 %v2877, 124
      %v2938 = vpop.permute.xlu0 %2937
      %2939 = vrot.lane.b32.xlu0 %v2878, 124
      %v2940 = vpop.permute.xlu0 %2939
      %2941 = vrot.lane.b32.xlu0 %v2879, 124
      %v2942 = vpop.permute.xlu0 %2941
      %2943 = vrot.lane.b32.xlu0 %v2880, 124
      %v2944 = vpop.permute.xlu0 %2943
      %2945 = vrot.lane.b32.xlu0 %v2881, 124
      %v2946 = vpop.permute.xlu0 %2945
      %2955 = vst.msk [vmem:[%s2882] sm:$0xff] %vm1035, %v2932
      %2956 = vst.msk [vmem:[%s2882 + $0x8] sm:$0xff] %vm1035, %v2934
      %2957 = vst.msk [vmem:[%s2882 + $0x10] sm:$0xff] %vm1035, %v2936
      %2958 = vst.msk [vmem:[%s2882 + $0x18] sm:$0xff] %vm1035, %v2938
      %2959 = vst.msk [vmem:[%s2882 + $0x20] sm:$0xff] %vm1035, %v2940
      %2960 = vst.msk [vmem:[%s2882 + $0x28] sm:$0xff] %vm1035, %v2942
      %2961 = vst.msk [vmem:[%s2882 + $0x30] sm:$0xff] %vm1035, %v2944
      %2962 = vst.msk [vmem:[%s2882 + $0x38] sm:$0xff] %vm1035, %v2946
      %2963 = vrot.lane.b32.xlu0 %v2874, 122
      %v2964 = vpop.permute.xlu0 %2963
      %2965 = vrot.lane.b32.xlu0 %v2875, 122
      %v2966 = vpop.permute.xlu0 %2965
      %2967 = vrot.lane.b32.xlu0 %v2876, 122
      %v2968 = vpop.permute.xlu0 %2967
      %2969 = vrot.lane.b32.xlu0 %v2877, 122
      %v2970 = vpop.permute.xlu0 %2969
      %2971 = vrot.lane.b32.xlu0 %v2878, 122
      %v2972 = vpop.permute.xlu0 %2971
      %2973 = vrot.lane.b32.xlu0 %v2879, 122
      %v2974 = vpop.permute.xlu0 %2973
      %2975 = vrot.lane.b32.xlu0 %v2880, 122
      %v2976 = vpop.permute.xlu0 %2975
      %2977 = vrot.lane.b32.xlu0 %v2881, 122
      %v2978 = vpop.permute.xlu0 %2977
      %2987 = vst.msk [vmem:[%s2882] sm:$0xff] %vm1068, %v2964
      %2988 = vst.msk [vmem:[%s2882 + $0x8] sm:$0xff] %vm1068, %v2966
      %2989 = vst.msk [vmem:[%s2882 + $0x10] sm:$0xff] %vm1068, %v2968
      %2990 = vst.msk [vmem:[%s2882 + $0x18] sm:$0xff] %vm1068, %v2970
      %2991 = vst.msk [vmem:[%s2882 + $0x20] sm:$0xff] %vm1068, %v2972
      %2992 = vst.msk [vmem:[%s2882 + $0x28] sm:$0xff] %vm1068, %v2974
      %2993 = vst.msk [vmem:[%s2882 + $0x30] sm:$0xff] %vm1068, %v2976
      %2994 = vst.msk [vmem:[%s2882 + $0x38] sm:$0xff] %vm1068, %v2978
      %2995 = vrot.lane.b32.xlu0 %v2874, 120
      %v2996 = vpop.permute.xlu0 %2995
      %2997 = vrot.lane.b32.xlu0 %v2875, 120
      %v2998 = vpop.permute.xlu0 %2997
      %2999 = vrot.lane.b32.xlu0 %v2876, 120
      %v3000 = vpop.permute.xlu0 %2999
      %3001 = vrot.lane.b32.xlu0 %v2877, 120
      %v3002 = vpop.permute.xlu0 %3001
      %3003 = vrot.lane.b32.xlu0 %v2878, 120
      %v3004 = vpop.permute.xlu0 %3003
      %3005 = vrot.lane.b32.xlu0 %v2879, 120
      %v3006 = vpop.permute.xlu0 %3005
      %3007 = vrot.lane.b32.xlu0 %v2880, 120
      %v3008 = vpop.permute.xlu0 %3007
      %3009 = vrot.lane.b32.xlu0 %v2881, 120
      %v3010 = vpop.permute.xlu0 %3009
      %3019 = vst.msk [vmem:[%s2882] sm:$0xff] %vm1101, %v2996
      %3020 = vst.msk [vmem:[%s2882 + $0x8] sm:$0xff] %vm1101, %v2998
      %3021 = vst.msk [vmem:[%s2882 + $0x10] sm:$0xff] %vm1101, %v3000
      %3022 = vst.msk [vmem:[%s2882 + $0x18] sm:$0xff] %vm1101, %v3002
      %3023 = vst.msk [vmem:[%s2882 + $0x20] sm:$0xff] %vm1101, %v3004
      %3024 = vst.msk [vmem:[%s2882 + $0x28] sm:$0xff] %vm1101, %v3006
      %3025 = vst.msk [vmem:[%s2882 + $0x30] sm:$0xff] %vm1101, %v3008
      %3026 = vst.msk [vmem:[%s2882 + $0x38] sm:$0xff] %vm1101, %v3010
      %s3027 = smul.u32 4, %s19
      %p3028 = scmp.lt.s32.totalorder %s3027, 7
      %s3029 = scalar_select %p3028, %s3027, 7
      %s3030 = smul.addr %s3029, 8
      %s3031 = smul.addr %s3030, 8
      %s3032 = scalar_lea.vmem %s8, %s3031
      // Predicated region
      $region53: #{cnn_encoder_forward.1} parent=51 // pred_check
        %p3033 = pneg %p210
      $region54: #{cnn_encoder_forward.1} parent=51 // pred_check_branch
        %3035 = sbr.rel (%p3033) target = $region56
      $region55: #{cnn_encoder_forward.1} parent=51 // pred_region
        %s3036 = smul.u32 4, %s19
      $region56: #{cnn_encoder_forward.1} parent=51 // pred_fallthru
        _
    $region52: #{cnn_encoder_forward.1} parent=5 // pred_fallthru
      _
    %p3037 = scmp.le.s32.totalorder 2, %s14
    // Predicated region
    $region57: #{cnn_encoder_forward.1} parent=5 // pred_check
      %p3038 = pneg %p3037
    $region58: #{cnn_encoder_forward.1} parent=5 // pred_check_branch
      %3040 = sbr.rel (%p3038) target = $region60
    $region59: #{cnn_encoder_forward.1} parent=5 // pred_region
      %s3041 = ssub.s32 %s14, 2
      // Predicated region
      $region61: #{cnn_encoder_forward.1} parent=59 // pred_check
        %p3042 = pneg %p216
      $region62: #{cnn_encoder_forward.1} parent=59 // pred_check_branch
        %3044 = sbr.rel (%p3042) target = $region64
      $region63: #{cnn_encoder_forward.1} parent=59 // pred_region
        %s3045 = smul.u32 4, %s20
        %p3046 = scmp.lt.s32.totalorder %s3045, 7
        %s3047 = scalar_select %p3046, %s3045, 7
        %s3048 = smul.addr %s3047, 8
        %s3049 = smul.addr %s3048, 8
        %s3050 = scalar_lea.vmem %s8, %s3049
      $region64: #{cnn_encoder_forward.1} parent=59 // pred_fallthru
        _
    $region60: #{cnn_encoder_forward.1} parent=5 // pred_fallthru
      _
  $region6: #{cnn_encoder_forward.1} parent=0 // loop_footer
    %s18 = sadd.s32 1, %s14
  $region7: #{cnn_encoder_forward.1} parent=0 // loop_footer_branch
    %13 = sbr.rel target = $region3
  $region8: #{cnn_encoder_forward.1} parent=0 // loop_exit
    _

</llo_original>
